<compile_context>
chip_gen: v7x
topology: tpu7x:2x2x1
jax: 0.10.0
libtpu: 0.0.40
codegen_flags: <defaults>
</compile_context>

<pallas_src>
import math

import numpy as np
import jax
import jax.numpy as jnp
from jax import lax
from jax.experimental import pallas as pl
from jax.experimental.pallas import tpu as pltpu

IMAGENET_MEAN = (0.485, 0.456, 0.406)
IMAGENET_STD = (0.229, 0.224, 0.225)


def _conv_out(n):   # Conv2d(kernel=3, stride=3, valid)
    return (n - 3) // 3 + 1


def _pool_out(n):   # MaxPool2d(kernel=2, stride=2, padding=1), floor mode
    return n // 2 + 1


# ----------------------------------------------------------------------------
# Static geometry: conv1 im2col gather indices (host-side layout plumbing) and
# the pool2 one-hot selectors.  Everything is clamped-index based, which is
# exactly equivalent to PyTorch's -inf maxpool padding.
# ----------------------------------------------------------------------------
def build_geometry(H, W):
    Hc1, Wc1 = _conv_out(H), _conv_out(W)        # conv1 output (33, 33)
    Hp1, Wp1 = _pool_out(Hc1), _pool_out(Wc1)    # pool1 output (17, 17)
    Hc2, Wc2 = _conv_out(Hp1), _conv_out(Wp1)    # conv2 output (5, 5)
    Hp2, Wp2 = _pool_out(Hc2), _pool_out(Wc2)    # pool2 output (3, 3)
    assert (Hp2, Wp2) == (3, 3) and _conv_out(Hp2) == 1, (
        "fused kernel assumes conv3 sees a 3x3 map (true for the module's "
        "default 100x100 input)")

    n_p2 = Hp2 * Wp2          # 9 pooled2 positions
    n_m = 4 * n_p2            # 36 conv2 evaluations (the pool2 candidates)

    def cand(i, j, hi):       # maxpool(k2,s2,pad1) candidate index, clamped
        return max(2 * i - 1, 0) if j == 0 else min(2 * i, hi)

    # idx[j1, m, (ky*3+kx)*27 + ky1*9 + kx1*3 + c] = flat NHWC image index of
    # the conv1 im2col element needed, for pool1-candidate j1, conv2-candidate
    # position m, conv2 tap (ky,kx), conv1 tap (ky1,kx1), image channel c.
    idx = np.zeros((4, n_m, 243), dtype=np.int32)
    for j2 in range(4):
        jr2, jc2 = j2 // 2, j2 % 2
        for s in range(Hp2):
            for t in range(Wp2):
                m = j2 * n_p2 + s * Wp2 + t
                R = cand(s, jr2, Hc2 - 1)            # conv2 row evaluated
                C = cand(t, jc2, Wc2 - 1)            # conv2 col evaluated
                for ky in range(3):
                    for kx in range(3):
                        U, V = 3 * R + ky, 3 * C + kx    # pooled1 pos read
                        base = (ky * 3 + kx) * 27
                        for j1 in range(4):
                            jr1, jc1 = j1 // 2, j1 % 2
                            u = cand(U, jr1, Hc1 - 1)    # conv1 row candidate
                            v = cand(V, jc1, Wc1 - 1)    # conv1 col candidate
                            for ky1 in range(3):
                                for kx1 in range(3):
                                    for c in range(3):
                                        k = base + ky1 * 9 + kx1 * 3 + c
                                        idx[j1, m, k] = (
                                            (3 * u + ky1) * W
                                            + (3 * v + kx1)) * 3 + c

    # pool2 gather selectors: sel[j2] @ y2 picks y2 rows j2*9 .. j2*9+8.
    p2sel = np.zeros((4, n_p2, n_m), dtype=np.float32)
    for j2 in range(4):
        for p in range(n_p2):
            p2sel[j2, p, j2 * n_p2 + p] = 1.0
    return idx, p2sel


# ----------------------------------------------------------------------------
# The fused kernel: conv1+pool1, conv2+pool2, conv3(+pool3 identity) as a
# linear layer, and the 4-layer MLP head.  One grid step per batch element.
# ----------------------------------------------------------------------------
def _dave2_fused_kernel(x_ref, w1_ref, b1_ref, w2_ref, b2_ref, sel_ref,
                        w3_ref, b3_ref, w1l_ref, b1l_ref, w2l_ref, b2l_ref,
                        w3l_ref, b3l_ref, w4l_ref, b4l_ref, o_ref):
    f32 = jnp.float32
    w1 = w1_ref[...]                                   # (243, 144) block-diag

    # --- conv1 + pool1 fused: 4 pool-candidate dots + elementwise max.
    # Bias/ReLU are pushed after the max (both are monotone), so the max is on
    # the raw MXU outputs.  The block-diag weight makes each dot emit the 9
    # conv2 taps side by side -> the result IS the conv2 im2col.
    z = jnp.dot(x_ref[0, 0, :, :], w1, preferred_element_type=f32)
    for j in range(1, 4):
        z = jnp.maximum(z, jnp.dot(x_ref[0, j, :, :], w1,
                                   preferred_element_type=f32))
    lhs2 = jnp.maximum(z + b1_ref[...], 0.0)           # (36, 144)

    # --- conv2 at the 36 pool2-candidate positions: one MXU dot.
    y2 = jnp.dot(lhs2, w2_ref[...], preferred_element_type=f32)   # (36, 32)

    # --- pool2: hoisted one-hot selector gathers + elementwise max, then
    # bias + ReLU (again pushed after the max).
    p = jnp.dot(sel_ref[0, :, :], y2, preferred_element_type=f32)
    for j in range(1, 4):
        p = jnp.maximum(p, jnp.dot(sel_ref[j, :, :], y2,
                                   preferred_element_type=f32))
    pooled2 = jnp.maximum(p + b2_ref[...], 0.0)        # (9, 32) == 3x3x32 NHWC

    # --- conv3 (window == whole 3x3 map) + pool3 (identity) == Linear 288->64.
    y3 = b3_ref[...]                                   # (1, 64)
    for q in range(9):
        y3 = y3 + jnp.dot(pooled2[q:q + 1, :], w3_ref[q, :, :],
                          preferred_element_type=f32)
    h = jnp.maximum(y3, 0.0)                           # (1, 64) == flatten(1)

    # --- MLP head (dropout1/dropout2 are identity at inference).
    h = jnp.maximum(jnp.dot(h, w1l_ref[...], preferred_element_type=f32)
                    + b1l_ref[...], 0.0)
    h = jnp.maximum(jnp.dot(h, w2l_ref[...], preferred_element_type=f32)
                    + b2l_ref[...], 0.0)
    h = jnp.maximum(jnp.dot(h, w3l_ref[...], preferred_element_type=f32)
                    + b3l_ref[...], 0.0)
    # lin4 (20 -> 1): VPU multiply + lane reduce instead of an N=1 MXU dot.
    o_ref[0] = jnp.sum(h * w4l_ref[...], axis=-1, keepdims=True) + b4l_ref[...]


def dave2_fused(x1, p):
    B, _, n_m, k1 = x1.shape

    def const(shape):
        return pl.BlockSpec(shape, lambda b: (0,) * len(shape))

    return pl.pallas_call(
        _dave2_fused_kernel,
        out_shape=jax.ShapeDtypeStruct((B, 1, 1), jnp.float32),
        grid=(B,),
        in_specs=[
            pl.BlockSpec((1, 4, n_m, k1), lambda b: (b, 0, 0, 0)),
            const(p["w1bd"].shape), const(p["b1"].shape),
            const(p["w2"].shape), const(p["b2"].shape),
            const(p["p2sel"].shape),
            const(p["w3"].shape), const(p["b3"].shape),
            const(p["w1l"].shape), const(p["b1l"].shape),
            const(p["w2l"].shape), const(p["b2l"].shape),
            const(p["w3l"].shape), const(p["b3l"].shape),
            const(p["w4l"].shape), const(p["b4l"].shape),
        ],
        out_specs=pl.BlockSpec((1, 1, 1), lambda b: (b, 0, 0)),
        compiler_params=pltpu.CompilerParams(
            dimension_semantics=("parallel",)),
    )(x1, p["w1bd"], p["b1"], p["w2"], p["b2"], p["p2sel"], p["w3"], p["b3"],
      p["w1l"], p["b1l"], p["w2l"], p["b2l"], p["w3l"], p["b3l"],
      p["w4l"], p["b4l"])


# ----------------------------------------------------------------------------
# Full forward pass.  Host side only does layout plumbing (NCHW->NHWC + the
# static conv1 im2col gather); all FLOPs run in the single Pallas kernel.
# ----------------------------------------------------------------------------
@jax.jit
def dave2v3norm_forward(x_nchw, prepared):
    B = x_nchw.shape[0]
    idx = prepared["im2col_idx"]                        # (4, 36, 243) int32
    x = jnp.transpose(x_nchw, (0, 2, 3, 1)).reshape(B, -1)       # (B, H*W*3)
    x1 = jnp.take(x, idx.reshape(-1), axis=1).reshape((B,) + idx.shape)
    out = dave2_fused(x1, prepared)
    return out.reshape(B, 1)


# ----------------------------------------------------------------------------
# One-time parameter folds (outside the hot path).
# ----------------------------------------------------------------------------
def prepare_params(params, input_hw=(100, 100)):
    H, W = input_hw
    idx, p2sel = build_geometry(H, W)

    mean = jnp.asarray(IMAGENET_MEAN, jnp.float32)
    inv_std = 1.0 / jnp.asarray(IMAGENET_STD, jnp.float32)

    # Fold Normalize into conv1 (weights scaled, bias shifted).
    w1 = params["w1c"] * inv_std[None, None, :, None]            # HWIO
    b1 = params["b1c"] - jnp.einsum("hwio,i->o", params["w1c"], mean * inv_std)
    w1f = w1.reshape(27, 16)                                     # (ky,kx,c)xco

    return {
        "im2col_idx": jnp.asarray(idx),
        "p2sel": jnp.asarray(p2sel),
        # 9-fold block-diagonal conv1 weight: one dot yields all 9 conv2 taps.
        "w1bd": jnp.kron(jnp.eye(9, dtype=jnp.float32), w1f),    # (243, 144)
        "b1": jnp.tile(b1, 9).reshape(1, 144),
        "w2": params["w2c"].reshape(144, 32),
        "b2": params["b2c"].reshape(1, 32),
        # conv3 + pool3 == Linear(288 -> 64) on pooled2 (window == whole map).
        "w3": params["w3c"].reshape(9, 32, 64),
        "b3": params["b3c"].reshape(1, 64),
        # pooled3 is 1x1 spatial, so torch's NCHW flatten(1) needs no permute.
        "w1l": params["w1l"], "b1l": params["b1l"].reshape(1, -1),
        "w2l": params["w2l"], "b2l": params["b2l"].reshape(1, -1),
        "w3l": params["w3l"], "b3l": params["b3l"].reshape(1, -1),
        "w4l": params["w4l"].reshape(1, -1),                      # (1, 20)
        "b4l": params["b4l"].reshape(1, 1),
    }


# ----------------------------------------------------------------------------
# Pure-JAX reference with exact PyTorch eval semantics.
# ----------------------------------------------------------------------------
def reference_forward(x_nchw, params):
    mean = jnp.asarray(IMAGENET_MEAN, jnp.float32)
    std = jnp.asarray(IMAGENET_STD, jnp.float32)
    x = (x_nchw - mean[None, :, None, None]) / std[None, :, None, None]
    y = jnp.transpose(x, (0, 2, 3, 1))
    for i in (1, 2, 3):
        y = lax.conv_general_dilated(
            y, params[f"w{i}c"], (3, 3), "VALID",
            dimension_numbers=("NHWC", "HWIO", "NHWC")) + params[f"b{i}c"]
        y = jnp.maximum(y, 0.0)
        y = lax.reduce_window(y, -jnp.inf, lax.max, (1, 2, 2, 1), (1, 2, 2, 1),
                              ((0, 0), (1, 1), (1, 1), (0, 0)))
    B = y.shape[0]
    xf = jnp.transpose(y, (0, 3, 1, 2)).reshape(B, -1)   # torch x.flatten(1)
    h = jnp.maximum(xf @ params["w1l"] + params["b1l"], 0.0)
    h = jnp.maximum(h @ params["w2l"] + params["b2l"], 0.0)
    h = jnp.maximum(h @ params["w3l"] + params["b3l"], 0.0)
    return h @ params["w4l"] + params["b4l"]


# ----------------------------------------------------------------------------
# Deterministic init (xavier_uniform weights, zero biases, like the module).
# Conv weights kept in HWIO, linear weights as (in, out).
# ----------------------------------------------------------------------------
def init_params(key, input_hw=(100, 100)):
    h, w = input_hw
    for _ in range(3):
        h, w = _conv_out(h), _conv_out(w)
        h, w = _pool_out(h), _pool_out(w)
    feat = 64 * h * w
    ks = jax.random.split(key, 7)

    def xavier(k, shape, fan_in, fan_out):
        bound = math.sqrt(6.0 / (fan_in + fan_out))
        return jax.random.uniform(k, shape, jnp.float32, -bound, bound)

    return {
        "w1c": xavier(ks[0], (3, 3, 3, 16), 3 * 9, 16 * 9),
        "b1c": jnp.zeros((16,), jnp.float32),
        "w2c": xavier(ks[1], (3, 3, 16, 32), 16 * 9, 32 * 9),
        "b2c": jnp.zeros((32,), jnp.float32),
        "w3c": xavier(ks[2], (3, 3, 32, 64), 32 * 9, 64 * 9),
        "b3c": jnp.zeros((64,), jnp.float32),
        "w1l": xavier(ks[3], (feat, 500), feat, 500),
        "b1l": jnp.zeros((500,), jnp.float32),
        "w2l": xavier(ks[4], (500, 100), 500, 100),
        "b2l": jnp.zeros((100,), jnp.float32),
        "w3l": xavier(ks[5], (100, 20), 100, 20),
        "b3l": jnp.zeros((20,), jnp.float32),
        "w4l": xavier(ks[6], (20, 1), 20, 1),
        "b4l": jnp.zeros((1,), jnp.float32),
    }


if __name__ == "__main__":
    key = jax.random.PRNGKey(0)
    k_param, k_x = jax.random.split(key)

    # DAVE2v3Norm default input_shape=(100, 100); the conv/pool chain needs
    # spatial >= 66 to be valid, so keep the module's default (still tiny).
    B, C, H, W = 2, 3, 100, 100
    params = init_params(k_param, (H, W))
    prepared = prepare_params(params, (H, W))

    x = jax.random.uniform(k_x, (B, C, H, W), jnp.float32)   # image-like [0,1)

    out = jax.block_until_ready(dave2v3norm_forward(x, prepared))
    assert out.shape == (B, 1), out.shape

    ref = reference_forward(x, params)
    max_err = float(jnp.max(jnp.abs(out - ref)))
    assert max_err < 2e-3, f"mismatch vs reference: {max_err}"

    print("KERNEL_OK")
</pallas_src>

<mosaic_0001>
module attributes {stable_mosaic.version = 11 : i64} {
  func.func private @main(%arg0: i32) attributes {dimension_semantics = [#tpu.dimension_semantics<core_parallel>], iteration_bounds = array<i64: 2>, tpu.core_type = #tpu.core_type<sc_scalar_subcore>, window_params = []} {
    return
  }
}

module attributes {stable_mosaic.version = 11 : i64} {
  func.func private @main(%arg0: i32) attributes {dimension_semantics = [#tpu.dimension_semantics<core_parallel>], iteration_bounds = array<i64: 2>, tpu.core_type = #tpu.core_type<sc_scalar_subcore>, window_params = []} {
    return
  }
}

module attributes {stable_mosaic.version = 11 : i64} {
  func.func @_dave2_fused_kernel(%arg0: i32, %arg1: memref<1x4x36x243xf32, #tpu.memory_space<vmem>>, %arg2: memref<243x144xf32, #tpu.memory_space<vmem>>, %arg3: memref<1x144xf32, #tpu.memory_space<vmem>>, %arg4: memref<144x32xf32, #tpu.memory_space<vmem>>, %arg5: memref<1x32xf32, #tpu.memory_space<vmem>>, %arg6: memref<4x9x36xf32, #tpu.memory_space<vmem>>, %arg7: memref<9x32x64xf32, #tpu.memory_space<vmem>>, %arg8: memref<1x64xf32, #tpu.memory_space<vmem>>, %arg9: memref<64x500xf32, #tpu.memory_space<vmem>>, %arg10: memref<1x500xf32, #tpu.memory_space<vmem>>, %arg11: memref<500x100xf32, #tpu.memory_space<vmem>>, %arg12: memref<1x100xf32, #tpu.memory_space<vmem>>, %arg13: memref<100x20xf32, #tpu.memory_space<vmem>>, %arg14: memref<1x20xf32, #tpu.memory_space<vmem>>, %arg15: memref<1x20xf32, #tpu.memory_space<vmem>>, %arg16: memref<1x1xf32, #tpu.memory_space<vmem>>, %arg17: memref<1x1x1xf32, #tpu.memory_space<vmem>>) attributes {dimension_semantics = [#tpu.dimension_semantics<parallel>], iteration_bounds = array<i64: 2>, scalar_prefetch = 0 : i64, scratch_operands = 0 : i64, tpu.core_type = #tpu.core_type<tc>, window_params = [{transform_indices = @transform_0, window_bounds = array<i64: 1, 4, 36, 243>}, {pipeline_mode = #tpu.pipeline_mode<synchronous>, transform_indices = @transform_1, window_bounds = array<i64: 243, 144>}, {pipeline_mode = #tpu.pipeline_mode<synchronous>, transform_indices = @transform_2, window_bounds = array<i64: 1, 144>}, {pipeline_mode = #tpu.pipeline_mode<synchronous>, transform_indices = @transform_3, window_bounds = array<i64: 144, 32>}, {pipeline_mode = #tpu.pipeline_mode<synchronous>, transform_indices = @transform_4, window_bounds = array<i64: 1, 32>}, {pipeline_mode = #tpu.pipeline_mode<synchronous>, transform_indices = @transform_5, window_bounds = array<i64: 4, 9, 36>}, {pipeline_mode = #tpu.pipeline_mode<synchronous>, transform_indices = @transform_6, window_bounds = array<i64: 9, 32, 64>}, {pipeline_mode = #tpu.pipeline_mode<synchronous>, transform_indices = @transform_7, window_bounds = array<i64: 1, 64>}, {pipeline_mode = #tpu.pipeline_mode<synchronous>, transform_indices = @transform_8, window_bounds = array<i64: 64, 500>}, {pipeline_mode = #tpu.pipeline_mode<synchronous>, transform_indices = @transform_9, window_bounds = array<i64: 1, 500>}, {pipeline_mode = #tpu.pipeline_mode<synchronous>, transform_indices = @transform_10, window_bounds = array<i64: 500, 100>}, {pipeline_mode = #tpu.pipeline_mode<synchronous>, transform_indices = @transform_11, window_bounds = array<i64: 1, 100>}, {pipeline_mode = #tpu.pipeline_mode<synchronous>, transform_indices = @transform_12, window_bounds = array<i64: 100, 20>}, {pipeline_mode = #tpu.pipeline_mode<synchronous>, transform_indices = @transform_13, window_bounds = array<i64: 1, 20>}, {pipeline_mode = #tpu.pipeline_mode<synchronous>, transform_indices = @transform_14, window_bounds = array<i64: 1, 20>}, {pipeline_mode = #tpu.pipeline_mode<synchronous>, transform_indices = @transform_15, window_bounds = array<i64: 1, 1>}, {transform_indices = @transform_16, window_bounds = array<i64: 1, 1, 1>}]} {
    %c0 = arith.constant 0 : index
    %c0_0 = arith.constant 0 : index
    %0 = vector.load %arg2[%c0, %c0_0] : memref<243x144xf32, #tpu.memory_space<vmem>>, vector<243x144xf32>
    %c0_1 = arith.constant 0 : index
    %c0_2 = arith.constant 0 : index
    %c0_3 = arith.constant 0 : index
    %c0_4 = arith.constant 0 : index
    %1 = vector.load %arg1[%c0_1, %c0_2, %c0_3, %c0_4] : memref<1x4x36x243xf32, #tpu.memory_space<vmem>>, vector<1x1x36x243xf32>
    %2 = vector.shape_cast %1 : vector<1x1x36x243xf32> to vector<36x243xf32>
    %cst = arith.constant dense<0.000000e+00> : vector<36x144xf32>
    %3 = tpu.matmul %2, %0, %cst {dimension_numbers = #tpu.dot_dimension_numbers<[1], [0], [0], [1], [0, 0, 1, 1], [], []>} : vector<36x243xf32>, vector<243x144xf32>, vector<36x144xf32> -> vector<36x144xf32>
    %c0_5 = arith.constant 0 : index
    %c1 = arith.constant 1 : index
    %c0_6 = arith.constant 0 : index
    %c0_7 = arith.constant 0 : index
    %4 = vector.load %arg1[%c0_5, %c1, %c0_6, %c0_7] : memref<1x4x36x243xf32, #tpu.memory_space<vmem>>, vector<1x1x36x243xf32>
    %5 = vector.shape_cast %4 : vector<1x1x36x243xf32> to vector<36x243xf32>
    %cst_8 = arith.constant dense<0.000000e+00> : vector<36x144xf32>
    %6 = tpu.matmul %5, %0, %cst_8 {dimension_numbers = #tpu.dot_dimension_numbers<[1], [0], [0], [1], [0, 0, 1, 1], [], []>} : vector<36x243xf32>, vector<243x144xf32>, vector<36x144xf32> -> vector<36x144xf32>
    %7 = arith.maximumf %3, %6 : vector<36x144xf32>
    %c0_9 = arith.constant 0 : index
    %c2 = arith.constant 2 : index
    %c0_10 = arith.constant 0 : index
    %c0_11 = arith.constant 0 : index
    %8 = vector.load %arg1[%c0_9, %c2, %c0_10, %c0_11] : memref<1x4x36x243xf32, #tpu.memory_space<vmem>>, vector<1x1x36x243xf32>
    %9 = vector.shape_cast %8 : vector<1x1x36x243xf32> to vector<36x243xf32>
    %cst_12 = arith.constant dense<0.000000e+00> : vector<36x144xf32>
    %10 = tpu.matmul %9, %0, %cst_12 {dimension_numbers = #tpu.dot_dimension_numbers<[1], [0], [0], [1], [0, 0, 1, 1], [], []>} : vector<36x243xf32>, vector<243x144xf32>, vector<36x144xf32> -> vector<36x144xf32>
    %11 = arith.maximumf %7, %10 : vector<36x144xf32>
    %c0_13 = arith.constant 0 : index
    %c3 = arith.constant 3 : index
    %c0_14 = arith.constant 0 : index
    %c0_15 = arith.constant 0 : index
    %12 = vector.load %arg1[%c0_13, %c3, %c0_14, %c0_15] : memref<1x4x36x243xf32, #tpu.memory_space<vmem>>, vector<1x1x36x243xf32>
    %13 = vector.shape_cast %12 : vector<1x1x36x243xf32> to vector<36x243xf32>
    %cst_16 = arith.constant dense<0.000000e+00> : vector<36x144xf32>
    %14 = tpu.matmul %13, %0, %cst_16 {dimension_numbers = #tpu.dot_dimension_numbers<[1], [0], [0], [1], [0, 0, 1, 1], [], []>} : vector<36x243xf32>, vector<243x144xf32>, vector<36x144xf32> -> vector<36x144xf32>
    %15 = arith.maximumf %11, %14 : vector<36x144xf32>
    %c0_17 = arith.constant 0 : index
    %c0_18 = arith.constant 0 : index
    %16 = vector.load %arg3[%c0_17, %c0_18] : memref<1x144xf32, #tpu.memory_space<vmem>>, vector<1x144xf32>
    %17 = vector.broadcast %16 : vector<1x144xf32> to vector<36x144xf32>
    %18 = arith.addf %15, %17 : vector<36x144xf32>
    %cst_19 = arith.constant 0.000000e+00 : f32
    %19 = vector.broadcast %cst_19 : f32 to vector<36x144xf32>
    %20 = arith.maximumf %18, %19 : vector<36x144xf32>
    %c0_20 = arith.constant 0 : index
    %c0_21 = arith.constant 0 : index
    %21 = vector.load %arg4[%c0_20, %c0_21] : memref<144x32xf32, #tpu.memory_space<vmem>>, vector<144x32xf32>
    %cst_22 = arith.constant dense<0.000000e+00> : vector<36x32xf32>
    %22 = tpu.matmul %20, %21, %cst_22 {dimension_numbers = #tpu.dot_dimension_numbers<[1], [0], [0], [1], [0, 0, 1, 1], [], []>} : vector<36x144xf32>, vector<144x32xf32>, vector<36x32xf32> -> vector<36x32xf32>
    %c0_23 = arith.constant 0 : index
    %c0_24 = arith.constant 0 : index
    %c0_25 = arith.constant 0 : index
    %23 = vector.load %arg6[%c0_23, %c0_24, %c0_25] : memref<4x9x36xf32, #tpu.memory_space<vmem>>, vector<1x9x36xf32>
    %24 = vector.shape_cast %23 : vector<1x9x36xf32> to vector<9x36xf32>
    %cst_26 = arith.constant dense<0.000000e+00> : vector<9x32xf32>
    %25 = tpu.matmul %24, %22, %cst_26 {dimension_numbers = #tpu.dot_dimension_numbers<[1], [0], [0], [1], [0, 0, 1, 1], [], []>} : vector<9x36xf32>, vector<36x32xf32>, vector<9x32xf32> -> vector<9x32xf32>
    %c1_27 = arith.constant 1 : index
    %c0_28 = arith.constant 0 : index
    %c0_29 = arith.constant 0 : index
    %26 = vector.load %arg6[%c1_27, %c0_28, %c0_29] : memref<4x9x36xf32, #tpu.memory_space<vmem>>, vector<1x9x36xf32>
    %27 = vector.shape_cast %26 : vector<1x9x36xf32> to vector<9x36xf32>
    %cst_30 = arith.constant dense<0.000000e+00> : vector<9x32xf32>
    %28 = tpu.matmul %27, %22, %cst_30 {dimension_numbers = #tpu.dot_dimension_numbers<[1], [0], [0], [1], [0, 0, 1, 1], [], []>} : vector<9x36xf32>, vector<36x32xf32>, vector<9x32xf32> -> vector<9x32xf32>
    %29 = arith.maximumf %25, %28 : vector<9x32xf32>
    %c2_31 = arith.constant 2 : index
    %c0_32 = arith.constant 0 : index
    %c0_33 = arith.constant 0 : index
    %30 = vector.load %arg6[%c2_31, %c0_32, %c0_33] : memref<4x9x36xf32, #tpu.memory_space<vmem>>, vector<1x9x36xf32>
    %31 = vector.shape_cast %30 : vector<1x9x36xf32> to vector<9x36xf32>
    %cst_34 = arith.constant dense<0.000000e+00> : vector<9x32xf32>
    %32 = tpu.matmul %31, %22, %cst_34 {dimension_numbers = #tpu.dot_dimension_numbers<[1], [0], [0], [1], [0, 0, 1, 1], [], []>} : vector<9x36xf32>, vector<36x32xf32>, vector<9x32xf32> -> vector<9x32xf32>
    %33 = arith.maximumf %29, %32 : vector<9x32xf32>
    %c3_35 = arith.constant 3 : index
    %c0_36 = arith.constant 0 : index
    %c0_37 = arith.constant 0 : index
    %34 = vector.load %arg6[%c3_35, %c0_36, %c0_37] : memref<4x9x36xf32, #tpu.memory_space<vmem>>, vector<1x9x36xf32>
    %35 = vector.shape_cast %34 : vector<1x9x36xf32> to vector<9x36xf32>
    %cst_38 = arith.constant dense<0.000000e+00> : vector<9x32xf32>
    %36 = tpu.matmul %35, %22, %cst_38 {dimension_numbers = #tpu.dot_dimension_numbers<[1], [0], [0], [1], [0, 0, 1, 1], [], []>} : vector<9x36xf32>, vector<36x32xf32>, vector<9x32xf32> -> vector<9x32xf32>
    %37 = arith.maximumf %33, %36 : vector<9x32xf32>
    %c0_39 = arith.constant 0 : index
    %c0_40 = arith.constant 0 : index
    %38 = vector.load %arg5[%c0_39, %c0_40] : memref<1x32xf32, #tpu.memory_space<vmem>>, vector<1x32xf32>
    %39 = vector.broadcast %38 : vector<1x32xf32> to vector<9x32xf32>
    %40 = arith.addf %37, %39 : vector<9x32xf32>
    %cst_41 = arith.constant 0.000000e+00 : f32
    %41 = vector.broadcast %cst_41 : f32 to vector<9x32xf32>
    %42 = arith.maximumf %40, %41 : vector<9x32xf32>
    %c0_42 = arith.constant 0 : index
    %c0_43 = arith.constant 0 : index
    %43 = vector.load %arg8[%c0_42, %c0_43] : memref<1x64xf32, #tpu.memory_space<vmem>>, vector<1x64xf32>
    %44 = vector.extract_strided_slice %42 {offsets = [0, 0], sizes = [1, 32], strides = [1, 1]} : vector<9x32xf32> to vector<1x32xf32>
    %c0_44 = arith.constant 0 : index
    %c0_45 = arith.constant 0 : index
    %c0_46 = arith.constant 0 : index
    %45 = vector.load %arg7[%c0_44, %c0_45, %c0_46] : memref<9x32x64xf32, #tpu.memory_space<vmem>>, vector<1x32x64xf32>
    %46 = vector.shape_cast %45 : vector<1x32x64xf32> to vector<32x64xf32>
    %cst_47 = arith.constant dense<0.000000e+00> : vector<1x64xf32>
    %47 = tpu.matmul %44, %46, %cst_47 {dimension_numbers = #tpu.dot_dimension_numbers<[1], [0], [0], [1], [0, 0, 1, 1], [], []>} : vector<1x32xf32>, vector<32x64xf32>, vector<1x64xf32> -> vector<1x64xf32>
    %48 = arith.addf %43, %47 : vector<1x64xf32>
    %49 = vector.extract_strided_slice %42 {offsets = [1, 0], sizes = [1, 32], strides = [1, 1]} : vector<9x32xf32> to vector<1x32xf32>
    %c1_48 = arith.constant 1 : index
    %c0_49 = arith.constant 0 : index
    %c0_50 = arith.constant 0 : index
    %50 = vector.load %arg7[%c1_48, %c0_49, %c0_50] : memref<9x32x64xf32, #tpu.memory_space<vmem>>, vector<1x32x64xf32>
    %51 = vector.shape_cast %50 : vector<1x32x64xf32> to vector<32x64xf32>
    %cst_51 = arith.constant dense<0.000000e+00> : vector<1x64xf32>
    %52 = tpu.matmul %49, %51, %cst_51 {dimension_numbers = #tpu.dot_dimension_numbers<[1], [0], [0], [1], [0, 0, 1, 1], [], []>} : vector<1x32xf32>, vector<32x64xf32>, vector<1x64xf32> -> vector<1x64xf32>
    %53 = arith.addf %48, %52 : vector<1x64xf32>
    %54 = vector.extract_strided_slice %42 {offsets = [2, 0], sizes = [1, 32], strides = [1, 1]} : vector<9x32xf32> to vector<1x32xf32>
    %c2_52 = arith.constant 2 : index
    %c0_53 = arith.constant 0 : index
    %c0_54 = arith.constant 0 : index
    %55 = vector.load %arg7[%c2_52, %c0_53, %c0_54] : memref<9x32x64xf32, #tpu.memory_space<vmem>>, vector<1x32x64xf32>
    %56 = vector.shape_cast %55 : vector<1x32x64xf32> to vector<32x64xf32>
    %cst_55 = arith.constant dense<0.000000e+00> : vector<1x64xf32>
    %57 = tpu.matmul %54, %56, %cst_55 {dimension_numbers = #tpu.dot_dimension_numbers<[1], [0], [0], [1], [0, 0, 1, 1], [], []>} : vector<1x32xf32>, vector<32x64xf32>, vector<1x64xf32> -> vector<1x64xf32>
    %58 = arith.addf %53, %57 : vector<1x64xf32>
    %59 = vector.extract_strided_slice %42 {offsets = [3, 0], sizes = [1, 32], strides = [1, 1]} : vector<9x32xf32> to vector<1x32xf32>
    %c3_56 = arith.constant 3 : index
    %c0_57 = arith.constant 0 : index
    %c0_58 = arith.constant 0 : index
    %60 = vector.load %arg7[%c3_56, %c0_57, %c0_58] : memref<9x32x64xf32, #tpu.memory_space<vmem>>, vector<1x32x64xf32>
    %61 = vector.shape_cast %60 : vector<1x32x64xf32> to vector<32x64xf32>
    %cst_59 = arith.constant dense<0.000000e+00> : vector<1x64xf32>
    %62 = tpu.matmul %59, %61, %cst_59 {dimension_numbers = #tpu.dot_dimension_numbers<[1], [0], [0], [1], [0, 0, 1, 1], [], []>} : vector<1x32xf32>, vector<32x64xf32>, vector<1x64xf32> -> vector<1x64xf32>
    %63 = arith.addf %58, %62 : vector<1x64xf32>
    %64 = vector.extract_strided_slice %42 {offsets = [4, 0], sizes = [1, 32], strides = [1, 1]} : vector<9x32xf32> to vector<1x32xf32>
    %c4 = arith.constant 4 : index
    %c0_60 = arith.constant 0 : index
    %c0_61 = arith.constant 0 : index
    %65 = vector.load %arg7[%c4, %c0_60, %c0_61] : memref<9x32x64xf32, #tpu.memory_space<vmem>>, vector<1x32x64xf32>
    %66 = vector.shape_cast %65 : vector<1x32x64xf32> to vector<32x64xf32>
    %cst_62 = arith.constant dense<0.000000e+00> : vector<1x64xf32>
    %67 = tpu.matmul %64, %66, %cst_62 {dimension_numbers = #tpu.dot_dimension_numbers<[1], [0], [0], [1], [0, 0, 1, 1], [], []>} : vector<1x32xf32>, vector<32x64xf32>, vector<1x64xf32> -> vector<1x64xf32>
    %68 = arith.addf %63, %67 : vector<1x64xf32>
    %69 = vector.extract_strided_slice %42 {offsets = [5, 0], sizes = [1, 32], strides = [1, 1]} : vector<9x32xf32> to vector<1x32xf32>
    %c5 = arith.constant 5 : index
    %c0_63 = arith.constant 0 : index
    %c0_64 = arith.constant 0 : index
    %70 = vector.load %arg7[%c5, %c0_63, %c0_64] : memref<9x32x64xf32, #tpu.memory_space<vmem>>, vector<1x32x64xf32>
    %71 = vector.shape_cast %70 : vector<1x32x64xf32> to vector<32x64xf32>
    %cst_65 = arith.constant dense<0.000000e+00> : vector<1x64xf32>
    %72 = tpu.matmul %69, %71, %cst_65 {dimension_numbers = #tpu.dot_dimension_numbers<[1], [0], [0], [1], [0, 0, 1, 1], [], []>} : vector<1x32xf32>, vector<32x64xf32>, vector<1x64xf32> -> vector<1x64xf32>
    %73 = arith.addf %68, %72 : vector<1x64xf32>
    %74 = vector.extract_strided_slice %42 {offsets = [6, 0], sizes = [1, 32], strides = [1, 1]} : vector<9x32xf32> to vector<1x32xf32>
    %c6 = arith.constant 6 : index
    %c0_66 = arith.constant 0 : index
    %c0_67 = arith.constant 0 : index
    %75 = vector.load %arg7[%c6, %c0_66, %c0_67] : memref<9x32x64xf32, #tpu.memory_space<vmem>>, vector<1x32x64xf32>
    %76 = vector.shape_cast %75 : vector<1x32x64xf32> to vector<32x64xf32>
    %cst_68 = arith.constant dense<0.000000e+00> : vector<1x64xf32>
    %77 = tpu.matmul %74, %76, %cst_68 {dimension_numbers = #tpu.dot_dimension_numbers<[1], [0], [0], [1], [0, 0, 1, 1], [], []>} : vector<1x32xf32>, vector<32x64xf32>, vector<1x64xf32> -> vector<1x64xf32>
    %78 = arith.addf %73, %77 : vector<1x64xf32>
    %79 = vector.extract_strided_slice %42 {offsets = [7, 0], sizes = [1, 32], strides = [1, 1]} : vector<9x32xf32> to vector<1x32xf32>
    %c7 = arith.constant 7 : index
    %c0_69 = arith.constant 0 : index
    %c0_70 = arith.constant 0 : index
    %80 = vector.load %arg7[%c7, %c0_69, %c0_70] : memref<9x32x64xf32, #tpu.memory_space<vmem>>, vector<1x32x64xf32>
    %81 = vector.shape_cast %80 : vector<1x32x64xf32> to vector<32x64xf32>
    %cst_71 = arith.constant dense<0.000000e+00> : vector<1x64xf32>
    %82 = tpu.matmul %79, %81, %cst_71 {dimension_numbers = #tpu.dot_dimension_numbers<[1], [0], [0], [1], [0, 0, 1, 1], [], []>} : vector<1x32xf32>, vector<32x64xf32>, vector<1x64xf32> -> vector<1x64xf32>
    %83 = arith.addf %78, %82 : vector<1x64xf32>
    %84 = vector.extract_strided_slice %42 {offsets = [8, 0], sizes = [1, 32], strides = [1, 1]} : vector<9x32xf32> to vector<1x32xf32>
    %c8 = arith.constant 8 : index
    %c0_72 = arith.constant 0 : index
    %c0_73 = arith.constant 0 : index
    %85 = vector.load %arg7[%c8, %c0_72, %c0_73] : memref<9x32x64xf32, #tpu.memory_space<vmem>>, vector<1x32x64xf32>
    %86 = vector.shape_cast %85 : vector<1x32x64xf32> to vector<32x64xf32>
    %cst_74 = arith.constant dense<0.000000e+00> : vector<1x64xf32>
    %87 = tpu.matmul %84, %86, %cst_74 {dimension_numbers = #tpu.dot_dimension_numbers<[1], [0], [0], [1], [0, 0, 1, 1], [], []>} : vector<1x32xf32>, vector<32x64xf32>, vector<1x64xf32> -> vector<1x64xf32>
    %88 = arith.addf %83, %87 : vector<1x64xf32>
    %cst_75 = arith.constant 0.000000e+00 : f32
    %89 = vector.broadcast %cst_75 : f32 to vector<1x64xf32>
    %90 = arith.maximumf %88, %89 : vector<1x64xf32>
    %c0_76 = arith.constant 0 : index
    %c0_77 = arith.constant 0 : index
    %91 = vector.load %arg9[%c0_76, %c0_77] : memref<64x500xf32, #tpu.memory_space<vmem>>, vector<64x500xf32>
    %cst_78 = arith.constant dense<0.000000e+00> : vector<1x500xf32>
    %92 = tpu.matmul %90, %91, %cst_78 {dimension_numbers = #tpu.dot_dimension_numbers<[1], [0], [0], [1], [0, 0, 1, 1], [], []>} : vector<1x64xf32>, vector<64x500xf32>, vector<1x500xf32> -> vector<1x500xf32>
    %c0_79 = arith.constant 0 : index
    %c0_80 = arith.constant 0 : index
    %93 = vector.load %arg10[%c0_79, %c0_80] : memref<1x500xf32, #tpu.memory_space<vmem>>, vector<1x500xf32>
    %94 = arith.addf %92, %93 : vector<1x500xf32>
    %cst_81 = arith.constant 0.000000e+00 : f32
    %95 = vector.broadcast %cst_81 : f32 to vector<1x500xf32>
    %96 = arith.maximumf %94, %95 : vector<1x500xf32>
    %c0_82 = arith.constant 0 : index
    %c0_83 = arith.constant 0 : index
    %97 = vector.load %arg11[%c0_82, %c0_83] : memref<500x100xf32, #tpu.memory_space<vmem>>, vector<500x100xf32>
    %cst_84 = arith.constant dense<0.000000e+00> : vector<1x100xf32>
    %98 = tpu.matmul %96, %97, %cst_84 {dimension_numbers = #tpu.dot_dimension_numbers<[1], [0], [0], [1], [0, 0, 1, 1], [], []>} : vector<1x500xf32>, vector<500x100xf32>, vector<1x100xf32> -> vector<1x100xf32>
    %c0_85 = arith.constant 0 : index
    %c0_86 = arith.constant 0 : index
    %99 = vector.load %arg12[%c0_85, %c0_86] : memref<1x100xf32, #tpu.memory_space<vmem>>, vector<1x100xf32>
    %100 = arith.addf %98, %99 : vector<1x100xf32>
    %cst_87 = arith.constant 0.000000e+00 : f32
    %101 = vector.broadcast %cst_87 : f32 to vector<1x100xf32>
    %102 = arith.maximumf %100, %101 : vector<1x100xf32>
    %c0_88 = arith.constant 0 : index
    %c0_89 = arith.constant 0 : index
    %103 = vector.load %arg13[%c0_88, %c0_89] : memref<100x20xf32, #tpu.memory_space<vmem>>, vector<100x20xf32>
    %cst_90 = arith.constant dense<0.000000e+00> : vector<1x20xf32>
    %104 = tpu.matmul %102, %103, %cst_90 {dimension_numbers = #tpu.dot_dimension_numbers<[1], [0], [0], [1], [0, 0, 1, 1], [], []>} : vector<1x100xf32>, vector<100x20xf32>, vector<1x20xf32> -> vector<1x20xf32>
    %c0_91 = arith.constant 0 : index
    %c0_92 = arith.constant 0 : index
    %105 = vector.load %arg14[%c0_91, %c0_92] : memref<1x20xf32, #tpu.memory_space<vmem>>, vector<1x20xf32>
    %106 = arith.addf %104, %105 : vector<1x20xf32>
    %cst_93 = arith.constant 0.000000e+00 : f32
    %107 = vector.broadcast %cst_93 : f32 to vector<1x20xf32>
    %108 = arith.maximumf %106, %107 : vector<1x20xf32>
    %c0_94 = arith.constant 0 : index
    %c0_95 = arith.constant 0 : index
    %109 = vector.load %arg15[%c0_94, %c0_95] : memref<1x20xf32, #tpu.memory_space<vmem>>, vector<1x20xf32>
    %110 = arith.mulf %108, %109 : vector<1x20xf32>
    %cst_96 = arith.constant dense<0.000000e+00> : vector<1xf32>
    %111 = vector.multi_reduction <add>, %110, %cst_96 [1] : vector<1x20xf32> to vector<1xf32>
    %112 = vector.shape_cast %111 : vector<1xf32> to vector<1x1xf32>
    %c0_97 = arith.constant 0 : index
    %c0_98 = arith.constant 0 : index
    %113 = vector.load %arg16[%c0_97, %c0_98] : memref<1x1xf32, #tpu.memory_space<vmem>>, vector<1x1xf32>
    %114 = arith.addf %112, %113 : vector<1x1xf32>
    %c0_99 = arith.constant 0 : index
    %c0_100 = arith.constant 0 : index
    %c0_101 = arith.constant 0 : index
    %115 = vector.load %arg17[%c0_99, %c0_100, %c0_101] : memref<1x1x1xf32, #tpu.memory_space<vmem>>, vector<1x1x1xf32>
    %116 = vector.shape_cast %115 : vector<1x1x1xf32> to vector<1x1xf32>
    %117 = vector.shape_cast %114 : vector<1x1xf32> to vector<1x1x1xf32>
    tpu.vector_store %arg17[%c0_99, %c0_100, %c0_101], %117 {strides = array<i32>} : memref<1x1x1xf32, #tpu.memory_space<vmem>>, vector<1x1x1xf32>,
    return
  }
  func.func @transform_0(%arg0: i32) -> (i32, i32, i32, i32) {
    %c0_i32 = arith.constant 0 : i32
    %c0_i32_0 = arith.constant 0 : i32
    %c0_i32_1 = arith.constant 0 : i32
    %c0_i32_2 = arith.constant 0 : i32
    return %arg0, %c0_i32, %c0_i32_0, %c0_i32_1 : i32, i32, i32, i32
  }
  func.func @transform_1(%arg0: i32) -> (i32, i32) {
    %c0_i32 = arith.constant 0 : i32
    %c0_i32_0 = arith.constant 0 : i32
    %c0_i32_1 = arith.constant 0 : i32
    return %c0_i32, %c0_i32_0 : i32, i32
  }
  func.func @transform_2(%arg0: i32) -> (i32, i32) {
    %c0_i32 = arith.constant 0 : i32
    %c0_i32_0 = arith.constant 0 : i32
    %c0_i32_1 = arith.constant 0 : i32
    return %c0_i32, %c0_i32_0 : i32, i32
  }
  func.func @transform_3(%arg0: i32) -> (i32, i32) {
    %c0_i32 = arith.constant 0 : i32
    %c0_i32_0 = arith.constant 0 : i32
    %c0_i32_1 = arith.constant 0 : i32
    return %c0_i32, %c0_i32_0 : i32, i32
  }
  func.func @transform_4(%arg0: i32) -> (i32, i32) {
    %c0_i32 = arith.constant 0 : i32
    %c0_i32_0 = arith.constant 0 : i32
    %c0_i32_1 = arith.constant 0 : i32
    return %c0_i32, %c0_i32_0 : i32, i32
  }
  func.func @transform_5(%arg0: i32) -> (i32, i32, i32) {
    %c0_i32 = arith.constant 0 : i32
    %c0_i32_0 = arith.constant 0 : i32
    %c0_i32_1 = arith.constant 0 : i32
    %c0_i32_2 = arith.constant 0 : i32
    return %c0_i32, %c0_i32_0, %c0_i32_1 : i32, i32, i32
  }
  func.func @transform_6(%arg0: i32) -> (i32, i32, i32) {
    %c0_i32 = arith.constant 0 : i32
    %c0_i32_0 = arith.constant 0 : i32
    %c0_i32_1 = arith.constant 0 : i32
    %c0_i32_2 = arith.constant 0 : i32
    return %c0_i32, %c0_i32_0, %c0_i32_1 : i32, i32, i32
  }
  func.func @transform_7(%arg0: i32) -> (i32, i32) {
    %c0_i32 = arith.constant 0 : i32
    %c0_i32_0 = arith.constant 0 : i32
    %c0_i32_1 = arith.constant 0 : i32
    return %c0_i32, %c0_i32_0 : i32, i32
  }
  func.func @transform_8(%arg0: i32) -> (i32, i32) {
    %c0_i32 = arith.constant 0 : i32
    %c0_i32_0 = arith.constant 0 : i32
    %c0_i32_1 = arith.constant 0 : i32
    return %c0_i32, %c0_i32_0 : i32, i32
  }
  func.func @transform_9(%arg0: i32) -> (i32, i32) {
    %c0_i32 = arith.constant 0 : i32
    %c0_i32_0 = arith.constant 0 : i32
    %c0_i32_1 = arith.constant 0 : i32
    return %c0_i32, %c0_i32_0 : i32, i32
  }
  func.func @transform_10(%arg0: i32) -> (i32, i32) {
    %c0_i32 = arith.constant 0 : i32
    %c0_i32_0 = arith.constant 0 : i32
    %c0_i32_1 = arith.constant 0 : i32
    return %c0_i32, %c0_i32_0 : i32, i32
  }
  func.func @transform_11(%arg0: i32) -> (i32, i32) {
    %c0_i32 = arith.constant 0 : i32
    %c0_i32_0 = arith.constant 0 : i32
    %c0_i32_1 = arith.constant 0 : i32
    return %c0_i32, %c0_i32_0 : i32, i32
  }
  func.func @transform_12(%arg0: i32) -> (i32, i32) {
    %c0_i32 = arith.constant 0 : i32
    %c0_i32_0 = arith.constant 0 : i32
    %c0_i32_1 = arith.constant 0 : i32
    return %c0_i32, %c0_i32_0 : i32, i32
  }
  func.func @transform_13(%arg0: i32) -> (i32, i32) {
    %c0_i32 = arith.constant 0 : i32
    %c0_i32_0 = arith.constant 0 : i32
    %c0_i32_1 = arith.constant 0 : i32
    return %c0_i32, %c0_i32_0 : i32, i32
  }
  func.func @transform_14(%arg0: i32) -> (i32, i32) {
    %c0_i32 = arith.constant 0 : i32
    %c0_i32_0 = arith.constant 0 : i32
    %c0_i32_1 = arith.constant 0 : i32
    return %c0_i32, %c0_i32_0 : i32, i32
  }
  func.func @transform_15(%arg0: i32) -> (i32, i32) {
    %c0_i32 = arith.constant 0 : i32
    %c0_i32_0 = arith.constant 0 : i32
    %c0_i32_1 = arith.constant 0 : i32
    return %c0_i32, %c0_i32_0 : i32, i32
  }
  func.func @transform_16(%arg0: i32) -> (i32, i32, i32) {
    %c0_i32 = arith.constant 0 : i32
    %c0_i32_0 = arith.constant 0 : i32
    %c0_i32_1 = arith.constant 0 : i32
    return %arg0, %c0_i32, %c0_i32_0 : i32, i32, i32
  }
}

</mosaic_0001>

<llo_original>
// kernel: dave2v3norm_forward.1
$region0: #{dave2v3norm_forward.1}
  #allocation0 [shape = 'u32[]', space=smem, size = 0x4, offset = 0x4, fixed_abs, tag = 'smem constant byte address 0x4 - core index']
  #allocation1 [shape = 'u32[144,128]{1,0:T(1,128)}', space=vmem, size = 0x12000, scoped, tag = 'internal scratch']
  #allocation2 [shape = 'f32[1,1]{1,0:T(1,128)S(1)}', space=vmem, size = 0x200, scoped, tag = 'scoped memory for dave2v3norm_forward.1']
  %s0 = inlined_call_operand.vmem [shape: f32[2,4,36,243], index: 0, kind: input, shape index: {}]
  %s1 = inlined_call_operand.vmem [shape: f32[243,144], index: 1, kind: input, shape index: {}]
  %s2 = inlined_call_operand.vmem [shape: f32[1,144], index: 2, kind: input, shape index: {}]
  %s3 = inlined_call_operand.vmem [shape: f32[144,32], index: 3, kind: input, shape index: {}]
  %s4 = inlined_call_operand.vmem [shape: f32[1,32], index: 4, kind: input, shape index: {}]
  %s5 = inlined_call_operand.vmem [shape: f32[4,9,36], index: 5, kind: input, shape index: {}]
  %s6 = inlined_call_operand.vmem [shape: f32[9,32,64], index: 6, kind: input, shape index: {}]
  %s7 = inlined_call_operand.vmem [shape: f32[1,64], index: 7, kind: input, shape index: {}]
  %s8 = inlined_call_operand.vmem [shape: f32[64,500], index: 8, kind: input, shape index: {}]
  %s9 = inlined_call_operand.vmem [shape: f32[1,500], index: 9, kind: input, shape index: {}]
  %s10 = inlined_call_operand.vmem [shape: f32[500,100], index: 10, kind: input, shape index: {}]
  %s11 = inlined_call_operand.vmem [shape: f32[1,100], index: 11, kind: input, shape index: {}]
  %s12 = inlined_call_operand.vmem [shape: f32[100,20], index: 12, kind: input, shape index: {}]
  %s13 = inlined_call_operand.vmem [shape: f32[1,20], index: 13, kind: input, shape index: {}]
  %s14 = inlined_call_operand.vmem [shape: f32[1,20], index: 14, kind: input, shape index: {}]
  %s15 = inlined_call_operand.<no memory space> [shape: f32[1,1], index: 15, kind: input, shape index: {}]
  %s16 = inlined_call_operand.vmem [shape: f32[2,1,1], index: 16, kind: output, shape index: {}]
  %s17 = sld [smem:[#allocation0]]
  $region97: #{dave2v3norm_forward.1} parent=0
    _
  %s19 = ssub.s32 1, %s17
  %s20 = scalar_select 0, %s19, %s17
  %v21 = vstv %s15
  %22 = vst [vmem:[#allocation2] sm:$0x1] %v21
  loop: start=0, step=1, limit=4
  $region2: #{dave2v3norm_forward.1} parent=0 // loop_pre_header
    _
  $region3: #{dave2v3norm_forward.1} parent=0 // loop_header
    %s24 = sphi 0, %s28
    %p25 = scmp.ge.s32.totalorder %s24, 4
    %s34 = sphi 0, %s36
    %s37 = sphi 0, %s34
    %s38 = sphi 0, %s37
    %s54 = sphi 0, %s38
    %s58 = sphi 0, %s58
    %s60 = sphi 0, %s58
    %s61 = sphi 0, %s60
    %s75 = sphi 0, %s61
    %s79 = sphi 0, %s79
    %s81 = sphi 0, %s79
    %s82 = sphi 0, %s81
    %s96 = sphi 0, %s82
    %s100 = sphi 0, %s100
    %s102 = sphi 0, %s100
    %s103 = sphi 0, %s102
    %s117 = sphi 0, %s103
    %s121 = sphi 0, %s121
    %s123 = sphi 0, %s121
    %s124 = sphi 0, %s123
    %s138 = sphi 0, %s124
    %s142 = sphi 0, %s142
    %s144 = sphi 0, %s142
    %s145 = sphi 0, %s144
    %s159 = sphi 0, %s145
    %s163 = sphi 0, %s163
    %s165 = sphi 0, %s163
    %s166 = sphi 0, %s165
    %s180 = sphi 0, %s166
    %s184 = sphi 0, %s184
    %s186 = sphi 0, %s184
    %s187 = sphi 0, %s186
    %s201 = sphi 0, %s187
    %s205 = sphi 0, %s205
    %s207 = sphi 0, %s205
    %s208 = sphi 0, %s207
    %s222 = sphi 0, %s208
    %s226 = sphi 0, %s226
    %s228 = sphi 0, %s226
    %s229 = sphi 0, %s228
    %s243 = sphi 0, %s229
    %s247 = sphi 0, %s247
    %s249 = sphi 0, %s247
    %s250 = sphi 0, %s249
    %s264 = sphi 0, %s250
    %s268 = sphi 0, %s268
    %s270 = sphi 0, %s268
    %s271 = sphi 0, %s270
    %s285 = sphi 0, %s271
    %s289 = sphi 0, %s289
    %s291 = sphi 0, %s289
    %s292 = sphi 0, %s291
    %s306 = sphi 0, %s292
    %s310 = sphi 0, %s310
    %s312 = sphi 0, %s310
    %s313 = sphi 0, %s312
    %s327 = sphi 0, %s313
    %s331 = sphi 0, %s331
    %s333 = sphi 0, %s331
    %s334 = sphi 0, %s333
    %s348 = sphi 0, %s334
    %s352 = sphi 0, %s352
    %s354 = sphi 0, %s352
    %s355 = sphi 0, %s354
    %s369 = sphi 0, %s355
    %s375 = sphi 0, %s377
    %s378 = sphi 0, %s375
    %s379 = sphi 0, %s378
    %s395 = sphi 0, %s379
  $region4: #{dave2v3norm_forward.1} parent=0 // loop_header_branch
    %27 = sbr.rel (%p25) target = $region8
  $region5: #{dave2v3norm_forward.1} parent=0 // loop_body
    %s29 = ssub.s32 %s24, 1
    %s30 = ssub.s32 %s24, 2
    %s31 = sadd.s32 %s24, 1
    %s32 = ssub.s32 %s24, %s31
    %p33 = scmp.eq.s32.totalorder %s32, 0
    %s35 = sadd.s32 %s34, 1
    %s36 = scalar_select %p33, %s34, %s35
    %p39 = pneg %p33
    %p40 = scmp.eq.s32.totalorder %s24, 1
    %p41 = por %p39, %p40
    %p42 = scmp.ne.s32.totalorder %s34, %s37
    %p43 = scmp.eq.s32.totalorder %s24, 0
    %p44 = por %p42, %p43
    %p45 = scmp.ne.s32.totalorder %s34, %s37
    %p46 = scmp.eq.s32.totalorder %s29, 1
    %p47 = por %p45, %p46
    %p48 = scmp.ne.s32.totalorder %s37, %s38
    %p49 = scmp.eq.s32.totalorder %s29, 0
    %p50 = por %p48, %p49
    %p51 = scmp.ne.s32.totalorder %s37, %s38
    %p52 = scmp.eq.s32.totalorder %s30, 1
    %p53 = por %p51, %p52
    %p55 = scmp.ne.s32.totalorder %s38, %s54
    %p56 = scmp.eq.s32.totalorder %s30, 0
    %p57 = por %p55, %p56
    %s59 = sadd.s32 %s58, 1
    %p62 = scmp.eq.s32.totalorder %s24, 1
    %p63 = scmp.ne.s32.totalorder %s58, %s60
    %p64 = scmp.eq.s32.totalorder %s24, 0
    %p65 = por %p63, %p64
    %p66 = scmp.ne.s32.totalorder %s58, %s60
    %p67 = scmp.eq.s32.totalorder %s29, 1
    %p68 = por %p66, %p67
    %p69 = scmp.ne.s32.totalorder %s60, %s61
    %p70 = scmp.eq.s32.totalorder %s29, 0
    %p71 = por %p69, %p70
    %p72 = scmp.ne.s32.totalorder %s60, %s61
    %p73 = scmp.eq.s32.totalorder %s30, 1
    %p74 = por %p72, %p73
    %p76 = scmp.ne.s32.totalorder %s61, %s75
    %p77 = scmp.eq.s32.totalorder %s30, 0
    %p78 = por %p76, %p77
    %s80 = sadd.s32 %s79, 1
    %p83 = scmp.eq.s32.totalorder %s24, 1
    %p84 = scmp.ne.s32.totalorder %s79, %s81
    %p85 = scmp.eq.s32.totalorder %s24, 0
    %p86 = por %p84, %p85
    %p87 = scmp.ne.s32.totalorder %s79, %s81
    %p88 = scmp.eq.s32.totalorder %s29, 1
    %p89 = por %p87, %p88
    %p90 = scmp.ne.s32.totalorder %s81, %s82
    %p91 = scmp.eq.s32.totalorder %s29, 0
    %p92 = por %p90, %p91
    %p93 = scmp.ne.s32.totalorder %s81, %s82
    %p94 = scmp.eq.s32.totalorder %s30, 1
    %p95 = por %p93, %p94
    %p97 = scmp.ne.s32.totalorder %s82, %s96
    %p98 = scmp.eq.s32.totalorder %s30, 0
    %p99 = por %p97, %p98
    %s101 = sadd.s32 %s100, 1
    %p104 = scmp.eq.s32.totalorder %s24, 1
    %p105 = scmp.ne.s32.totalorder %s100, %s102
    %p106 = scmp.eq.s32.totalorder %s24, 0
    %p107 = por %p105, %p106
    %p108 = scmp.ne.s32.totalorder %s100, %s102
    %p109 = scmp.eq.s32.totalorder %s29, 1
    %p110 = por %p108, %p109
    %p111 = scmp.ne.s32.totalorder %s102, %s103
    %p112 = scmp.eq.s32.totalorder %s29, 0
    %p113 = por %p111, %p112
    %p114 = scmp.ne.s32.totalorder %s102, %s103
    %p115 = scmp.eq.s32.totalorder %s30, 1
    %p116 = por %p114, %p115
    %p118 = scmp.ne.s32.totalorder %s103, %s117
    %p119 = scmp.eq.s32.totalorder %s30, 0
    %p120 = por %p118, %p119
    %s122 = sadd.s32 %s121, 1
    %p125 = scmp.eq.s32.totalorder %s24, 1
    %p126 = scmp.ne.s32.totalorder %s121, %s123
    %p127 = scmp.eq.s32.totalorder %s24, 0
    %p128 = por %p126, %p127
    %p129 = scmp.ne.s32.totalorder %s121, %s123
    %p130 = scmp.eq.s32.totalorder %s29, 1
    %p131 = por %p129, %p130
    %p132 = scmp.ne.s32.totalorder %s123, %s124
    %p133 = scmp.eq.s32.totalorder %s29, 0
    %p134 = por %p132, %p133
    %p135 = scmp.ne.s32.totalorder %s123, %s124
    %p136 = scmp.eq.s32.totalorder %s30, 1
    %p137 = por %p135, %p136
    %p139 = scmp.ne.s32.totalorder %s124, %s138
    %p140 = scmp.eq.s32.totalorder %s30, 0
    %p141 = por %p139, %p140
    %s143 = sadd.s32 %s142, 1
    %p146 = scmp.eq.s32.totalorder %s24, 1
    %p147 = scmp.ne.s32.totalorder %s142, %s144
    %p148 = scmp.eq.s32.totalorder %s24, 0
    %p149 = por %p147, %p148
    %p150 = scmp.ne.s32.totalorder %s142, %s144
    %p151 = scmp.eq.s32.totalorder %s29, 1
    %p152 = por %p150, %p151
    %p153 = scmp.ne.s32.totalorder %s144, %s145
    %p154 = scmp.eq.s32.totalorder %s29, 0
    %p155 = por %p153, %p154
    %p156 = scmp.ne.s32.totalorder %s144, %s145
    %p157 = scmp.eq.s32.totalorder %s30, 1
    %p158 = por %p156, %p157
    %p160 = scmp.ne.s32.totalorder %s145, %s159
    %p161 = scmp.eq.s32.totalorder %s30, 0
    %p162 = por %p160, %p161
    %s164 = sadd.s32 %s163, 1
    %p167 = scmp.eq.s32.totalorder %s24, 1
    %p168 = scmp.ne.s32.totalorder %s163, %s165
    %p169 = scmp.eq.s32.totalorder %s24, 0
    %p170 = por %p168, %p169
    %p171 = scmp.ne.s32.totalorder %s163, %s165
    %p172 = scmp.eq.s32.totalorder %s29, 1
    %p173 = por %p171, %p172
    %p174 = scmp.ne.s32.totalorder %s165, %s166
    %p175 = scmp.eq.s32.totalorder %s29, 0
    %p176 = por %p174, %p175
    %p177 = scmp.ne.s32.totalorder %s165, %s166
    %p178 = scmp.eq.s32.totalorder %s30, 1
    %p179 = por %p177, %p178
    %p181 = scmp.ne.s32.totalorder %s166, %s180
    %p182 = scmp.eq.s32.totalorder %s30, 0
    %p183 = por %p181, %p182
    %s185 = sadd.s32 %s184, 1
    %p188 = scmp.eq.s32.totalorder %s24, 1
    %p189 = scmp.ne.s32.totalorder %s184, %s186
    %p190 = scmp.eq.s32.totalorder %s24, 0
    %p191 = por %p189, %p190
    %p192 = scmp.ne.s32.totalorder %s184, %s186
    %p193 = scmp.eq.s32.totalorder %s29, 1
    %p194 = por %p192, %p193
    %p195 = scmp.ne.s32.totalorder %s186, %s187
    %p196 = scmp.eq.s32.totalorder %s29, 0
    %p197 = por %p195, %p196
    %p198 = scmp.ne.s32.totalorder %s186, %s187
    %p199 = scmp.eq.s32.totalorder %s30, 1
    %p200 = por %p198, %p199
    %p202 = scmp.ne.s32.totalorder %s187, %s201
    %p203 = scmp.eq.s32.totalorder %s30, 0
    %p204 = por %p202, %p203
    %s206 = sadd.s32 %s205, 1
    %p209 = scmp.eq.s32.totalorder %s24, 1
    %p210 = scmp.ne.s32.totalorder %s205, %s207
    %p211 = scmp.eq.s32.totalorder %s24, 0
    %p212 = por %p210, %p211
    %p213 = scmp.ne.s32.totalorder %s205, %s207
    %p214 = scmp.eq.s32.totalorder %s29, 1
    %p215 = por %p213, %p214
    %p216 = scmp.ne.s32.totalorder %s207, %s208
    %p217 = scmp.eq.s32.totalorder %s29, 0
    %p218 = por %p216, %p217
    %p219 = scmp.ne.s32.totalorder %s207, %s208
    %p220 = scmp.eq.s32.totalorder %s30, 1
    %p221 = por %p219, %p220
    %p223 = scmp.ne.s32.totalorder %s208, %s222
    %p224 = scmp.eq.s32.totalorder %s30, 0
    %p225 = por %p223, %p224
    %s227 = sadd.s32 %s226, 1
    %p230 = scmp.eq.s32.totalorder %s24, 1
    %p231 = scmp.ne.s32.totalorder %s226, %s228
    %p232 = scmp.eq.s32.totalorder %s24, 0
    %p233 = por %p231, %p232
    %p234 = scmp.ne.s32.totalorder %s226, %s228
    %p235 = scmp.eq.s32.totalorder %s29, 1
    %p236 = por %p234, %p235
    %p237 = scmp.ne.s32.totalorder %s228, %s229
    %p238 = scmp.eq.s32.totalorder %s29, 0
    %p239 = por %p237, %p238
    %p240 = scmp.ne.s32.totalorder %s228, %s229
    %p241 = scmp.eq.s32.totalorder %s30, 1
    %p242 = por %p240, %p241
    %p244 = scmp.ne.s32.totalorder %s229, %s243
    %p245 = scmp.eq.s32.totalorder %s30, 0
    %p246 = por %p244, %p245
    %s248 = sadd.s32 %s247, 1
    %p251 = scmp.eq.s32.totalorder %s24, 1
    %p252 = scmp.ne.s32.totalorder %s247, %s249
    %p253 = scmp.eq.s32.totalorder %s24, 0
    %p254 = por %p252, %p253
    %p255 = scmp.ne.s32.totalorder %s247, %s249
    %p256 = scmp.eq.s32.totalorder %s29, 1
    %p257 = por %p255, %p256
    %p258 = scmp.ne.s32.totalorder %s249, %s250
    %p259 = scmp.eq.s32.totalorder %s29, 0
    %p260 = por %p258, %p259
    %p261 = scmp.ne.s32.totalorder %s249, %s250
    %p262 = scmp.eq.s32.totalorder %s30, 1
    %p263 = por %p261, %p262
    %p265 = scmp.ne.s32.totalorder %s250, %s264
    %p266 = scmp.eq.s32.totalorder %s30, 0
    %p267 = por %p265, %p266
    %s269 = sadd.s32 %s268, 1
    %p272 = scmp.eq.s32.totalorder %s24, 1
    %p273 = scmp.ne.s32.totalorder %s268, %s270
    %p274 = scmp.eq.s32.totalorder %s24, 0
    %p275 = por %p273, %p274
    %p276 = scmp.ne.s32.totalorder %s268, %s270
    %p277 = scmp.eq.s32.totalorder %s29, 1
    %p278 = por %p276, %p277
    %p279 = scmp.ne.s32.totalorder %s270, %s271
    %p280 = scmp.eq.s32.totalorder %s29, 0
    %p281 = por %p279, %p280
    %p282 = scmp.ne.s32.totalorder %s270, %s271
    %p283 = scmp.eq.s32.totalorder %s30, 1
    %p284 = por %p282, %p283
    %p286 = scmp.ne.s32.totalorder %s271, %s285
    %p287 = scmp.eq.s32.totalorder %s30, 0
    %p288 = por %p286, %p287
    %s290 = sadd.s32 %s289, 1
    %p293 = scmp.eq.s32.totalorder %s24, 1
    %p294 = scmp.ne.s32.totalorder %s289, %s291
    %p295 = scmp.eq.s32.totalorder %s24, 0
    %p296 = por %p294, %p295
    %p297 = scmp.ne.s32.totalorder %s289, %s291
    %p298 = scmp.eq.s32.totalorder %s29, 1
    %p299 = por %p297, %p298
    %p300 = scmp.ne.s32.totalorder %s291, %s292
    %p301 = scmp.eq.s32.totalorder %s29, 0
    %p302 = por %p300, %p301
    %p303 = scmp.ne.s32.totalorder %s291, %s292
    %p304 = scmp.eq.s32.totalorder %s30, 1
    %p305 = por %p303, %p304
    %p307 = scmp.ne.s32.totalorder %s292, %s306
    %p308 = scmp.eq.s32.totalorder %s30, 0
    %p309 = por %p307, %p308
    %s311 = sadd.s32 %s310, 1
    %p314 = scmp.eq.s32.totalorder %s24, 1
    %p315 = scmp.ne.s32.totalorder %s310, %s312
    %p316 = scmp.eq.s32.totalorder %s24, 0
    %p317 = por %p315, %p316
    %p318 = scmp.ne.s32.totalorder %s310, %s312
    %p319 = scmp.eq.s32.totalorder %s29, 1
    %p320 = por %p318, %p319
    %p321 = scmp.ne.s32.totalorder %s312, %s313
    %p322 = scmp.eq.s32.totalorder %s29, 0
    %p323 = por %p321, %p322
    %p324 = scmp.ne.s32.totalorder %s312, %s313
    %p325 = scmp.eq.s32.totalorder %s30, 1
    %p326 = por %p324, %p325
    %p328 = scmp.ne.s32.totalorder %s313, %s327
    %p329 = scmp.eq.s32.totalorder %s30, 0
    %p330 = por %p328, %p329
    %s332 = sadd.s32 %s331, 1
    %p335 = scmp.eq.s32.totalorder %s24, 1
    %p336 = scmp.ne.s32.totalorder %s331, %s333
    %p337 = scmp.eq.s32.totalorder %s24, 0
    %p338 = por %p336, %p337
    %p339 = scmp.ne.s32.totalorder %s331, %s333
    %p340 = scmp.eq.s32.totalorder %s29, 1
    %p341 = por %p339, %p340
    %p342 = scmp.ne.s32.totalorder %s333, %s334
    %p343 = scmp.eq.s32.totalorder %s29, 0
    %p344 = por %p342, %p343
    %p345 = scmp.ne.s32.totalorder %s333, %s334
    %p346 = scmp.eq.s32.totalorder %s30, 1
    %p347 = por %p345, %p346
    %p349 = scmp.ne.s32.totalorder %s334, %s348
    %p350 = scmp.eq.s32.totalorder %s30, 0
    %p351 = por %p349, %p350
    %s353 = sadd.s32 %s352, 1
    %p356 = scmp.eq.s32.totalorder %s24, 1
    %p357 = scmp.ne.s32.totalorder %s352, %s354
    %p358 = scmp.eq.s32.totalorder %s24, 0
    %p359 = por %p357, %p358
    %p360 = scmp.ne.s32.totalorder %s352, %s354
    %p361 = scmp.eq.s32.totalorder %s29, 1
    %p362 = por %p360, %p361
    %p363 = scmp.ne.s32.totalorder %s354, %s355
    %p364 = scmp.eq.s32.totalorder %s29, 0
    %p365 = por %p363, %p364
    %p366 = scmp.ne.s32.totalorder %s354, %s355
    %p367 = scmp.eq.s32.totalorder %s30, 1
    %p368 = por %p366, %p367
    %p370 = scmp.ne.s32.totalorder %s355, %s369
    %p371 = scmp.eq.s32.totalorder %s30, 0
    %p372 = por %p370, %p371
    %s373 = ssub.s32 %s24, %s31
    %p374 = scmp.eq.s32.totalorder %s373, 0
    %s376 = sadd.s32 %s375, 1
    %s377 = scalar_select %p374, %s375, %s376
    %p380 = pneg %p374
    %p381 = scmp.eq.s32.totalorder %s24, 1
    %p382 = por %p380, %p381
    %p383 = scmp.ne.s32.totalorder %s375, %s378
    %p384 = scmp.eq.s32.totalorder %s24, 0
    %p385 = por %p383, %p384
    %p386 = scmp.ne.s32.totalorder %s375, %s378
    %p387 = scmp.eq.s32.totalorder %s29, 1
    %p388 = por %p386, %p387
    %p389 = scmp.ne.s32.totalorder %s378, %s379
    %p390 = scmp.eq.s32.totalorder %s29, 0
    %p391 = por %p389, %p390
    %p392 = scmp.ne.s32.totalorder %s378, %s379
    %p393 = scmp.eq.s32.totalorder %s30, 1
    %p394 = por %p392, %p393
    %p396 = scmp.ne.s32.totalorder %s379, %s395
    %p397 = scmp.eq.s32.totalorder %s30, 0
    %p398 = por %p396, %p397
    %p399 = scmp.le.s32.totalorder 1, %s24
    %p400 = scmp.lt.s32.totalorder %s24, 3
    %p401 = pnand %p399, %p400
    %p402 = pneg %p401
    // Predicated region
    $region9: #{dave2v3norm_forward.1} parent=5 // pred_check
      _
    $region10: #{dave2v3norm_forward.1} parent=5 // pred_check_branch
      %404 = sbr.rel (%p401) target = $region12
    $region11: #{dave2v3norm_forward.1} parent=5 // pred_region
      %s405 = ssub.s32 %s24, 1
      // Predicated region
      $region13: #{dave2v3norm_forward.1} parent=11 // pred_check
        %p406 = pneg %p71
      $region14: #{dave2v3norm_forward.1} parent=11 // pred_check_branch
        %408 = sbr.rel (%p406) target = $region16
      $region15: #{dave2v3norm_forward.1} parent=11 // pred_region
        _
      $region16: #{dave2v3norm_forward.1} parent=11 // pred_fallthru
        _
      // Predicated region
      $region17: #{dave2v3norm_forward.1} parent=11 // pred_check
        %p409 = pneg %p92
      $region18: #{dave2v3norm_forward.1} parent=11 // pred_check_branch
        %411 = sbr.rel (%p409) target = $region20
      $region19: #{dave2v3norm_forward.1} parent=11 // pred_region
        _
      $region20: #{dave2v3norm_forward.1} parent=11 // pred_fallthru
        _
      // Predicated region
      $region21: #{dave2v3norm_forward.1} parent=11 // pred_check
        %p412 = pneg %p113
      $region22: #{dave2v3norm_forward.1} parent=11 // pred_check_branch
        %414 = sbr.rel (%p412) target = $region24
      $region23: #{dave2v3norm_forward.1} parent=11 // pred_region
        _
      $region24: #{dave2v3norm_forward.1} parent=11 // pred_fallthru
        _
      // Predicated region
      $region25: #{dave2v3norm_forward.1} parent=11 // pred_check
        %p415 = pneg %p134
      $region26: #{dave2v3norm_forward.1} parent=11 // pred_check_branch
        %417 = sbr.rel (%p415) target = $region28
      $region27: #{dave2v3norm_forward.1} parent=11 // pred_region
        _
      $region28: #{dave2v3norm_forward.1} parent=11 // pred_fallthru
        _
      // Predicated region
      $region29: #{dave2v3norm_forward.1} parent=11 // pred_check
        %p418 = pneg %p155
      $region30: #{dave2v3norm_forward.1} parent=11 // pred_check_branch
        %420 = sbr.rel (%p418) target = $region32
      $region31: #{dave2v3norm_forward.1} parent=11 // pred_region
        _
      $region32: #{dave2v3norm_forward.1} parent=11 // pred_fallthru
        _
      // Predicated region
      $region33: #{dave2v3norm_forward.1} parent=11 // pred_check
        %p421 = pneg %p176
      $region34: #{dave2v3norm_forward.1} parent=11 // pred_check_branch
        %423 = sbr.rel (%p421) target = $region36
      $region35: #{dave2v3norm_forward.1} parent=11 // pred_region
        _
      $region36: #{dave2v3norm_forward.1} parent=11 // pred_fallthru
        _
      // Predicated region
      $region37: #{dave2v3norm_forward.1} parent=11 // pred_check
        %p424 = pneg %p197
      $region38: #{dave2v3norm_forward.1} parent=11 // pred_check_branch
        %426 = sbr.rel (%p424) target = $region40
      $region39: #{dave2v3norm_forward.1} parent=11 // pred_region
        _
      $region40: #{dave2v3norm_forward.1} parent=11 // pred_fallthru
        _
      // Predicated region
      $region41: #{dave2v3norm_forward.1} parent=11 // pred_check
        %p427 = pneg %p218
      $region42: #{dave2v3norm_forward.1} parent=11 // pred_check_branch
        %429 = sbr.rel (%p427) target = $region44
      $region43: #{dave2v3norm_forward.1} parent=11 // pred_region
        _
      $region44: #{dave2v3norm_forward.1} parent=11 // pred_fallthru
        _
      // Predicated region
      $region45: #{dave2v3norm_forward.1} parent=11 // pred_check
        %p430 = pneg %p239
      $region46: #{dave2v3norm_forward.1} parent=11 // pred_check_branch
        %432 = sbr.rel (%p430) target = $region48
      $region47: #{dave2v3norm_forward.1} parent=11 // pred_region
        _
      $region48: #{dave2v3norm_forward.1} parent=11 // pred_fallthru
        _
      // Predicated region
      $region49: #{dave2v3norm_forward.1} parent=11 // pred_check
        %p433 = pneg %p260
      $region50: #{dave2v3norm_forward.1} parent=11 // pred_check_branch
        %435 = sbr.rel (%p433) target = $region52
      $region51: #{dave2v3norm_forward.1} parent=11 // pred_region
        _
      $region52: #{dave2v3norm_forward.1} parent=11 // pred_fallthru
        _
      // Predicated region
      $region53: #{dave2v3norm_forward.1} parent=11 // pred_check
        %p436 = pneg %p281
      $region54: #{dave2v3norm_forward.1} parent=11 // pred_check_branch
        %438 = sbr.rel (%p436) target = $region56
      $region55: #{dave2v3norm_forward.1} parent=11 // pred_region
        _
      $region56: #{dave2v3norm_forward.1} parent=11 // pred_fallthru
        _
      // Predicated region
      $region57: #{dave2v3norm_forward.1} parent=11 // pred_check
        %p439 = pneg %p302
      $region58: #{dave2v3norm_forward.1} parent=11 // pred_check_branch
        %441 = sbr.rel (%p439) target = $region60
      $region59: #{dave2v3norm_forward.1} parent=11 // pred_region
        _
      $region60: #{dave2v3norm_forward.1} parent=11 // pred_fallthru
        _
      // Predicated region
      $region61: #{dave2v3norm_forward.1} parent=11 // pred_check
        %p442 = pneg %p323
      $region62: #{dave2v3norm_forward.1} parent=11 // pred_check_branch
        %444 = sbr.rel (%p442) target = $region64
      $region63: #{dave2v3norm_forward.1} parent=11 // pred_region
        _
      $region64: #{dave2v3norm_forward.1} parent=11 // pred_fallthru
        _
      // Predicated region
      $region65: #{dave2v3norm_forward.1} parent=11 // pred_check
        %p445 = pneg %p344
      $region66: #{dave2v3norm_forward.1} parent=11 // pred_check_branch
        %447 = sbr.rel (%p445) target = $region68
      $region67: #{dave2v3norm_forward.1} parent=11 // pred_region
        _
      $region68: #{dave2v3norm_forward.1} parent=11 // pred_fallthru
        _
      // Predicated region
      $region69: #{dave2v3norm_forward.1} parent=11 // pred_check
        %p448 = pneg %p365
      $region70: #{dave2v3norm_forward.1} parent=11 // pred_check_branch
        %450 = sbr.rel (%p448) target = $region72
      $region71: #{dave2v3norm_forward.1} parent=11 // pred_region
        _
      $region72: #{dave2v3norm_forward.1} parent=11 // pred_fallthru
        _
    $region12: #{dave2v3norm_forward.1} parent=5 // pred_fallthru
      _
    %p451 = scmp.lt.s32.totalorder %s24, 2
    // Predicated region
    $region73: #{dave2v3norm_forward.1} parent=5 // pred_check
      %p452 = pneg %p451
    $region74: #{dave2v3norm_forward.1} parent=5 // pred_check_branch
      %454 = sbr.rel (%p452) target = $region76
    $region75: #{dave2v3norm_forward.1} parent=5 // pred_region
      // Predicated region
      $region77: #{dave2v3norm_forward.1} parent=75 // pred_check
        %p455 = pneg %p44
      $region78: #{dave2v3norm_forward.1} parent=75 // pred_check_branch
        %457 = sbr.rel (%p455) target = $region80
      $region79: #{dave2v3norm_forward.1} parent=75 // pred_region
        %p458 = scmp.lt.s32.totalorder %s24, 1
        %s459 = scalar_select %p458, %s24, 1
        %s460 = smul.addr %s459, 40
        %s461 = smul.addr %s460, 8
        %s462 = scalar_lea.vmem %s0, %s461
      $region80: #{dave2v3norm_forward.1} parent=75 // pred_fallthru
        _
    $region76: #{dave2v3norm_forward.1} parent=5 // pred_fallthru
      _
    %p463 = scmp.le.s32.totalorder 1, %s24
    %p464 = scmp.lt.s32.totalorder %s24, 3
    %p465 = pnand %p463, %p464
    %p466 = pneg %p465
    // Predicated region
    $region81: #{dave2v3norm_forward.1} parent=5 // pred_check
      _
    $region82: #{dave2v3norm_forward.1} parent=5 // pred_check_branch
      %468 = sbr.rel (%p465) target = $region84
    $region83: #{dave2v3norm_forward.1} parent=5 // pred_region
      %s469 = ssub.s32 %s24, 1
      %p470 = scmp.lt.s32.totalorder %s29, 1
      %s471 = scalar_select %p470, %s29, 1
      %s472 = smul.addr %s471, 40
      %s473 = smul.addr %s472, 8
      %s474 = scalar_lea.vmem %s0, %s473
      %p475 = pneg %p50
      %p476 = pneg %p47
      %p477 = pneg %p71
      %p478 = pneg %p68
      %p479 = pneg %p92
      %p480 = pneg %p89
      %p481 = pneg %p113
      %p482 = pneg %p110
      %p483 = pneg %p134
      %p484 = pneg %p131
      %p485 = pneg %p155
      %p486 = pneg %p152
      %p487 = pneg %p176
      %p488 = pneg %p173
      %p489 = pneg %p197
      %p490 = pneg %p194
      %p491 = pneg %p218
      %p492 = pneg %p215
      %p493 = pneg %p239
      %p494 = pneg %p236
      %p495 = pneg %p260
      %p496 = pneg %p257
      %p497 = pneg %p281
      %p498 = pneg %p278
      %p499 = pneg %p302
      %p500 = pneg %p299
      %p501 = pneg %p323
      %p502 = pneg %p320
      %p503 = pneg %p344
      %p504 = pneg %p341
      %p505 = pneg %p365
      %p506 = pneg %p362
      %p507 = pneg %p391
      %p508 = pneg %p388
      %p509 = scmp.lt.s32.totalorder %s29, 1
      %s510 = scalar_select %p509, %s29, 1
      %s511 = scalar_lea.vmem %s16, %s510
      %p512 = scmp.lt.s32.totalorder %s29, 1
      %s513 = scalar_select %p512, %s29, 1
      %s514 = smul.addr %s513, 40
      %s515 = smul.addr %s514, 8
      %s516 = scalar_lea.vmem %s0, %s515
      %p517 = scmp.lt.s32.totalorder %s29, 1
      %s518 = scalar_select %p517, %s29, 1
      %s519 = scalar_lea.vmem %s16, %s518
      %v520 = vld [vmem:[%s1] sm:$0xff]
      %v521 = vld [vmem:[%s1 + $0x8] sm:$0xff]
      %v522 = vld [vmem:[%s1 + $0x10] sm:$0xff]
      %v523 = vld [vmem:[%s1 + $0x18] sm:$0xff]
      %v524 = vld [vmem:[%s1 + $0x20] sm:$0xff]
      %v525 = vld [vmem:[%s1 + $0x28] sm:$0xff]
      %v526 = vld [vmem:[%s1 + $0x30] sm:$0xff]
      %v527 = vld [vmem:[%s1 + $0x38] sm:$0xff]
      %v528 = vld [vmem:[%s1 + $0x40] sm:$0xff]
      %v529 = vld [vmem:[%s1 + $0x48] sm:$0xff]
      %v530 = vld [vmem:[%s1 + $0x50] sm:$0xff]
      %v531 = vld [vmem:[%s1 + $0x58] sm:$0xff]
      %v532 = vld [vmem:[%s1 + $0x60] sm:$0xff]
      %v533 = vld [vmem:[%s1 + $0x68] sm:$0xff]
      %v534 = vld [vmem:[%s1 + $0x70] sm:$0xff]
      %v535 = vld [vmem:[%s1 + $0x78] sm:$0xff]
      %v536 = vld [vmem:[%s1 + $0x80] sm:$0xff]
      %v537 = vld [vmem:[%s1 + $0x88] sm:$0xff]
      %v538 = vld [vmem:[%s1 + $0x90] sm:$0xff]
      %v539 = vld [vmem:[%s1 + $0x98] sm:$0xff]
      %v540 = vld [vmem:[%s1 + $0xa0] sm:$0xff]
      %v541 = vld [vmem:[%s1 + $0xa8] sm:$0xff]
      %v542 = vld [vmem:[%s1 + $0xb0] sm:$0xff]
      %v543 = vld [vmem:[%s1 + $0xb8] sm:$0xff]
      %v544 = vld [vmem:[%s1 + $0xc0] sm:$0xff]
      %v545 = vld [vmem:[%s1 + $0xc8] sm:$0xff]
      %v546 = vld [vmem:[%s1 + $0xd0] sm:$0xff]
      %v547 = vld [vmem:[%s1 + $0xd8] sm:$0xff]
      %v548 = vld [vmem:[%s1 + $0xe0] sm:$0xff]
      %v549 = vld [vmem:[%s1 + $0xe8] sm:$0xff]
      %v550 = vld [vmem:[%s1 + $0xf0] sm:$0xff]
      %v551 = vld [vmem:[%s1 + $0xf8] sm:$0xff]
      %v552 = vld [vmem:[%s1 + $0x100] sm:$0xff]
      %v553 = vld [vmem:[%s1 + $0x108] sm:$0xff]
      %v554 = vld [vmem:[%s1 + $0x110] sm:$0xff]
      %v555 = vld [vmem:[%s1 + $0x118] sm:$0xff]
      %v556 = vld [vmem:[%s1 + $0x120] sm:$0xff]
      %v557 = vld [vmem:[%s1 + $0x128] sm:$0xff]
      %v558 = vld [vmem:[%s1 + $0x130] sm:$0xff]
      %v559 = vld [vmem:[%s1 + $0x138] sm:$0xff]
      %v560 = vld [vmem:[%s1 + $0x140] sm:$0xff]
      %v561 = vld [vmem:[%s1 + $0x148] sm:$0xff]
      %v562 = vld [vmem:[%s1 + $0x150] sm:$0xff]
      %v563 = vld [vmem:[%s1 + $0x158] sm:$0xff]
      %v564 = vld [vmem:[%s1 + $0x160] sm:$0xff]
      %v565 = vld [vmem:[%s1 + $0x168] sm:$0xff]
      %v566 = vld [vmem:[%s1 + $0x170] sm:$0xff]
      %v567 = vld [vmem:[%s1 + $0x178] sm:$0xff]
      %v568 = vld [vmem:[%s1 + $0x180] sm:$0xff]
      %v569 = vld [vmem:[%s1 + $0x188] sm:$0xff]
      %v570 = vld [vmem:[%s1 + $0x190] sm:$0xff]
      %v571 = vld [vmem:[%s1 + $0x198] sm:$0xff]
      %v572 = vld [vmem:[%s1 + $0x1a0] sm:$0xff]
      %v573 = vld [vmem:[%s1 + $0x1a8] sm:$0xff]
      %v574 = vld [vmem:[%s1 + $0x1b0] sm:$0xff]
      %v575 = vld [vmem:[%s1 + $0x1b8] sm:$0xff]
      %v576 = vld [vmem:[%s1 + $0x1c0] sm:$0xff]
      %v577 = vld [vmem:[%s1 + $0x1c8] sm:$0xff]
      %v578 = vld [vmem:[%s1 + $0x1d0] sm:$0xff]
      %v579 = vld [vmem:[%s1 + $0x1d8] sm:$0xff]
      %v580 = vld [vmem:[%s1 + $0x1e0] sm:$0x7]
      %v581 = vld [vmem:[%s1 + $0x1e8] sm:$0x7]
      %v582 = vld [vmem:[%s516] sm:$0xff]
      %v583 = vld [vmem:[%s516 + $0x8] sm:$0xff]
      %v584 = vld [vmem:[%s516 + $0x10] sm:$0xff]
      %v585 = vld [vmem:[%s516 + $0x18] sm:$0xff]
      %v586 = vld [vmem:[%s516 + $0x20] sm:$0xff]
      %v587 = vld [vmem:[%s516 + $0x28] sm:$0xff]
      %v588 = vld [vmem:[%s516 + $0x30] sm:$0xff]
      %v589 = vld [vmem:[%s516 + $0x38] sm:$0xff]
      %v590 = vld [vmem:[%s516 + $0x40] sm:$0xf]
      %v591 = vld [vmem:[%s516 + $0x48] sm:$0xf]
      %vm592 = vcmask 941056
      %v594 = vsel %vm592, %v583, 0
      %v597 = vsel %vm592, %v585, 0
      %v600 = vsel %vm592, %v587, 0
      %v603 = vsel %vm592, %v589, 0
      %v606 = vsel %vm592, %v591, 0
      %vm608 = vcmask 1042432
      %v610 = vsel %vm608, %v580, 0
      %v613 = vsel %vm608, %v581, 0
      %615 = vmatprep.subr.mxu0 %v521
      %616 = vmatpush1.msra.mxu0 %v520
      %617 = vmatprep.subr.mxu0 %v523
      %618 = vmatpush1.msra.mxu0 %v522
      %619 = vmatprep.subr.mxu0 %v525
      %620 = vmatpush1.msra.mxu0 %v524
      %621 = vmatprep.subr.mxu0 %v527
      %622 = vmatpush1.msra.mxu0 %v526
      %623 = vmatprep.subr.mxu0 %v529
      %624 = vmatpush1.msra.mxu0 %v528
      %625 = vmatprep.subr.mxu0 %v531
      %626 = vmatpush1.msra.mxu0 %v530
      %627 = vmatprep.subr.mxu0 %v533
      %628 = vmatpush1.msra.mxu0 %v532
      %629 = vmatprep.subr.mxu0 %v535
      %630 = vmatpush1.msra.mxu0 %v534
      %631 = vmatprep.subr.mxu0 %v537
      %632 = vmatpush1.msra.mxu0 %v536
      %633 = vmatprep.subr.mxu0 %v539
      %634 = vmatpush1.msra.mxu0 %v538
      %635 = vmatprep.subr.mxu0 %v541
      %636 = vmatpush1.msra.mxu0 %v540
      %637 = vmatprep.subr.mxu0 %v543
      %638 = vmatpush1.msra.mxu0 %v542
      %639 = vmatprep.subr.mxu0 %v545
      %640 = vmatpush1.msra.mxu0 %v544
      %641 = vmatprep.subr.mxu0 %v547
      %642 = vmatpush1.msra.mxu0 %v546
      %643 = vmatprep.subr.mxu0 %v549
      %644 = vmatpush1.msra.mxu0 %v548
      %645 = vmatprep.subr.mxu0 %v551
      %646 = vmatpush1.msra.mxu0 %v550
      %647 = vmatprep.subr.mxu0 %v553
      %648 = vmatpush1.msra.mxu0 %v552
      %649 = vmatprep.subr.mxu0 %v555
      %650 = vmatpush1.msra.mxu0 %v554
      %651 = vmatprep.subr.mxu0 %v557
      %652 = vmatpush1.msra.mxu0 %v556
      %653 = vmatprep.subr.mxu0 %v559
      %654 = vmatpush1.msra.mxu0 %v558
      %655 = vmatprep.subr.mxu0 %v561
      %656 = vmatpush1.msra.mxu0 %v560
      %657 = vmatprep.subr.mxu0 %v563
      %658 = vmatpush1.msra.mxu0 %v562
      %659 = vmatprep.subr.mxu0 %v565
      %660 = vmatpush1.msra.mxu0 %v564
      %661 = vmatprep.subr.mxu0 %v567
      %662 = vmatpush1.msra.mxu0 %v566
      %663 = vmatprep.subr.mxu0 %v569
      %664 = vmatpush1.msra.mxu0 %v568
      %665 = vmatprep.subr.mxu0 %v571
      %666 = vmatpush1.msra.mxu0 %v570
      %667 = vmatprep.subr.mxu0 %v573
      %668 = vmatpush1.msra.mxu0 %v572
      %669 = vmatprep.subr.mxu0 %v575
      %670 = vmatpush1.msra.mxu0 %v574
      %671 = vmatprep.subr.mxu0 %v577
      %672 = vmatpush1.msra.mxu0 %v576
      %673 = vmatprep.subr.mxu0 %v579
      %674 = vmatpush1.msra.mxu0 %v578
      %675 = vmatprep.subr.mxu0 %v613
      %676 = vmatpush1.msra.mxu0 %v610
      %677 = vmatprep.subr.mxu0 0.0
      %678 = vmatpush1.msra.mxu0 0.0
      %679 = vmatprep.mubr.f32.mxu0 %v594
      %680 = vmatmul.mubr.f32.gmra.mrb[0].mxu0 %v582
      %v681 = vpop.f32.mrb[0].mxu0
      %v682 = vadd.f32 0.0, %v681
      %v683 = vpop.f32.mrb[0].mxu0
      %v684 = vadd.f32 0.0, %v683
      %685 = vmatprep.mubr.f32.mxu0 %v597
      %686 = vmatmul.mubr.f32.gmra.mrb[0].mxu0 %v584
      %v687 = vpop.f32.mrb[0].mxu0
      %v688 = vadd.f32 0.0, %v687
      %v689 = vpop.f32.mrb[0].mxu0
      %v690 = vadd.f32 0.0, %v689
      %691 = vmatprep.mubr.f32.mxu0 %v600
      %692 = vmatmul.mubr.f32.gmra.mrb[0].mxu0 %v586
      %v693 = vpop.f32.mrb[0].mxu0
      %v694 = vadd.f32 0.0, %v693
      %v695 = vpop.f32.mrb[0].mxu0
      %v696 = vadd.f32 0.0, %v695
      %697 = vmatprep.mubr.f32.mxu0 %v603
      %698 = vmatmul.mubr.f32.gmra.mrb[0].mxu0 %v588
      %v699 = vpop.f32.mrb[0].mxu0
      %v700 = vadd.f32 0.0, %v699
      %v701 = vpop.f32.mrb[0].mxu0
      %v702 = vadd.f32 0.0, %v701
      %703 = vmatprep.mubr.f32.mxu0 %v606
      %704 = vmatmul.mubr.f32.gmra.mrb[0].mxu0 %v590
      %v705 = vpop.f32.mrb[0].mxu0
      %v706 = vadd.f32 0.0, %v705
      %v707 = vpop.f32.mrb[0].mxu0
      %v708 = vadd.f32 0.0, %v707
      %709 = vdwg.mxu0
      %s710 = scalar_lea.vmem %s516, 80
      %v711 = vld [vmem:[%s710] sm:$0xff]
      %v712 = vld [vmem:[%s710 + $0x8] sm:$0xff]
      %v713 = vld [vmem:[%s710 + $0x10] sm:$0xff]
      %v714 = vld [vmem:[%s710 + $0x18] sm:$0xff]
      %v715 = vld [vmem:[%s710 + $0x20] sm:$0xff]
      %v716 = vld [vmem:[%s710 + $0x28] sm:$0xff]
      %v717 = vld [vmem:[%s710 + $0x30] sm:$0xff]
      %v718 = vld [vmem:[%s710 + $0x38] sm:$0xff]
      %v719 = vld [vmem:[%s710 + $0x40] sm:$0xf]
      %v720 = vld [vmem:[%s710 + $0x48] sm:$0xf]
      %v722 = vsel %vm592, %v712, 0
      %v725 = vsel %vm592, %v714, 0
      %v728 = vsel %vm592, %v716, 0
      %v731 = vsel %vm592, %v718, 0
      %v734 = vsel %vm592, %v720, 0
      %736 = vmatprep.subr.mxu0 %v521
      %737 = vmatpush1.msra.mxu0 %v520
      %738 = vmatprep.subr.mxu0 %v523
      %739 = vmatpush1.msra.mxu0 %v522
      %740 = vmatprep.subr.mxu0 %v525
      %741 = vmatpush1.msra.mxu0 %v524
      %742 = vmatprep.subr.mxu0 %v527
      %743 = vmatpush1.msra.mxu0 %v526
      %744 = vmatprep.subr.mxu0 %v529
      %745 = vmatpush1.msra.mxu0 %v528
      %746 = vmatprep.subr.mxu0 %v531
      %747 = vmatpush1.msra.mxu0 %v530
      %748 = vmatprep.subr.mxu0 %v533
      %749 = vmatpush1.msra.mxu0 %v532
      %750 = vmatprep.subr.mxu0 %v535
      %751 = vmatpush1.msra.mxu0 %v534
      %752 = vmatprep.subr.mxu0 %v537
      %753 = vmatpush1.msra.mxu0 %v536
      %754 = vmatprep.subr.mxu0 %v539
      %755 = vmatpush1.msra.mxu0 %v538
      %756 = vmatprep.subr.mxu0 %v541
      %757 = vmatpush1.msra.mxu0 %v540
      %758 = vmatprep.subr.mxu0 %v543
      %759 = vmatpush1.msra.mxu0 %v542
      %760 = vmatprep.subr.mxu0 %v545
      %761 = vmatpush1.msra.mxu0 %v544
      %762 = vmatprep.subr.mxu0 %v547
      %763 = vmatpush1.msra.mxu0 %v546
      %764 = vmatprep.subr.mxu0 %v549
      %765 = vmatpush1.msra.mxu0 %v548
      %766 = vmatprep.subr.mxu0 %v551
      %767 = vmatpush1.msra.mxu0 %v550
      %768 = vmatprep.subr.mxu0 %v553
      %769 = vmatpush1.msra.mxu0 %v552
      %770 = vmatprep.subr.mxu0 %v555
      %771 = vmatpush1.msra.mxu0 %v554
      %772 = vmatprep.subr.mxu0 %v557
      %773 = vmatpush1.msra.mxu0 %v556
      %774 = vmatprep.subr.mxu0 %v559
      %775 = vmatpush1.msra.mxu0 %v558
      %776 = vmatprep.subr.mxu0 %v561
      %777 = vmatpush1.msra.mxu0 %v560
      %778 = vmatprep.subr.mxu0 %v563
      %779 = vmatpush1.msra.mxu0 %v562
      %780 = vmatprep.subr.mxu0 %v565
      %781 = vmatpush1.msra.mxu0 %v564
      %782 = vmatprep.subr.mxu0 %v567
      %783 = vmatpush1.msra.mxu0 %v566
      %784 = vmatprep.subr.mxu0 %v569
      %785 = vmatpush1.msra.mxu0 %v568
      %786 = vmatprep.subr.mxu0 %v571
      %787 = vmatpush1.msra.mxu0 %v570
      %788 = vmatprep.subr.mxu0 %v573
      %789 = vmatpush1.msra.mxu0 %v572
      %790 = vmatprep.subr.mxu0 %v575
      %791 = vmatpush1.msra.mxu0 %v574
      %792 = vmatprep.subr.mxu0 %v577
      %793 = vmatpush1.msra.mxu0 %v576
      %794 = vmatprep.subr.mxu0 %v579
      %795 = vmatpush1.msra.mxu0 %v578
      %796 = vmatprep.subr.mxu0 %v613
      %797 = vmatpush1.msra.mxu0 %v610
      %798 = vmatprep.subr.mxu0 0.0
      %799 = vmatpush1.msra.mxu0 0.0
      %800 = vmatprep.mubr.f32.mxu0 %v722
      %801 = vmatmul.mubr.f32.gmra.mrb[0].mxu0 %v711
      %v802 = vpop.f32.mrb[0].mxu0
      %v803 = vadd.f32 0.0, %v802
      %v804 = vpop.f32.mrb[0].mxu0
      %v805 = vadd.f32 0.0, %v804
      %806 = vmatprep.mubr.f32.mxu0 %v725
      %807 = vmatmul.mubr.f32.gmra.mrb[0].mxu0 %v713
      %v808 = vpop.f32.mrb[0].mxu0
      %v809 = vadd.f32 0.0, %v808
      %v810 = vpop.f32.mrb[0].mxu0
      %v811 = vadd.f32 0.0, %v810
      %812 = vmatprep.mubr.f32.mxu0 %v728
      %813 = vmatmul.mubr.f32.gmra.mrb[0].mxu0 %v715
      %v814 = vpop.f32.mrb[0].mxu0
      %v815 = vadd.f32 0.0, %v814
      %v816 = vpop.f32.mrb[0].mxu0
      %v817 = vadd.f32 0.0, %v816
      %818 = vmatprep.mubr.f32.mxu0 %v731
      %819 = vmatmul.mubr.f32.gmra.mrb[0].mxu0 %v717
      %v820 = vpop.f32.mrb[0].mxu0
      %v821 = vadd.f32 0.0, %v820
      %v822 = vpop.f32.mrb[0].mxu0
      %v823 = vadd.f32 0.0, %v822
      %824 = vmatprep.mubr.f32.mxu0 %v734
      %825 = vmatmul.mubr.f32.gmra.mrb[0].mxu0 %v719
      %v826 = vpop.f32.mrb[0].mxu0
      %v827 = vadd.f32 0.0, %v826
      %v828 = vpop.f32.mrb[0].mxu0
      %v829 = vadd.f32 0.0, %v828
      %830 = vdwg.mxu0
      %v831 = vmax.f32 %v682, %v803
      %v832 = vmax.f32 %v684, %v805
      %v833 = vmax.f32 %v688, %v809
      %v834 = vmax.f32 %v690, %v811
      %v835 = vmax.f32 %v694, %v815
      %v836 = vmax.f32 %v696, %v817
      %v837 = vmax.f32 %v700, %v821
      %v838 = vmax.f32 %v702, %v823
      %v839 = vmax.f32 %v706, %v827
      %v840 = vmax.f32 %v708, %v829
      %s841 = scalar_lea.vmem %s516, 160
      %v842 = vld [vmem:[%s841] sm:$0xff]
      %v843 = vld [vmem:[%s841 + $0x8] sm:$0xff]
      %v844 = vld [vmem:[%s841 + $0x10] sm:$0xff]
      %v845 = vld [vmem:[%s841 + $0x18] sm:$0xff]
      %v846 = vld [vmem:[%s841 + $0x20] sm:$0xff]
      %v847 = vld [vmem:[%s841 + $0x28] sm:$0xff]
      %v848 = vld [vmem:[%s841 + $0x30] sm:$0xff]
      %v849 = vld [vmem:[%s841 + $0x38] sm:$0xff]
      %v850 = vld [vmem:[%s841 + $0x40] sm:$0xf]
      %v851 = vld [vmem:[%s841 + $0x48] sm:$0xf]
      %v853 = vsel %vm592, %v843, 0
      %v856 = vsel %vm592, %v845, 0
      %v859 = vsel %vm592, %v847, 0
      %v862 = vsel %vm592, %v849, 0
      %v865 = vsel %vm592, %v851, 0
      %867 = vmatprep.subr.mxu0 %v521
      %868 = vmatpush1.msra.mxu0 %v520
      %869 = vmatprep.subr.mxu0 %v523
      %870 = vmatpush1.msra.mxu0 %v522
      %871 = vmatprep.subr.mxu0 %v525
      %872 = vmatpush1.msra.mxu0 %v524
      %873 = vmatprep.subr.mxu0 %v527
      %874 = vmatpush1.msra.mxu0 %v526
      %875 = vmatprep.subr.mxu0 %v529
      %876 = vmatpush1.msra.mxu0 %v528
      %877 = vmatprep.subr.mxu0 %v531
      %878 = vmatpush1.msra.mxu0 %v530
      %879 = vmatprep.subr.mxu0 %v533
      %880 = vmatpush1.msra.mxu0 %v532
      %881 = vmatprep.subr.mxu0 %v535
      %882 = vmatpush1.msra.mxu0 %v534
      %883 = vmatprep.subr.mxu0 %v537
      %884 = vmatpush1.msra.mxu0 %v536
      %885 = vmatprep.subr.mxu0 %v539
      %886 = vmatpush1.msra.mxu0 %v538
      %887 = vmatprep.subr.mxu0 %v541
      %888 = vmatpush1.msra.mxu0 %v540
      %889 = vmatprep.subr.mxu0 %v543
      %890 = vmatpush1.msra.mxu0 %v542
      %891 = vmatprep.subr.mxu0 %v545
      %892 = vmatpush1.msra.mxu0 %v544
      %893 = vmatprep.subr.mxu0 %v547
      %894 = vmatpush1.msra.mxu0 %v546
      %895 = vmatprep.subr.mxu0 %v549
      %896 = vmatpush1.msra.mxu0 %v548
      %897 = vmatprep.subr.mxu0 %v551
      %898 = vmatpush1.msra.mxu0 %v550
      %899 = vmatprep.subr.mxu0 %v553
      %900 = vmatpush1.msra.mxu0 %v552
      %901 = vmatprep.subr.mxu0 %v555
      %902 = vmatpush1.msra.mxu0 %v554
      %903 = vmatprep.subr.mxu0 %v557
      %904 = vmatpush1.msra.mxu0 %v556
      %905 = vmatprep.subr.mxu0 %v559
      %906 = vmatpush1.msra.mxu0 %v558
      %907 = vmatprep.subr.mxu0 %v561
      %908 = vmatpush1.msra.mxu0 %v560
      %909 = vmatprep.subr.mxu0 %v563
      %910 = vmatpush1.msra.mxu0 %v562
      %911 = vmatprep.subr.mxu0 %v565
      %912 = vmatpush1.msra.mxu0 %v564
      %913 = vmatprep.subr.mxu0 %v567
      %914 = vmatpush1.msra.mxu0 %v566
      %915 = vmatprep.subr.mxu0 %v569
      %916 = vmatpush1.msra.mxu0 %v568
      %917 = vmatprep.subr.mxu0 %v571
      %918 = vmatpush1.msra.mxu0 %v570
      %919 = vmatprep.subr.mxu0 %v573
      %920 = vmatpush1.msra.mxu0 %v572
      %921 = vmatprep.subr.mxu0 %v575
      %922 = vmatpush1.msra.mxu0 %v574
      %923 = vmatprep.subr.mxu0 %v577
      %924 = vmatpush1.msra.mxu0 %v576
      %925 = vmatprep.subr.mxu0 %v579
      %926 = vmatpush1.msra.mxu0 %v578
      %927 = vmatprep.subr.mxu0 %v613
      %928 = vmatpush1.msra.mxu0 %v610
      %929 = vmatprep.subr.mxu0 0.0
      %930 = vmatpush1.msra.mxu0 0.0
      %931 = vmatprep.mubr.f32.mxu0 %v853
      %932 = vmatmul.mubr.f32.gmra.mrb[0].mxu0 %v842
      %v933 = vpop.f32.mrb[0].mxu0
      %v934 = vadd.f32 0.0, %v933
      %v935 = vpop.f32.mrb[0].mxu0
      %v936 = vadd.f32 0.0, %v935
      %937 = vmatprep.mubr.f32.mxu0 %v856
      %938 = vmatmul.mubr.f32.gmra.mrb[0].mxu0 %v844
      %v939 = vpop.f32.mrb[0].mxu0
      %v940 = vadd.f32 0.0, %v939
      %v941 = vpop.f32.mrb[0].mxu0
      %v942 = vadd.f32 0.0, %v941
      %943 = vmatprep.mubr.f32.mxu0 %v859
      %944 = vmatmul.mubr.f32.gmra.mrb[0].mxu0 %v846
      %v945 = vpop.f32.mrb[0].mxu0
      %v946 = vadd.f32 0.0, %v945
      %v947 = vpop.f32.mrb[0].mxu0
      %v948 = vadd.f32 0.0, %v947
      %949 = vmatprep.mubr.f32.mxu0 %v862
      %950 = vmatmul.mubr.f32.gmra.mrb[0].mxu0 %v848
      %v951 = vpop.f32.mrb[0].mxu0
      %v952 = vadd.f32 0.0, %v951
      %v953 = vpop.f32.mrb[0].mxu0
      %v954 = vadd.f32 0.0, %v953
      %955 = vmatprep.mubr.f32.mxu0 %v865
      %956 = vmatmul.mubr.f32.gmra.mrb[0].mxu0 %v850
      %v957 = vpop.f32.mrb[0].mxu0
      %v958 = vadd.f32 0.0, %v957
      %v959 = vpop.f32.mrb[0].mxu0
      %v960 = vadd.f32 0.0, %v959
      %961 = vdwg.mxu0
      %v962 = vmax.f32 %v831, %v934
      %v963 = vmax.f32 %v832, %v936
      %v964 = vmax.f32 %v833, %v940
      %v965 = vmax.f32 %v834, %v942
      %v966 = vmax.f32 %v835, %v946
      %v967 = vmax.f32 %v836, %v948
      %v968 = vmax.f32 %v837, %v952
      %v969 = vmax.f32 %v838, %v954
      %v970 = vmax.f32 %v839, %v958
      %v971 = vmax.f32 %v840, %v960
      %s972 = scalar_lea.vmem %s516, 240
      %v973 = vld [vmem:[%s972] sm:$0xff]
      %v974 = vld [vmem:[%s972 + $0x8] sm:$0xff]
      %v975 = vld [vmem:[%s972 + $0x10] sm:$0xff]
      %v976 = vld [vmem:[%s972 + $0x18] sm:$0xff]
      %v977 = vld [vmem:[%s972 + $0x20] sm:$0xff]
      %v978 = vld [vmem:[%s972 + $0x28] sm:$0xff]
      %v979 = vld [vmem:[%s972 + $0x30] sm:$0xff]
      %v980 = vld [vmem:[%s972 + $0x38] sm:$0xff]
      %v981 = vld [vmem:[%s972 + $0x40] sm:$0xf]
      %v982 = vld [vmem:[%s972 + $0x48] sm:$0xf]
      %v984 = vsel %vm592, %v974, 0
      %v987 = vsel %vm592, %v976, 0
      %v990 = vsel %vm592, %v978, 0
      %v993 = vsel %vm592, %v980, 0
      %v996 = vsel %vm592, %v982, 0
      %998 = vmatprep.subr.mxu0 %v521
      %999 = vmatpush1.msra.mxu0 %v520
      %1000 = vmatprep.subr.mxu0 %v523
      %1001 = vmatpush1.msra.mxu0 %v522
      %1002 = vmatprep.subr.mxu0 %v525
      %1003 = vmatpush1.msra.mxu0 %v524
      %1004 = vmatprep.subr.mxu0 %v527
      %1005 = vmatpush1.msra.mxu0 %v526
      %1006 = vmatprep.subr.mxu0 %v529
      %1007 = vmatpush1.msra.mxu0 %v528
      %1008 = vmatprep.subr.mxu0 %v531
      %1009 = vmatpush1.msra.mxu0 %v530
      %1010 = vmatprep.subr.mxu0 %v533
      %1011 = vmatpush1.msra.mxu0 %v532
      %1012 = vmatprep.subr.mxu0 %v535
      %1013 = vmatpush1.msra.mxu0 %v534
      %1014 = vmatprep.subr.mxu0 %v537
      %1015 = vmatpush1.msra.mxu0 %v536
      %1016 = vmatprep.subr.mxu0 %v539
      %1017 = vmatpush1.msra.mxu0 %v538
      %1018 = vmatprep.subr.mxu0 %v541
      %1019 = vmatpush1.msra.mxu0 %v540
      %1020 = vmatprep.subr.mxu0 %v543
      %1021 = vmatpush1.msra.mxu0 %v542
      %1022 = vmatprep.subr.mxu0 %v545
      %1023 = vmatpush1.msra.mxu0 %v544
      %1024 = vmatprep.subr.mxu0 %v547
      %1025 = vmatpush1.msra.mxu0 %v546
      %1026 = vmatprep.subr.mxu0 %v549
      %1027 = vmatpush1.msra.mxu0 %v548
      %1028 = vmatprep.subr.mxu0 %v551
      %1029 = vmatpush1.msra.mxu0 %v550
      %1030 = vmatprep.subr.mxu0 %v553
      %1031 = vmatpush1.msra.mxu0 %v552
      %1032 = vmatprep.subr.mxu0 %v555
      %1033 = vmatpush1.msra.mxu0 %v554
      %1034 = vmatprep.subr.mxu0 %v557
      %1035 = vmatpush1.msra.mxu0 %v556
      %1036 = vmatprep.subr.mxu0 %v559
      %1037 = vmatpush1.msra.mxu0 %v558
      %1038 = vmatprep.subr.mxu0 %v561
      %1039 = vmatpush1.msra.mxu0 %v560
      %1040 = vmatprep.subr.mxu0 %v563
      %1041 = vmatpush1.msra.mxu0 %v562
      %1042 = vmatprep.subr.mxu0 %v565
      %1043 = vmatpush1.msra.mxu0 %v564
      %1044 = vmatprep.subr.mxu0 %v567
      %1045 = vmatpush1.msra.mxu0 %v566
      %1046 = vmatprep.subr.mxu0 %v569
      %1047 = vmatpush1.msra.mxu0 %v568
      %1048 = vmatprep.subr.mxu0 %v571
      %1049 = vmatpush1.msra.mxu0 %v570
      %1050 = vmatprep.subr.mxu0 %v573
      %1051 = vmatpush1.msra.mxu0 %v572
      %1052 = vmatprep.subr.mxu0 %v575
      %1053 = vmatpush1.msra.mxu0 %v574
      %1054 = vmatprep.subr.mxu0 %v577
      %1055 = vmatpush1.msra.mxu0 %v576
      %1056 = vmatprep.subr.mxu0 %v579
      %1057 = vmatpush1.msra.mxu0 %v578
      %1058 = vmatprep.subr.mxu0 %v613
      %1059 = vmatpush1.msra.mxu0 %v610
      %1060 = vmatprep.subr.mxu0 0.0
      %1061 = vmatpush1.msra.mxu0 0.0
      %1062 = vmatprep.mubr.f32.mxu0 %v984
      %1063 = vmatmul.mubr.f32.gmra.mrb[0].mxu0 %v973
      %v1064 = vpop.f32.mrb[0].mxu0
      %v1065 = vadd.f32 0.0, %v1064
      %v1066 = vpop.f32.mrb[0].mxu0
      %v1067 = vadd.f32 0.0, %v1066
      %1068 = vmatprep.mubr.f32.mxu0 %v987
      %1069 = vmatmul.mubr.f32.gmra.mrb[0].mxu0 %v975
      %v1070 = vpop.f32.mrb[0].mxu0
      %v1071 = vadd.f32 0.0, %v1070
      %v1072 = vpop.f32.mrb[0].mxu0
      %v1073 = vadd.f32 0.0, %v1072
      %1074 = vmatprep.mubr.f32.mxu0 %v990
      %1075 = vmatmul.mubr.f32.gmra.mrb[0].mxu0 %v977
      %v1076 = vpop.f32.mrb[0].mxu0
      %v1077 = vadd.f32 0.0, %v1076
      %v1078 = vpop.f32.mrb[0].mxu0
      %v1079 = vadd.f32 0.0, %v1078
      %1080 = vmatprep.mubr.f32.mxu0 %v993
      %1081 = vmatmul.mubr.f32.gmra.mrb[0].mxu0 %v979
      %v1082 = vpop.f32.mrb[0].mxu0
      %v1083 = vadd.f32 0.0, %v1082
      %v1084 = vpop.f32.mrb[0].mxu0
      %v1085 = vadd.f32 0.0, %v1084
      %1086 = vmatprep.mubr.f32.mxu0 %v996
      %1087 = vmatmul.mubr.f32.gmra.mrb[0].mxu0 %v981
      %v1088 = vpop.f32.mrb[0].mxu0
      %v1089 = vadd.f32 0.0, %v1088
      %v1090 = vpop.f32.mrb[0].mxu0
      %v1091 = vadd.f32 0.0, %v1090
      %1092 = vdwg.mxu0
      %v1093 = vmax.f32 %v962, %v1065
      %v1094 = vmax.f32 %v963, %v1067
      %v1095 = vmax.f32 %v964, %v1071
      %v1096 = vmax.f32 %v965, %v1073
      %v1097 = vmax.f32 %v966, %v1077
      %v1098 = vmax.f32 %v967, %v1079
      %v1099 = vmax.f32 %v968, %v1083
      %v1100 = vmax.f32 %v969, %v1085
      %v1101 = vmax.f32 %v970, %v1089
      %v1102 = vmax.f32 %v971, %v1091
      %v1103 = vld [vmem:[%s2] sm:$0x3]
      %v1105 = vlaneseq
      %v1106 = vshrl.u32 %v1105, 7
      %v1107 = vsub.s32 0, %v1106
      %v1108 = vrot.slane %v1103, %v1107
      %v1109 = vlaneseq
      %v1110 = vshrl.u32 %v1109, 7
      %v1111 = vsub.s32 1, %v1110
      %v1112 = vrot.slane %v1103, %v1111
      %v1115 = vadd.f32 %v1093, %v1108
      %v1116 = vadd.f32 %v1094, %v1112
      %v1117 = vadd.f32 %v1095, %v1108
      %v1118 = vadd.f32 %v1096, %v1112
      %v1119 = vadd.f32 %v1097, %v1108
      %v1120 = vadd.f32 %v1098, %v1112
      %v1121 = vadd.f32 %v1099, %v1108
      %v1122 = vadd.f32 %v1100, %v1112
      %v1123 = vadd.f32 %v1101, %v1108
      %v1124 = vadd.f32 %v1102, %v1112
      %v1125 = vmax.f32 %v1115, 0.0
      %v1126 = vmax.f32 %v1116, 0.0
      %v1127 = vmax.f32 %v1117, 0.0
      %v1128 = vmax.f32 %v1118, 0.0
      %v1129 = vmax.f32 %v1119, 0.0
      %v1130 = vmax.f32 %v1120, 0.0
      %v1131 = vmax.f32 %v1121, 0.0
      %v1132 = vmax.f32 %v1122, 0.0
      %v1133 = vmax.f32 %v1123, 0.0
      %v1134 = vmax.f32 %v1124, 0.0
      %v1135 = vld [vmem:[%s3] sm:$0xff]
      %v1136 = vld [vmem:[%s3 + $0x8] sm:$0xff]
      %v1137 = vld [vmem:[%s3 + $0x10] sm:$0xff]
      %v1138 = vld [vmem:[%s3 + $0x18] sm:$0xff]
      %v1139 = vld [vmem:[%s3 + $0x20] sm:$0xff]
      %v1140 = vld [vmem:[%s3 + $0x28] sm:$0xff]
      %v1141 = vld [vmem:[%s3 + $0x30] sm:$0xff]
      %v1142 = vld [vmem:[%s3 + $0x38] sm:$0xff]
      %v1143 = vld [vmem:[%s3 + $0x40] sm:$0xff]
      %v1144 = vld [vmem:[%s3 + $0x48] sm:$0xff]
      %v1145 = vld [vmem:[%s3 + $0x50] sm:$0xff]
      %v1146 = vld [vmem:[%s3 + $0x58] sm:$0xff]
      %v1147 = vld [vmem:[%s3 + $0x60] sm:$0xff]
      %v1148 = vld [vmem:[%s3 + $0x68] sm:$0xff]
      %v1149 = vld [vmem:[%s3 + $0x70] sm:$0xff]
      %v1150 = vld [vmem:[%s3 + $0x78] sm:$0xff]
      %v1151 = vld [vmem:[%s3 + $0x80] sm:$0xff]
      %v1152 = vld [vmem:[%s3 + $0x88] sm:$0xff]
      %vm1153 = vcmask 130048
      %v1155 = vsel %vm1153, %v1126, 0
      %v1158 = vsel %vm1153, %v1128, 0
      %v1161 = vsel %vm1153, %v1130, 0
      %v1164 = vsel %vm1153, %v1132, 0
      %v1167 = vsel %vm1153, %v1134, 0
      %1169 = vmatprep.subr.mxu0 0.0
      %1170 = vmatpush1.msra.mxu0 %v1135
      %1171 = vmatprep.subr.mxu0 0.0
      %1172 = vmatpush1.msra.mxu0 %v1136
      %1173 = vmatprep.subr.mxu0 0.0
      %1174 = vmatpush1.msra.mxu0 %v1137
      %1175 = vmatprep.subr.mxu0 0.0
      %1176 = vmatpush1.msra.mxu0 %v1138
      %1177 = vmatprep.subr.mxu0 0.0
      %1178 = vmatpush1.msra.mxu0 %v1139
      %1179 = vmatprep.subr.mxu0 0.0
      %1180 = vmatpush1.msra.mxu0 %v1140
      %1181 = vmatprep.subr.mxu0 0.0
      %1182 = vmatpush1.msra.mxu0 %v1141
      %1183 = vmatprep.subr.mxu0 0.0
      %1184 = vmatpush1.msra.mxu0 %v1142
      %1185 = vmatprep.subr.mxu0 0.0
      %1186 = vmatpush1.msra.mxu0 %v1143
      %1187 = vmatprep.subr.mxu0 0.0
      %1188 = vmatpush1.msra.mxu0 %v1144
      %1189 = vmatprep.subr.mxu0 0.0
      %1190 = vmatpush1.msra.mxu0 %v1145
      %1191 = vmatprep.subr.mxu0 0.0
      %1192 = vmatpush1.msra.mxu0 %v1146
      %1193 = vmatprep.subr.mxu0 0.0
      %1194 = vmatpush1.msra.mxu0 %v1147
      %1195 = vmatprep.subr.mxu0 0.0
      %1196 = vmatpush1.msra.mxu0 %v1148
      %1197 = vmatprep.subr.mxu0 0.0
      %1198 = vmatpush1.msra.mxu0 %v1149
      %1199 = vmatprep.subr.mxu0 0.0
      %1200 = vmatpush1.msra.mxu0 %v1150
      %1201 = vmatprep.subr.mxu0 0.0
      %1202 = vmatpush1.msra.mxu0 %v1151
      %1203 = vmatprep.subr.mxu0 0.0
      %1204 = vmatpush1.msra.mxu0 %v1152
      %1205 = vmatprep.subr.mxu0 0.0
      %1206 = vmatpush1.msra.mxu0 0.0
      %1207 = vmatprep.subr.mxu0 0.0
      %1208 = vmatpush1.msra.mxu0 0.0
      %1209 = vmatprep.subr.mxu0 0.0
      %1210 = vmatpush1.msra.mxu0 0.0
      %1211 = vmatprep.subr.mxu0 0.0
      %1212 = vmatpush1.msra.mxu0 0.0
      %1213 = vmatprep.subr.mxu0 0.0
      %1214 = vmatpush1.msra.mxu0 0.0
      %1215 = vmatprep.subr.mxu0 0.0
      %1216 = vmatpush1.msra.mxu0 0.0
      %1217 = vmatprep.subr.mxu0 0.0
      %1218 = vmatpush1.msra.mxu0 0.0
      %1219 = vmatprep.subr.mxu0 0.0
      %1220 = vmatpush1.msra.mxu0 0.0
      %1221 = vmatprep.subr.mxu0 0.0
      %1222 = vmatpush1.msra.mxu0 0.0
      %1223 = vmatprep.subr.mxu0 0.0
      %1224 = vmatpush1.msra.mxu0 0.0
      %1225 = vmatprep.subr.mxu0 0.0
      %1226 = vmatpush1.msra.mxu0 0.0
      %1227 = vmatprep.subr.mxu0 0.0
      %1228 = vmatpush1.msra.mxu0 0.0
      %1229 = vmatprep.subr.mxu0 0.0
      %1230 = vmatpush1.msra.mxu0 0.0
      %1231 = vmatprep.subr.mxu0 0.0
      %1232 = vmatpush1.msra.mxu0 0.0
      %1233 = vmatprep.mubr.f32.mxu0 %v1155
      %1234 = vmatmul.mubr.f32.gmra.mrb[0].mxu0 %v1125
      %v1235 = vpop.f32.mrb[0].mxu0
      %v1236 = vadd.f32 0.0, %v1235
      %v1237 = vpop.f32.mrb[0].mxu0
      %1238 = vmatprep.mubr.f32.mxu0 %v1158
      %1239 = vmatmul.mubr.f32.gmra.mrb[0].mxu0 %v1127
      %v1240 = vpop.f32.mrb[0].mxu0
      %v1241 = vadd.f32 0.0, %v1240
      %v1242 = vpop.f32.mrb[0].mxu0
      %1243 = vmatprep.mubr.f32.mxu0 %v1161
      %1244 = vmatmul.mubr.f32.gmra.mrb[0].mxu0 %v1129
      %v1245 = vpop.f32.mrb[0].mxu0
      %v1246 = vadd.f32 0.0, %v1245
      %v1247 = vpop.f32.mrb[0].mxu0
      %1248 = vmatprep.mubr.f32.mxu0 %v1164
      %1249 = vmatmul.mubr.f32.gmra.mrb[0].mxu0 %v1131
      %v1250 = vpop.f32.mrb[0].mxu0
      %v1251 = vadd.f32 0.0, %v1250
      %v1252 = vpop.f32.mrb[0].mxu0
      %1253 = vmatprep.mubr.f32.mxu0 %v1167
      %1254 = vmatmul.mubr.f32.gmra.mrb[0].mxu0 %v1133
      %v1255 = vpop.f32.mrb[0].mxu0
      %v1256 = vadd.f32 0.0, %v1255
      %v1257 = vpop.f32.mrb[0].mxu0
      %1258 = vdwg.mxu0
      %v1259 = vld [vmem:[%s5] sm:$0xff]
      %v1260 = vld [vmem:[%s5 + $0x8] sm:$0x1]
      %vm1261 = vcmask 293888
      %v1263 = vsel %vm1261, %v1259, 0
      %v1266 = vsel %vm1261, %v1260, 0
      %vm1268 = vcmask 1043456
      %v1270 = vsel %vm1268, %v1256, 0
      %1272 = vmatprep.subr.mxu0 0.0
      %1273 = vmatpush1.msra.mxu0 %v1236
      %1274 = vmatprep.subr.mxu0 0.0
      %1275 = vmatpush1.msra.mxu0 %v1241
      %1276 = vmatprep.subr.mxu0 0.0
      %1277 = vmatpush1.msra.mxu0 %v1246
      %1278 = vmatprep.subr.mxu0 0.0
      %1279 = vmatpush1.msra.mxu0 %v1251
      %1280 = vmatprep.subr.mxu0 0.0
      %1281 = vmatpush1.msra.mxu0 %v1270
      %1282 = vmatprep.subr.mxu0 0.0
      %1283 = vmatpush1.msra.mxu0 0.0
      %1284 = vmatprep.subr.mxu0 0.0
      %1285 = vmatpush1.msra.mxu0 0.0
      %1286 = vmatprep.subr.mxu0 0.0
      %1287 = vmatpush1.msra.mxu0 0.0
      %1288 = vmatprep.subr.mxu0 0.0
      %1289 = vmatpush1.msra.mxu0 0.0
      %1290 = vmatprep.subr.mxu0 0.0
      %1291 = vmatpush1.msra.mxu0 0.0
      %1292 = vmatprep.subr.mxu0 0.0
      %1293 = vmatpush1.msra.mxu0 0.0
      %1294 = vmatprep.subr.mxu0 0.0
      %1295 = vmatpush1.msra.mxu0 0.0
      %1296 = vmatprep.subr.mxu0 0.0
      %1297 = vmatpush1.msra.mxu0 0.0
      %1298 = vmatprep.subr.mxu0 0.0
      %1299 = vmatpush1.msra.mxu0 0.0
      %1300 = vmatprep.subr.mxu0 0.0
      %1301 = vmatpush1.msra.mxu0 0.0
      %1302 = vmatprep.subr.mxu0 0.0
      %1303 = vmatpush1.msra.mxu0 0.0
      %1304 = vmatprep.subr.mxu0 0.0
      %1305 = vmatpush1.msra.mxu0 0.0
      %1306 = vmatprep.subr.mxu0 0.0
      %1307 = vmatpush1.msra.mxu0 0.0
      %1308 = vmatprep.subr.mxu0 0.0
      %1309 = vmatpush1.msra.mxu0 0.0
      %1310 = vmatprep.subr.mxu0 0.0
      %1311 = vmatpush1.msra.mxu0 0.0
      %1312 = vmatprep.subr.mxu0 0.0
      %1313 = vmatpush1.msra.mxu0 0.0
      %1314 = vmatprep.subr.mxu0 0.0
      %1315 = vmatpush1.msra.mxu0 0.0
      %1316 = vmatprep.subr.mxu0 0.0
      %1317 = vmatpush1.msra.mxu0 0.0
      %1318 = vmatprep.subr.mxu0 0.0
      %1319 = vmatpush1.msra.mxu0 0.0
      %1320 = vmatprep.subr.mxu0 0.0
      %1321 = vmatpush1.msra.mxu0 0.0
      %1322 = vmatprep.subr.mxu0 0.0
      %1323 = vmatpush1.msra.mxu0 0.0
      %1324 = vmatprep.subr.mxu0 0.0
      %1325 = vmatpush1.msra.mxu0 0.0
      %1326 = vmatprep.subr.mxu0 0.0
      %1327 = vmatpush1.msra.mxu0 0.0
      %1328 = vmatprep.subr.mxu0 0.0
      %1329 = vmatpush1.msra.mxu0 0.0
      %1330 = vmatprep.subr.mxu0 0.0
      %1331 = vmatpush1.msra.mxu0 0.0
      %1332 = vmatprep.subr.mxu0 0.0
      %1333 = vmatpush1.msra.mxu0 0.0
      %1334 = vmatprep.subr.mxu0 0.0
      %1335 = vmatpush1.msra.mxu0 0.0
      %1336 = vmatprep.mubr.f32.mxu0 0.0
      %1337 = vmatmul.mubr.f32.gmra.mrb[0].mxu0 %v1263
      %v1338 = vpop.f32.mrb[0].mxu0
      %v1339 = vadd.f32 0.0, %v1338
      %v1340 = vpop.f32.mrb[0].mxu0
      %1341 = vmatprep.mubr.f32.mxu0 0.0
      %1342 = vmatmul.mubr.f32.gmra.mrb[0].mxu0 %v1266
      %v1343 = vpop.f32.mrb[0].mxu0
      %v1344 = vadd.f32 0.0, %v1343
      %v1345 = vpop.f32.mrb[0].mxu0
      %1346 = vdwg.mxu0
      %s1347 = scalar_lea.vmem %s5, 16
      %v1348 = vld [vmem:[%s1347] sm:$0xff]
      %v1349 = vld [vmem:[%s1347 + $0x8] sm:$0x1]
      %v1351 = vsel %vm1261, %v1348, 0
      %v1354 = vsel %vm1261, %v1349, 0
      %1356 = vmatprep.subr.mxu0 0.0
      %1357 = vmatpush1.msra.mxu0 %v1236
      %1358 = vmatprep.subr.mxu0 0.0
      %1359 = vmatpush1.msra.mxu0 %v1241
      %1360 = vmatprep.subr.mxu0 0.0
      %1361 = vmatpush1.msra.mxu0 %v1246
      %1362 = vmatprep.subr.mxu0 0.0
      %1363 = vmatpush1.msra.mxu0 %v1251
      %1364 = vmatprep.subr.mxu0 0.0
      %1365 = vmatpush1.msra.mxu0 %v1270
      %1366 = vmatprep.subr.mxu0 0.0
      %1367 = vmatpush1.msra.mxu0 0.0
      %1368 = vmatprep.subr.mxu0 0.0
      %1369 = vmatpush1.msra.mxu0 0.0
      %1370 = vmatprep.subr.mxu0 0.0
      %1371 = vmatpush1.msra.mxu0 0.0
      %1372 = vmatprep.subr.mxu0 0.0
      %1373 = vmatpush1.msra.mxu0 0.0
      %1374 = vmatprep.subr.mxu0 0.0
      %1375 = vmatpush1.msra.mxu0 0.0
      %1376 = vmatprep.subr.mxu0 0.0
      %1377 = vmatpush1.msra.mxu0 0.0
      %1378 = vmatprep.subr.mxu0 0.0
      %1379 = vmatpush1.msra.mxu0 0.0
      %1380 = vmatprep.subr.mxu0 0.0
      %1381 = vmatpush1.msra.mxu0 0.0
      %1382 = vmatprep.subr.mxu0 0.0
      %1383 = vmatpush1.msra.mxu0 0.0
      %1384 = vmatprep.subr.mxu0 0.0
      %1385 = vmatpush1.msra.mxu0 0.0
      %1386 = vmatprep.subr.mxu0 0.0
      %1387 = vmatpush1.msra.mxu0 0.0
      %1388 = vmatprep.subr.mxu0 0.0
      %1389 = vmatpush1.msra.mxu0 0.0
      %1390 = vmatprep.subr.mxu0 0.0
      %1391 = vmatpush1.msra.mxu0 0.0
      %1392 = vmatprep.subr.mxu0 0.0
      %1393 = vmatpush1.msra.mxu0 0.0
      %1394 = vmatprep.subr.mxu0 0.0
      %1395 = vmatpush1.msra.mxu0 0.0
      %1396 = vmatprep.subr.mxu0 0.0
      %1397 = vmatpush1.msra.mxu0 0.0
      %1398 = vmatprep.subr.mxu0 0.0
      %1399 = vmatpush1.msra.mxu0 0.0
      %1400 = vmatprep.subr.mxu0 0.0
      %1401 = vmatpush1.msra.mxu0 0.0
      %1402 = vmatprep.subr.mxu0 0.0
      %1403 = vmatpush1.msra.mxu0 0.0
      %1404 = vmatprep.subr.mxu0 0.0
      %1405 = vmatpush1.msra.mxu0 0.0
      %1406 = vmatprep.subr.mxu0 0.0
      %1407 = vmatpush1.msra.mxu0 0.0
      %1408 = vmatprep.subr.mxu0 0.0
      %1409 = vmatpush1.msra.mxu0 0.0
      %1410 = vmatprep.subr.mxu0 0.0
      %1411 = vmatpush1.msra.mxu0 0.0
      %1412 = vmatprep.subr.mxu0 0.0
      %1413 = vmatpush1.msra.mxu0 0.0
      %1414 = vmatprep.subr.mxu0 0.0
      %1415 = vmatpush1.msra.mxu0 0.0
      %1416 = vmatprep.subr.mxu0 0.0
      %1417 = vmatpush1.msra.mxu0 0.0
      %1418 = vmatprep.subr.mxu0 0.0
      %1419 = vmatpush1.msra.mxu0 0.0
      %1420 = vmatprep.mubr.f32.mxu0 0.0
      %1421 = vmatmul.mubr.f32.gmra.mrb[0].mxu0 %v1351
      %v1422 = vpop.f32.mrb[0].mxu0
      %v1423 = vadd.f32 0.0, %v1422
      %v1424 = vpop.f32.mrb[0].mxu0
      %1425 = vmatprep.mubr.f32.mxu0 0.0
      %1426 = vmatmul.mubr.f32.gmra.mrb[0].mxu0 %v1354
      %v1427 = vpop.f32.mrb[0].mxu0
      %v1428 = vadd.f32 0.0, %v1427
      %v1429 = vpop.f32.mrb[0].mxu0
      %1430 = vdwg.mxu0
      %v1431 = vmax.f32 %v1339, %v1423
      %v1432 = vmax.f32 %v1344, %v1428
      %s1433 = scalar_lea.vmem %s5, 32
      %v1434 = vld [vmem:[%s1433] sm:$0xff]
      %v1435 = vld [vmem:[%s1433 + $0x8] sm:$0x1]
      %v1437 = vsel %vm1261, %v1434, 0
      %v1440 = vsel %vm1261, %v1435, 0
      %1442 = vmatprep.subr.mxu0 0.0
      %1443 = vmatpush1.msra.mxu0 %v1236
      %1444 = vmatprep.subr.mxu0 0.0
      %1445 = vmatpush1.msra.mxu0 %v1241
      %1446 = vmatprep.subr.mxu0 0.0
      %1447 = vmatpush1.msra.mxu0 %v1246
      %1448 = vmatprep.subr.mxu0 0.0
      %1449 = vmatpush1.msra.mxu0 %v1251
      %1450 = vmatprep.subr.mxu0 0.0
      %1451 = vmatpush1.msra.mxu0 %v1270
      %1452 = vmatprep.subr.mxu0 0.0
      %1453 = vmatpush1.msra.mxu0 0.0
      %1454 = vmatprep.subr.mxu0 0.0
      %1455 = vmatpush1.msra.mxu0 0.0
      %1456 = vmatprep.subr.mxu0 0.0
      %1457 = vmatpush1.msra.mxu0 0.0
      %1458 = vmatprep.subr.mxu0 0.0
      %1459 = vmatpush1.msra.mxu0 0.0
      %1460 = vmatprep.subr.mxu0 0.0
      %1461 = vmatpush1.msra.mxu0 0.0
      %1462 = vmatprep.subr.mxu0 0.0
      %1463 = vmatpush1.msra.mxu0 0.0
      %1464 = vmatprep.subr.mxu0 0.0
      %1465 = vmatpush1.msra.mxu0 0.0
      %1466 = vmatprep.subr.mxu0 0.0
      %1467 = vmatpush1.msra.mxu0 0.0
      %1468 = vmatprep.subr.mxu0 0.0
      %1469 = vmatpush1.msra.mxu0 0.0
      %1470 = vmatprep.subr.mxu0 0.0
      %1471 = vmatpush1.msra.mxu0 0.0
      %1472 = vmatprep.subr.mxu0 0.0
      %1473 = vmatpush1.msra.mxu0 0.0
      %1474 = vmatprep.subr.mxu0 0.0
      %1475 = vmatpush1.msra.mxu0 0.0
      %1476 = vmatprep.subr.mxu0 0.0
      %1477 = vmatpush1.msra.mxu0 0.0
      %1478 = vmatprep.subr.mxu0 0.0
      %1479 = vmatpush1.msra.mxu0 0.0
      %1480 = vmatprep.subr.mxu0 0.0
      %1481 = vmatpush1.msra.mxu0 0.0
      %1482 = vmatprep.subr.mxu0 0.0
      %1483 = vmatpush1.msra.mxu0 0.0
      %1484 = vmatprep.subr.mxu0 0.0
      %1485 = vmatpush1.msra.mxu0 0.0
      %1486 = vmatprep.subr.mxu0 0.0
      %1487 = vmatpush1.msra.mxu0 0.0
      %1488 = vmatprep.subr.mxu0 0.0
      %1489 = vmatpush1.msra.mxu0 0.0
      %1490 = vmatprep.subr.mxu0 0.0
      %1491 = vmatpush1.msra.mxu0 0.0
      %1492 = vmatprep.subr.mxu0 0.0
      %1493 = vmatpush1.msra.mxu0 0.0
      %1494 = vmatprep.subr.mxu0 0.0
      %1495 = vmatpush1.msra.mxu0 0.0
      %1496 = vmatprep.subr.mxu0 0.0
      %1497 = vmatpush1.msra.mxu0 0.0
      %1498 = vmatprep.subr.mxu0 0.0
      %1499 = vmatpush1.msra.mxu0 0.0
      %1500 = vmatprep.subr.mxu0 0.0
      %1501 = vmatpush1.msra.mxu0 0.0
      %1502 = vmatprep.subr.mxu0 0.0
      %1503 = vmatpush1.msra.mxu0 0.0
      %1504 = vmatprep.subr.mxu0 0.0
      %1505 = vmatpush1.msra.mxu0 0.0
      %1506 = vmatprep.mubr.f32.mxu0 0.0
      %1507 = vmatmul.mubr.f32.gmra.mrb[0].mxu0 %v1437
      %v1508 = vpop.f32.mrb[0].mxu0
      %v1509 = vadd.f32 0.0, %v1508
      %v1510 = vpop.f32.mrb[0].mxu0
      %1511 = vmatprep.mubr.f32.mxu0 0.0
      %1512 = vmatmul.mubr.f32.gmra.mrb[0].mxu0 %v1440
      %v1513 = vpop.f32.mrb[0].mxu0
      %v1514 = vadd.f32 0.0, %v1513
      %v1515 = vpop.f32.mrb[0].mxu0
      %1516 = vdwg.mxu0
      %v1517 = vmax.f32 %v1431, %v1509
      %v1518 = vmax.f32 %v1432, %v1514
      %s1519 = scalar_lea.vmem %s5, 48
      %v1520 = vld [vmem:[%s1519] sm:$0xff]
      %v1521 = vld [vmem:[%s1519 + $0x8] sm:$0x1]
      %v1523 = vsel %vm1261, %v1520, 0
      %v1526 = vsel %vm1261, %v1521, 0
      %1528 = vmatprep.subr.mxu0 0.0
      %1529 = vmatpush1.msra.mxu0 %v1236
      %1530 = vmatprep.subr.mxu0 0.0
      %1531 = vmatpush1.msra.mxu0 %v1241
      %1532 = vmatprep.subr.mxu0 0.0
      %1533 = vmatpush1.msra.mxu0 %v1246
      %1534 = vmatprep.subr.mxu0 0.0
      %1535 = vmatpush1.msra.mxu0 %v1251
      %1536 = vmatprep.subr.mxu0 0.0
      %1537 = vmatpush1.msra.mxu0 %v1270
      %1538 = vmatprep.subr.mxu0 0.0
      %1539 = vmatpush1.msra.mxu0 0.0
      %1540 = vmatprep.subr.mxu0 0.0
      %1541 = vmatpush1.msra.mxu0 0.0
      %1542 = vmatprep.subr.mxu0 0.0
      %1543 = vmatpush1.msra.mxu0 0.0
      %1544 = vmatprep.subr.mxu0 0.0
      %1545 = vmatpush1.msra.mxu0 0.0
      %1546 = vmatprep.subr.mxu0 0.0
      %1547 = vmatpush1.msra.mxu0 0.0
      %1548 = vmatprep.subr.mxu0 0.0
      %1549 = vmatpush1.msra.mxu0 0.0
      %1550 = vmatprep.subr.mxu0 0.0
      %1551 = vmatpush1.msra.mxu0 0.0
      %1552 = vmatprep.subr.mxu0 0.0
      %1553 = vmatpush1.msra.mxu0 0.0
      %1554 = vmatprep.subr.mxu0 0.0
      %1555 = vmatpush1.msra.mxu0 0.0
      %1556 = vmatprep.subr.mxu0 0.0
      %1557 = vmatpush1.msra.mxu0 0.0
      %1558 = vmatprep.subr.mxu0 0.0
      %1559 = vmatpush1.msra.mxu0 0.0
      %1560 = vmatprep.subr.mxu0 0.0
      %1561 = vmatpush1.msra.mxu0 0.0
      %1562 = vmatprep.subr.mxu0 0.0
      %1563 = vmatpush1.msra.mxu0 0.0
      %1564 = vmatprep.subr.mxu0 0.0
      %1565 = vmatpush1.msra.mxu0 0.0
      %1566 = vmatprep.subr.mxu0 0.0
      %1567 = vmatpush1.msra.mxu0 0.0
      %1568 = vmatprep.subr.mxu0 0.0
      %1569 = vmatpush1.msra.mxu0 0.0
      %1570 = vmatprep.subr.mxu0 0.0
      %1571 = vmatpush1.msra.mxu0 0.0
      %1572 = vmatprep.subr.mxu0 0.0
      %1573 = vmatpush1.msra.mxu0 0.0
      %1574 = vmatprep.subr.mxu0 0.0
      %1575 = vmatpush1.msra.mxu0 0.0
      %1576 = vmatprep.subr.mxu0 0.0
      %1577 = vmatpush1.msra.mxu0 0.0
      %1578 = vmatprep.subr.mxu0 0.0
      %1579 = vmatpush1.msra.mxu0 0.0
      %1580 = vmatprep.subr.mxu0 0.0
      %1581 = vmatpush1.msra.mxu0 0.0
      %1582 = vmatprep.subr.mxu0 0.0
      %1583 = vmatpush1.msra.mxu0 0.0
      %1584 = vmatprep.subr.mxu0 0.0
      %1585 = vmatpush1.msra.mxu0 0.0
      %1586 = vmatprep.subr.mxu0 0.0
      %1587 = vmatpush1.msra.mxu0 0.0
      %1588 = vmatprep.subr.mxu0 0.0
      %1589 = vmatpush1.msra.mxu0 0.0
      %1590 = vmatprep.subr.mxu0 0.0
      %1591 = vmatpush1.msra.mxu0 0.0
      %1592 = vmatprep.mubr.f32.mxu0 0.0
      %1593 = vmatmul.mubr.f32.gmra.mrb[0].mxu0 %v1523
      %v1594 = vpop.f32.mrb[0].mxu0
      %v1595 = vadd.f32 0.0, %v1594
      %v1596 = vpop.f32.mrb[0].mxu0
      %1597 = vmatprep.mubr.f32.mxu0 0.0
      %1598 = vmatmul.mubr.f32.gmra.mrb[0].mxu0 %v1526
      %v1599 = vpop.f32.mrb[0].mxu0
      %v1600 = vadd.f32 0.0, %v1599
      %v1601 = vpop.f32.mrb[0].mxu0
      %1602 = vdwg.mxu0
      %v1603 = vmax.f32 %v1517, %v1595
      %v1604 = vmax.f32 %v1518, %v1600
      %v1605 = vld [vmem:[%s4] sm:$0x1]
      %v1607 = vlaneseq
      %v1608 = vshrl.u32 %v1607, 7
      %v1609 = vsub.s32 0, %v1608
      %v1610 = vrot.slane %v1605, %v1609
      %v1612 = vadd.f32 %v1603, %v1610
      %v1613 = vadd.f32 %v1604, %v1610
      %v1614 = vmax.f32 %v1612, 0.0
      %v1615 = vmax.f32 %v1613, 0.0
      %v1616 = vld [vmem:[%s7] sm:$0x1]
      %v1617 = vld [vmem:[%s6] sm:$0xff]
      %v1618 = vld [vmem:[%s6 + $0x8] sm:$0xff]
      %v1619 = vld [vmem:[%s6 + $0x10] sm:$0xff]
      %v1620 = vld [vmem:[%s6 + $0x18] sm:$0xff]
      %vm1621 = vcmask 261120
      %v1623 = vsel %vm1621, %v1614, 0
      %1625 = vmatprep.subr.mxu0 0.0
      %1626 = vmatpush1.msra.mxu0 %v1617
      %1627 = vmatprep.subr.mxu0 0.0
      %1628 = vmatpush1.msra.mxu0 %v1618
      %1629 = vmatprep.subr.mxu0 0.0
      %1630 = vmatpush1.msra.mxu0 %v1619
      %1631 = vmatprep.subr.mxu0 0.0
      %1632 = vmatpush1.msra.mxu0 %v1620
      %1633 = vmatprep.subr.mxu0 0.0
      %1634 = vmatpush1.msra.mxu0 0.0
      %1635 = vmatprep.subr.mxu0 0.0
      %1636 = vmatpush1.msra.mxu0 0.0
      %1637 = vmatprep.subr.mxu0 0.0
      %1638 = vmatpush1.msra.mxu0 0.0
      %1639 = vmatprep.subr.mxu0 0.0
      %1640 = vmatpush1.msra.mxu0 0.0
      %1641 = vmatprep.subr.mxu0 0.0
      %1642 = vmatpush1.msra.mxu0 0.0
      %1643 = vmatprep.subr.mxu0 0.0
      %1644 = vmatpush1.msra.mxu0 0.0
      %1645 = vmatprep.subr.mxu0 0.0
      %1646 = vmatpush1.msra.mxu0 0.0
      %1647 = vmatprep.subr.mxu0 0.0
      %1648 = vmatpush1.msra.mxu0 0.0
      %1649 = vmatprep.subr.mxu0 0.0
      %1650 = vmatpush1.msra.mxu0 0.0
      %1651 = vmatprep.subr.mxu0 0.0
      %1652 = vmatpush1.msra.mxu0 0.0
      %1653 = vmatprep.subr.mxu0 0.0
      %1654 = vmatpush1.msra.mxu0 0.0
      %1655 = vmatprep.subr.mxu0 0.0
      %1656 = vmatpush1.msra.mxu0 0.0
      %1657 = vmatprep.subr.mxu0 0.0
      %1658 = vmatpush1.msra.mxu0 0.0
      %1659 = vmatprep.subr.mxu0 0.0
      %1660 = vmatpush1.msra.mxu0 0.0
      %1661 = vmatprep.subr.mxu0 0.0
      %1662 = vmatpush1.msra.mxu0 0.0
      %1663 = vmatprep.subr.mxu0 0.0
      %1664 = vmatpush1.msra.mxu0 0.0
      %1665 = vmatprep.subr.mxu0 0.0
      %1666 = vmatpush1.msra.mxu0 0.0
      %1667 = vmatprep.subr.mxu0 0.0
      %1668 = vmatpush1.msra.mxu0 0.0
      %1669 = vmatprep.subr.mxu0 0.0
      %1670 = vmatpush1.msra.mxu0 0.0
      %1671 = vmatprep.subr.mxu0 0.0
      %1672 = vmatpush1.msra.mxu0 0.0
      %1673 = vmatprep.subr.mxu0 0.0
      %1674 = vmatpush1.msra.mxu0 0.0
      %1675 = vmatprep.subr.mxu0 0.0
      %1676 = vmatpush1.msra.mxu0 0.0
      %1677 = vmatprep.subr.mxu0 0.0
      %1678 = vmatpush1.msra.mxu0 0.0
      %1679 = vmatprep.subr.mxu0 0.0
      %1680 = vmatpush1.msra.mxu0 0.0
      %1681 = vmatprep.subr.mxu0 0.0
      %1682 = vmatpush1.msra.mxu0 0.0
      %1683 = vmatprep.subr.mxu0 0.0
      %1684 = vmatpush1.msra.mxu0 0.0
      %1685 = vmatprep.subr.mxu0 0.0
      %1686 = vmatpush1.msra.mxu0 0.0
      %1687 = vmatprep.subr.mxu0 0.0
      %1688 = vmatpush1.msra.mxu0 0.0
      %1689 = vmatprep.mubr.f32.mxu0 0.0
      %1690 = vmatmul.mubr.f32.gmra.mrb[0].mxu0 %v1623
      %v1691 = vpop.f32.mrb[0].mxu0
      %v1692 = vadd.f32 0.0, %v1691
      %v1693 = vpop.f32.mrb[0].mxu0
      %1694 = vdwg.mxu0
      %v1695 = vadd.f32 %v1616, %v1692
      %s1696 = scalar_lea.vmem %s6, 32
      %v1697 = vld [vmem:[%s1696] sm:$0xff]
      %v1698 = vld [vmem:[%s1696 + $0x8] sm:$0xff]
      %v1699 = vld [vmem:[%s1696 + $0x10] sm:$0xff]
      %v1700 = vld [vmem:[%s1696 + $0x18] sm:$0xff]
      %v1701 = vrot.slane %v1614, 1
      %v1702 = vsel %vm1621, %v1701, 0
      %1704 = vmatprep.subr.mxu0 0.0
      %1705 = vmatpush1.msra.mxu0 %v1697
      %1706 = vmatprep.subr.mxu0 0.0
      %1707 = vmatpush1.msra.mxu0 %v1698
      %1708 = vmatprep.subr.mxu0 0.0
      %1709 = vmatpush1.msra.mxu0 %v1699
      %1710 = vmatprep.subr.mxu0 0.0
      %1711 = vmatpush1.msra.mxu0 %v1700
      %1712 = vmatprep.subr.mxu0 0.0
      %1713 = vmatpush1.msra.mxu0 0.0
      %1714 = vmatprep.subr.mxu0 0.0
      %1715 = vmatpush1.msra.mxu0 0.0
      %1716 = vmatprep.subr.mxu0 0.0
      %1717 = vmatpush1.msra.mxu0 0.0
      %1718 = vmatprep.subr.mxu0 0.0
      %1719 = vmatpush1.msra.mxu0 0.0
      %1720 = vmatprep.subr.mxu0 0.0
      %1721 = vmatpush1.msra.mxu0 0.0
      %1722 = vmatprep.subr.mxu0 0.0
      %1723 = vmatpush1.msra.mxu0 0.0
      %1724 = vmatprep.subr.mxu0 0.0
      %1725 = vmatpush1.msra.mxu0 0.0
      %1726 = vmatprep.subr.mxu0 0.0
      %1727 = vmatpush1.msra.mxu0 0.0
      %1728 = vmatprep.subr.mxu0 0.0
      %1729 = vmatpush1.msra.mxu0 0.0
      %1730 = vmatprep.subr.mxu0 0.0
      %1731 = vmatpush1.msra.mxu0 0.0
      %1732 = vmatprep.subr.mxu0 0.0
      %1733 = vmatpush1.msra.mxu0 0.0
      %1734 = vmatprep.subr.mxu0 0.0
      %1735 = vmatpush1.msra.mxu0 0.0
      %1736 = vmatprep.subr.mxu0 0.0
      %1737 = vmatpush1.msra.mxu0 0.0
      %1738 = vmatprep.subr.mxu0 0.0
      %1739 = vmatpush1.msra.mxu0 0.0
      %1740 = vmatprep.subr.mxu0 0.0
      %1741 = vmatpush1.msra.mxu0 0.0
      %1742 = vmatprep.subr.mxu0 0.0
      %1743 = vmatpush1.msra.mxu0 0.0
      %1744 = vmatprep.subr.mxu0 0.0
      %1745 = vmatpush1.msra.mxu0 0.0
      %1746 = vmatprep.subr.mxu0 0.0
      %1747 = vmatpush1.msra.mxu0 0.0
      %1748 = vmatprep.subr.mxu0 0.0
      %1749 = vmatpush1.msra.mxu0 0.0
      %1750 = vmatprep.subr.mxu0 0.0
      %1751 = vmatpush1.msra.mxu0 0.0
      %1752 = vmatprep.subr.mxu0 0.0
      %1753 = vmatpush1.msra.mxu0 0.0
      %1754 = vmatprep.subr.mxu0 0.0
      %1755 = vmatpush1.msra.mxu0 0.0
      %1756 = vmatprep.subr.mxu0 0.0
      %1757 = vmatpush1.msra.mxu0 0.0
      %1758 = vmatprep.subr.mxu0 0.0
      %1759 = vmatpush1.msra.mxu0 0.0
      %1760 = vmatprep.subr.mxu0 0.0
      %1761 = vmatpush1.msra.mxu0 0.0
      %1762 = vmatprep.subr.mxu0 0.0
      %1763 = vmatpush1.msra.mxu0 0.0
      %1764 = vmatprep.subr.mxu0 0.0
      %1765 = vmatpush1.msra.mxu0 0.0
      %1766 = vmatprep.subr.mxu0 0.0
      %1767 = vmatpush1.msra.mxu0 0.0
      %1768 = vmatprep.mubr.f32.mxu0 0.0
      %1769 = vmatmul.mubr.f32.gmra.mrb[0].mxu0 %v1702
      %v1770 = vpop.f32.mrb[0].mxu0
      %v1771 = vadd.f32 0.0, %v1770
      %v1772 = vpop.f32.mrb[0].mxu0
      %1773 = vdwg.mxu0
      %v1774 = vadd.f32 %v1695, %v1771
      %s1775 = scalar_lea.vmem %s6, 64
      %v1776 = vld [vmem:[%s1775] sm:$0xff]
      %v1777 = vld [vmem:[%s1775 + $0x8] sm:$0xff]
      %v1778 = vld [vmem:[%s1775 + $0x10] sm:$0xff]
      %v1779 = vld [vmem:[%s1775 + $0x18] sm:$0xff]
      %v1780 = vrot.slane %v1614, 2
      %v1781 = vsel %vm1621, %v1780, 0
      %1783 = vmatprep.subr.mxu0 0.0
      %1784 = vmatpush1.msra.mxu0 %v1776
      %1785 = vmatprep.subr.mxu0 0.0
      %1786 = vmatpush1.msra.mxu0 %v1777
      %1787 = vmatprep.subr.mxu0 0.0
      %1788 = vmatpush1.msra.mxu0 %v1778
      %1789 = vmatprep.subr.mxu0 0.0
      %1790 = vmatpush1.msra.mxu0 %v1779
      %1791 = vmatprep.subr.mxu0 0.0
      %1792 = vmatpush1.msra.mxu0 0.0
      %1793 = vmatprep.subr.mxu0 0.0
      %1794 = vmatpush1.msra.mxu0 0.0
      %1795 = vmatprep.subr.mxu0 0.0
      %1796 = vmatpush1.msra.mxu0 0.0
      %1797 = vmatprep.subr.mxu0 0.0
      %1798 = vmatpush1.msra.mxu0 0.0
      %1799 = vmatprep.subr.mxu0 0.0
      %1800 = vmatpush1.msra.mxu0 0.0
      %1801 = vmatprep.subr.mxu0 0.0
      %1802 = vmatpush1.msra.mxu0 0.0
      %1803 = vmatprep.subr.mxu0 0.0
      %1804 = vmatpush1.msra.mxu0 0.0
      %1805 = vmatprep.subr.mxu0 0.0
      %1806 = vmatpush1.msra.mxu0 0.0
      %1807 = vmatprep.subr.mxu0 0.0
      %1808 = vmatpush1.msra.mxu0 0.0
      %1809 = vmatprep.subr.mxu0 0.0
      %1810 = vmatpush1.msra.mxu0 0.0
      %1811 = vmatprep.subr.mxu0 0.0
      %1812 = vmatpush1.msra.mxu0 0.0
      %1813 = vmatprep.subr.mxu0 0.0
      %1814 = vmatpush1.msra.mxu0 0.0
      %1815 = vmatprep.subr.mxu0 0.0
      %1816 = vmatpush1.msra.mxu0 0.0
      %1817 = vmatprep.subr.mxu0 0.0
      %1818 = vmatpush1.msra.mxu0 0.0
      %1819 = vmatprep.subr.mxu0 0.0
      %1820 = vmatpush1.msra.mxu0 0.0
      %1821 = vmatprep.subr.mxu0 0.0
      %1822 = vmatpush1.msra.mxu0 0.0
      %1823 = vmatprep.subr.mxu0 0.0
      %1824 = vmatpush1.msra.mxu0 0.0
      %1825 = vmatprep.subr.mxu0 0.0
      %1826 = vmatpush1.msra.mxu0 0.0
      %1827 = vmatprep.subr.mxu0 0.0
      %1828 = vmatpush1.msra.mxu0 0.0
      %1829 = vmatprep.subr.mxu0 0.0
      %1830 = vmatpush1.msra.mxu0 0.0
      %1831 = vmatprep.subr.mxu0 0.0
      %1832 = vmatpush1.msra.mxu0 0.0
      %1833 = vmatprep.subr.mxu0 0.0
      %1834 = vmatpush1.msra.mxu0 0.0
      %1835 = vmatprep.subr.mxu0 0.0
      %1836 = vmatpush1.msra.mxu0 0.0
      %1837 = vmatprep.subr.mxu0 0.0
      %1838 = vmatpush1.msra.mxu0 0.0
      %1839 = vmatprep.subr.mxu0 0.0
      %1840 = vmatpush1.msra.mxu0 0.0
      %1841 = vmatprep.subr.mxu0 0.0
      %1842 = vmatpush1.msra.mxu0 0.0
      %1843 = vmatprep.subr.mxu0 0.0
      %1844 = vmatpush1.msra.mxu0 0.0
      %1845 = vmatprep.subr.mxu0 0.0
      %1846 = vmatpush1.msra.mxu0 0.0
      %1847 = vmatprep.mubr.f32.mxu0 0.0
      %1848 = vmatmul.mubr.f32.gmra.mrb[0].mxu0 %v1781
      %v1849 = vpop.f32.mrb[0].mxu0
      %v1850 = vadd.f32 0.0, %v1849
      %v1851 = vpop.f32.mrb[0].mxu0
      %1852 = vdwg.mxu0
      %v1853 = vadd.f32 %v1774, %v1850
      %s1854 = scalar_lea.vmem %s6, 96
      %v1855 = vld [vmem:[%s1854] sm:$0xff]
      %v1856 = vld [vmem:[%s1854 + $0x8] sm:$0xff]
      %v1857 = vld [vmem:[%s1854 + $0x10] sm:$0xff]
      %v1858 = vld [vmem:[%s1854 + $0x18] sm:$0xff]
      %v1859 = vrot.slane %v1614, 3
      %v1860 = vsel %vm1621, %v1859, 0
      %1862 = vmatprep.subr.mxu0 0.0
      %1863 = vmatpush1.msra.mxu0 %v1855
      %1864 = vmatprep.subr.mxu0 0.0
      %1865 = vmatpush1.msra.mxu0 %v1856
      %1866 = vmatprep.subr.mxu0 0.0
      %1867 = vmatpush1.msra.mxu0 %v1857
      %1868 = vmatprep.subr.mxu0 0.0
      %1869 = vmatpush1.msra.mxu0 %v1858
      %1870 = vmatprep.subr.mxu0 0.0
      %1871 = vmatpush1.msra.mxu0 0.0
      %1872 = vmatprep.subr.mxu0 0.0
      %1873 = vmatpush1.msra.mxu0 0.0
      %1874 = vmatprep.subr.mxu0 0.0
      %1875 = vmatpush1.msra.mxu0 0.0
      %1876 = vmatprep.subr.mxu0 0.0
      %1877 = vmatpush1.msra.mxu0 0.0
      %1878 = vmatprep.subr.mxu0 0.0
      %1879 = vmatpush1.msra.mxu0 0.0
      %1880 = vmatprep.subr.mxu0 0.0
      %1881 = vmatpush1.msra.mxu0 0.0
      %1882 = vmatprep.subr.mxu0 0.0
      %1883 = vmatpush1.msra.mxu0 0.0
      %1884 = vmatprep.subr.mxu0 0.0
      %1885 = vmatpush1.msra.mxu0 0.0
      %1886 = vmatprep.subr.mxu0 0.0
      %1887 = vmatpush1.msra.mxu0 0.0
      %1888 = vmatprep.subr.mxu0 0.0
      %1889 = vmatpush1.msra.mxu0 0.0
      %1890 = vmatprep.subr.mxu0 0.0
      %1891 = vmatpush1.msra.mxu0 0.0
      %1892 = vmatprep.subr.mxu0 0.0
      %1893 = vmatpush1.msra.mxu0 0.0
      %1894 = vmatprep.subr.mxu0 0.0
      %1895 = vmatpush1.msra.mxu0 0.0
      %1896 = vmatprep.subr.mxu0 0.0
      %1897 = vmatpush1.msra.mxu0 0.0
      %1898 = vmatprep.subr.mxu0 0.0
      %1899 = vmatpush1.msra.mxu0 0.0
      %1900 = vmatprep.subr.mxu0 0.0
      %1901 = vmatpush1.msra.mxu0 0.0
      %1902 = vmatprep.subr.mxu0 0.0
      %1903 = vmatpush1.msra.mxu0 0.0
      %1904 = vmatprep.subr.mxu0 0.0
      %1905 = vmatpush1.msra.mxu0 0.0
      %1906 = vmatprep.subr.mxu0 0.0
      %1907 = vmatpush1.msra.mxu0 0.0
      %1908 = vmatprep.subr.mxu0 0.0
      %1909 = vmatpush1.msra.mxu0 0.0
      %1910 = vmatprep.subr.mxu0 0.0
      %1911 = vmatpush1.msra.mxu0 0.0
      %1912 = vmatprep.subr.mxu0 0.0
      %1913 = vmatpush1.msra.mxu0 0.0
      %1914 = vmatprep.subr.mxu0 0.0
      %1915 = vmatpush1.msra.mxu0 0.0
      %1916 = vmatprep.subr.mxu0 0.0
      %1917 = vmatpush1.msra.mxu0 0.0
      %1918 = vmatprep.subr.mxu0 0.0
      %1919 = vmatpush1.msra.mxu0 0.0
      %1920 = vmatprep.subr.mxu0 0.0
      %1921 = vmatpush1.msra.mxu0 0.0
      %1922 = vmatprep.subr.mxu0 0.0
      %1923 = vmatpush1.msra.mxu0 0.0
      %1924 = vmatprep.subr.mxu0 0.0
      %1925 = vmatpush1.msra.mxu0 0.0
      %1926 = vmatprep.mubr.f32.mxu0 0.0
      %1927 = vmatmul.mubr.f32.gmra.mrb[0].mxu0 %v1860
      %v1928 = vpop.f32.mrb[0].mxu0
      %v1929 = vadd.f32 0.0, %v1928
      %v1930 = vpop.f32.mrb[0].mxu0
      %1931 = vdwg.mxu0
      %v1932 = vadd.f32 %v1853, %v1929
      %s1933 = scalar_lea.vmem %s6, 128
      %v1934 = vld [vmem:[%s1933] sm:$0xff]
      %v1935 = vld [vmem:[%s1933 + $0x8] sm:$0xff]
      %v1936 = vld [vmem:[%s1933 + $0x10] sm:$0xff]
      %v1937 = vld [vmem:[%s1933 + $0x18] sm:$0xff]
      %v1938 = vrot.slane %v1614, 4
      %v1939 = vsel %vm1621, %v1938, 0
      %1941 = vmatprep.subr.mxu0 0.0
      %1942 = vmatpush1.msra.mxu0 %v1934
      %1943 = vmatprep.subr.mxu0 0.0
      %1944 = vmatpush1.msra.mxu0 %v1935
      %1945 = vmatprep.subr.mxu0 0.0
      %1946 = vmatpush1.msra.mxu0 %v1936
      %1947 = vmatprep.subr.mxu0 0.0
      %1948 = vmatpush1.msra.mxu0 %v1937
      %1949 = vmatprep.subr.mxu0 0.0
      %1950 = vmatpush1.msra.mxu0 0.0
      %1951 = vmatprep.subr.mxu0 0.0
      %1952 = vmatpush1.msra.mxu0 0.0
      %1953 = vmatprep.subr.mxu0 0.0
      %1954 = vmatpush1.msra.mxu0 0.0
      %1955 = vmatprep.subr.mxu0 0.0
      %1956 = vmatpush1.msra.mxu0 0.0
      %1957 = vmatprep.subr.mxu0 0.0
      %1958 = vmatpush1.msra.mxu0 0.0
      %1959 = vmatprep.subr.mxu0 0.0
      %1960 = vmatpush1.msra.mxu0 0.0
      %1961 = vmatprep.subr.mxu0 0.0
      %1962 = vmatpush1.msra.mxu0 0.0
      %1963 = vmatprep.subr.mxu0 0.0
      %1964 = vmatpush1.msra.mxu0 0.0
      %1965 = vmatprep.subr.mxu0 0.0
      %1966 = vmatpush1.msra.mxu0 0.0
      %1967 = vmatprep.subr.mxu0 0.0
      %1968 = vmatpush1.msra.mxu0 0.0
      %1969 = vmatprep.subr.mxu0 0.0
      %1970 = vmatpush1.msra.mxu0 0.0
      %1971 = vmatprep.subr.mxu0 0.0
      %1972 = vmatpush1.msra.mxu0 0.0
      %1973 = vmatprep.subr.mxu0 0.0
      %1974 = vmatpush1.msra.mxu0 0.0
      %1975 = vmatprep.subr.mxu0 0.0
      %1976 = vmatpush1.msra.mxu0 0.0
      %1977 = vmatprep.subr.mxu0 0.0
      %1978 = vmatpush1.msra.mxu0 0.0
      %1979 = vmatprep.subr.mxu0 0.0
      %1980 = vmatpush1.msra.mxu0 0.0
      %1981 = vmatprep.subr.mxu0 0.0
      %1982 = vmatpush1.msra.mxu0 0.0
      %1983 = vmatprep.subr.mxu0 0.0
      %1984 = vmatpush1.msra.mxu0 0.0
      %1985 = vmatprep.subr.mxu0 0.0
      %1986 = vmatpush1.msra.mxu0 0.0
      %1987 = vmatprep.subr.mxu0 0.0
      %1988 = vmatpush1.msra.mxu0 0.0
      %1989 = vmatprep.subr.mxu0 0.0
      %1990 = vmatpush1.msra.mxu0 0.0
      %1991 = vmatprep.subr.mxu0 0.0
      %1992 = vmatpush1.msra.mxu0 0.0
      %1993 = vmatprep.subr.mxu0 0.0
      %1994 = vmatpush1.msra.mxu0 0.0
      %1995 = vmatprep.subr.mxu0 0.0
      %1996 = vmatpush1.msra.mxu0 0.0
      %1997 = vmatprep.subr.mxu0 0.0
      %1998 = vmatpush1.msra.mxu0 0.0
      %1999 = vmatprep.subr.mxu0 0.0
      %2000 = vmatpush1.msra.mxu0 0.0
      %2001 = vmatprep.subr.mxu0 0.0
      %2002 = vmatpush1.msra.mxu0 0.0
      %2003 = vmatprep.subr.mxu0 0.0
      %2004 = vmatpush1.msra.mxu0 0.0
      %2005 = vmatprep.mubr.f32.mxu0 0.0
      %2006 = vmatmul.mubr.f32.gmra.mrb[0].mxu0 %v1939
      %v2007 = vpop.f32.mrb[0].mxu0
      %v2008 = vadd.f32 0.0, %v2007
      %v2009 = vpop.f32.mrb[0].mxu0
      %2010 = vdwg.mxu0
      %v2011 = vadd.f32 %v1932, %v2008
      %s2012 = scalar_lea.vmem %s6, 160
      %v2013 = vld [vmem:[%s2012] sm:$0xff]
      %v2014 = vld [vmem:[%s2012 + $0x8] sm:$0xff]
      %v2015 = vld [vmem:[%s2012 + $0x10] sm:$0xff]
      %v2016 = vld [vmem:[%s2012 + $0x18] sm:$0xff]
      %v2017 = vrot.slane %v1614, 5
      %v2018 = vsel %vm1621, %v2017, 0
      %2020 = vmatprep.subr.mxu0 0.0
      %2021 = vmatpush1.msra.mxu0 %v2013
      %2022 = vmatprep.subr.mxu0 0.0
      %2023 = vmatpush1.msra.mxu0 %v2014
      %2024 = vmatprep.subr.mxu0 0.0
      %2025 = vmatpush1.msra.mxu0 %v2015
      %2026 = vmatprep.subr.mxu0 0.0
      %2027 = vmatpush1.msra.mxu0 %v2016
      %2028 = vmatprep.subr.mxu0 0.0
      %2029 = vmatpush1.msra.mxu0 0.0
      %2030 = vmatprep.subr.mxu0 0.0
      %2031 = vmatpush1.msra.mxu0 0.0
      %2032 = vmatprep.subr.mxu0 0.0
      %2033 = vmatpush1.msra.mxu0 0.0
      %2034 = vmatprep.subr.mxu0 0.0
      %2035 = vmatpush1.msra.mxu0 0.0
      %2036 = vmatprep.subr.mxu0 0.0
      %2037 = vmatpush1.msra.mxu0 0.0
      %2038 = vmatprep.subr.mxu0 0.0
      %2039 = vmatpush1.msra.mxu0 0.0
      %2040 = vmatprep.subr.mxu0 0.0
      %2041 = vmatpush1.msra.mxu0 0.0
      %2042 = vmatprep.subr.mxu0 0.0
      %2043 = vmatpush1.msra.mxu0 0.0
      %2044 = vmatprep.subr.mxu0 0.0
      %2045 = vmatpush1.msra.mxu0 0.0
      %2046 = vmatprep.subr.mxu0 0.0
      %2047 = vmatpush1.msra.mxu0 0.0
      %2048 = vmatprep.subr.mxu0 0.0
      %2049 = vmatpush1.msra.mxu0 0.0
      %2050 = vmatprep.subr.mxu0 0.0
      %2051 = vmatpush1.msra.mxu0 0.0
      %2052 = vmatprep.subr.mxu0 0.0
      %2053 = vmatpush1.msra.mxu0 0.0
      %2054 = vmatprep.subr.mxu0 0.0
      %2055 = vmatpush1.msra.mxu0 0.0
      %2056 = vmatprep.subr.mxu0 0.0
      %2057 = vmatpush1.msra.mxu0 0.0
      %2058 = vmatprep.subr.mxu0 0.0
      %2059 = vmatpush1.msra.mxu0 0.0
      %2060 = vmatprep.subr.mxu0 0.0
      %2061 = vmatpush1.msra.mxu0 0.0
      %2062 = vmatprep.subr.mxu0 0.0
      %2063 = vmatpush1.msra.mxu0 0.0
      %2064 = vmatprep.subr.mxu0 0.0
      %2065 = vmatpush1.msra.mxu0 0.0
      %2066 = vmatprep.subr.mxu0 0.0
      %2067 = vmatpush1.msra.mxu0 0.0
      %2068 = vmatprep.subr.mxu0 0.0
      %2069 = vmatpush1.msra.mxu0 0.0
      %2070 = vmatprep.subr.mxu0 0.0
      %2071 = vmatpush1.msra.mxu0 0.0
      %2072 = vmatprep.subr.mxu0 0.0
      %2073 = vmatpush1.msra.mxu0 0.0
      %2074 = vmatprep.subr.mxu0 0.0
      %2075 = vmatpush1.msra.mxu0 0.0
      %2076 = vmatprep.subr.mxu0 0.0
      %2077 = vmatpush1.msra.mxu0 0.0
      %2078 = vmatprep.subr.mxu0 0.0
      %2079 = vmatpush1.msra.mxu0 0.0
      %2080 = vmatprep.subr.mxu0 0.0
      %2081 = vmatpush1.msra.mxu0 0.0
      %2082 = vmatprep.subr.mxu0 0.0
      %2083 = vmatpush1.msra.mxu0 0.0
      %2084 = vmatprep.mubr.f32.mxu0 0.0
      %2085 = vmatmul.mubr.f32.gmra.mrb[0].mxu0 %v2018
      %v2086 = vpop.f32.mrb[0].mxu0
      %v2087 = vadd.f32 0.0, %v2086
      %v2088 = vpop.f32.mrb[0].mxu0
      %2089 = vdwg.mxu0
      %v2090 = vadd.f32 %v2011, %v2087
      %s2091 = scalar_lea.vmem %s6, 192
      %v2092 = vld [vmem:[%s2091] sm:$0xff]
      %v2093 = vld [vmem:[%s2091 + $0x8] sm:$0xff]
      %v2094 = vld [vmem:[%s2091 + $0x10] sm:$0xff]
      %v2095 = vld [vmem:[%s2091 + $0x18] sm:$0xff]
      %v2096 = vrot.slane %v1614, 6
      %v2097 = vsel %vm1621, %v2096, 0
      %2099 = vmatprep.subr.mxu0 0.0
      %2100 = vmatpush1.msra.mxu0 %v2092
      %2101 = vmatprep.subr.mxu0 0.0
      %2102 = vmatpush1.msra.mxu0 %v2093
      %2103 = vmatprep.subr.mxu0 0.0
      %2104 = vmatpush1.msra.mxu0 %v2094
      %2105 = vmatprep.subr.mxu0 0.0
      %2106 = vmatpush1.msra.mxu0 %v2095
      %2107 = vmatprep.subr.mxu0 0.0
      %2108 = vmatpush1.msra.mxu0 0.0
      %2109 = vmatprep.subr.mxu0 0.0
      %2110 = vmatpush1.msra.mxu0 0.0
      %2111 = vmatprep.subr.mxu0 0.0
      %2112 = vmatpush1.msra.mxu0 0.0
      %2113 = vmatprep.subr.mxu0 0.0
      %2114 = vmatpush1.msra.mxu0 0.0
      %2115 = vmatprep.subr.mxu0 0.0
      %2116 = vmatpush1.msra.mxu0 0.0
      %2117 = vmatprep.subr.mxu0 0.0
      %2118 = vmatpush1.msra.mxu0 0.0
      %2119 = vmatprep.subr.mxu0 0.0
      %2120 = vmatpush1.msra.mxu0 0.0
      %2121 = vmatprep.subr.mxu0 0.0
      %2122 = vmatpush1.msra.mxu0 0.0
      %2123 = vmatprep.subr.mxu0 0.0
      %2124 = vmatpush1.msra.mxu0 0.0
      %2125 = vmatprep.subr.mxu0 0.0
      %2126 = vmatpush1.msra.mxu0 0.0
      %2127 = vmatprep.subr.mxu0 0.0
      %2128 = vmatpush1.msra.mxu0 0.0
      %2129 = vmatprep.subr.mxu0 0.0
      %2130 = vmatpush1.msra.mxu0 0.0
      %2131 = vmatprep.subr.mxu0 0.0
      %2132 = vmatpush1.msra.mxu0 0.0
      %2133 = vmatprep.subr.mxu0 0.0
      %2134 = vmatpush1.msra.mxu0 0.0
      %2135 = vmatprep.subr.mxu0 0.0
      %2136 = vmatpush1.msra.mxu0 0.0
      %2137 = vmatprep.subr.mxu0 0.0
      %2138 = vmatpush1.msra.mxu0 0.0
      %2139 = vmatprep.subr.mxu0 0.0
      %2140 = vmatpush1.msra.mxu0 0.0
      %2141 = vmatprep.subr.mxu0 0.0
      %2142 = vmatpush1.msra.mxu0 0.0
      %2143 = vmatprep.subr.mxu0 0.0
      %2144 = vmatpush1.msra.mxu0 0.0
      %2145 = vmatprep.subr.mxu0 0.0
      %2146 = vmatpush1.msra.mxu0 0.0
      %2147 = vmatprep.subr.mxu0 0.0
      %2148 = vmatpush1.msra.mxu0 0.0
      %2149 = vmatprep.subr.mxu0 0.0
      %2150 = vmatpush1.msra.mxu0 0.0
      %2151 = vmatprep.subr.mxu0 0.0
      %2152 = vmatpush1.msra.mxu0 0.0
      %2153 = vmatprep.subr.mxu0 0.0
      %2154 = vmatpush1.msra.mxu0 0.0
      %2155 = vmatprep.subr.mxu0 0.0
      %2156 = vmatpush1.msra.mxu0 0.0
      %2157 = vmatprep.subr.mxu0 0.0
      %2158 = vmatpush1.msra.mxu0 0.0
      %2159 = vmatprep.subr.mxu0 0.0
      %2160 = vmatpush1.msra.mxu0 0.0
      %2161 = vmatprep.subr.mxu0 0.0
      %2162 = vmatpush1.msra.mxu0 0.0
      %2163 = vmatprep.mubr.f32.mxu0 0.0
      %2164 = vmatmul.mubr.f32.gmra.mrb[0].mxu0 %v2097
      %v2165 = vpop.f32.mrb[0].mxu0
      %v2166 = vadd.f32 0.0, %v2165
      %v2167 = vpop.f32.mrb[0].mxu0
      %2168 = vdwg.mxu0
      %v2169 = vadd.f32 %v2090, %v2166
      %s2170 = scalar_lea.vmem %s6, 224
      %v2171 = vld [vmem:[%s2170] sm:$0xff]
      %v2172 = vld [vmem:[%s2170 + $0x8] sm:$0xff]
      %v2173 = vld [vmem:[%s2170 + $0x10] sm:$0xff]
      %v2174 = vld [vmem:[%s2170 + $0x18] sm:$0xff]
      %v2175 = vrot.slane %v1614, 7
      %v2176 = vsel %vm1621, %v2175, 0
      %2178 = vmatprep.subr.mxu0 0.0
      %2179 = vmatpush1.msra.mxu0 %v2171
      %2180 = vmatprep.subr.mxu0 0.0
      %2181 = vmatpush1.msra.mxu0 %v2172
      %2182 = vmatprep.subr.mxu0 0.0
      %2183 = vmatpush1.msra.mxu0 %v2173
      %2184 = vmatprep.subr.mxu0 0.0
      %2185 = vmatpush1.msra.mxu0 %v2174
      %2186 = vmatprep.subr.mxu0 0.0
      %2187 = vmatpush1.msra.mxu0 0.0
      %2188 = vmatprep.subr.mxu0 0.0
      %2189 = vmatpush1.msra.mxu0 0.0
      %2190 = vmatprep.subr.mxu0 0.0
      %2191 = vmatpush1.msra.mxu0 0.0
      %2192 = vmatprep.subr.mxu0 0.0
      %2193 = vmatpush1.msra.mxu0 0.0
      %2194 = vmatprep.subr.mxu0 0.0
      %2195 = vmatpush1.msra.mxu0 0.0
      %2196 = vmatprep.subr.mxu0 0.0
      %2197 = vmatpush1.msra.mxu0 0.0
      %2198 = vmatprep.subr.mxu0 0.0
      %2199 = vmatpush1.msra.mxu0 0.0
      %2200 = vmatprep.subr.mxu0 0.0
      %2201 = vmatpush1.msra.mxu0 0.0
      %2202 = vmatprep.subr.mxu0 0.0
      %2203 = vmatpush1.msra.mxu0 0.0
      %2204 = vmatprep.subr.mxu0 0.0
      %2205 = vmatpush1.msra.mxu0 0.0
      %2206 = vmatprep.subr.mxu0 0.0
      %2207 = vmatpush1.msra.mxu0 0.0
      %2208 = vmatprep.subr.mxu0 0.0
      %2209 = vmatpush1.msra.mxu0 0.0
      %2210 = vmatprep.subr.mxu0 0.0
      %2211 = vmatpush1.msra.mxu0 0.0
      %2212 = vmatprep.subr.mxu0 0.0
      %2213 = vmatpush1.msra.mxu0 0.0
      %2214 = vmatprep.subr.mxu0 0.0
      %2215 = vmatpush1.msra.mxu0 0.0
      %2216 = vmatprep.subr.mxu0 0.0
      %2217 = vmatpush1.msra.mxu0 0.0
      %2218 = vmatprep.subr.mxu0 0.0
      %2219 = vmatpush1.msra.mxu0 0.0
      %2220 = vmatprep.subr.mxu0 0.0
      %2221 = vmatpush1.msra.mxu0 0.0
      %2222 = vmatprep.subr.mxu0 0.0
      %2223 = vmatpush1.msra.mxu0 0.0
      %2224 = vmatprep.subr.mxu0 0.0
      %2225 = vmatpush1.msra.mxu0 0.0
      %2226 = vmatprep.subr.mxu0 0.0
      %2227 = vmatpush1.msra.mxu0 0.0
      %2228 = vmatprep.subr.mxu0 0.0
      %2229 = vmatpush1.msra.mxu0 0.0
      %2230 = vmatprep.subr.mxu0 0.0
      %2231 = vmatpush1.msra.mxu0 0.0
      %2232 = vmatprep.subr.mxu0 0.0
      %2233 = vmatpush1.msra.mxu0 0.0
      %2234 = vmatprep.subr.mxu0 0.0
      %2235 = vmatpush1.msra.mxu0 0.0
      %2236 = vmatprep.subr.mxu0 0.0
      %2237 = vmatpush1.msra.mxu0 0.0
      %2238 = vmatprep.subr.mxu0 0.0
      %2239 = vmatpush1.msra.mxu0 0.0
      %2240 = vmatprep.subr.mxu0 0.0
      %2241 = vmatpush1.msra.mxu0 0.0
      %2242 = vmatprep.mubr.f32.mxu0 0.0
      %2243 = vmatmul.mubr.f32.gmra.mrb[0].mxu0 %v2176
      %v2244 = vpop.f32.mrb[0].mxu0
      %v2245 = vadd.f32 0.0, %v2244
      %v2246 = vpop.f32.mrb[0].mxu0
      %2247 = vdwg.mxu0
      %v2248 = vadd.f32 %v2169, %v2245
      %s2249 = scalar_lea.vmem %s6, 256
      %v2250 = vld [vmem:[%s2249] sm:$0xff]
      %v2251 = vld [vmem:[%s2249 + $0x8] sm:$0xff]
      %v2252 = vld [vmem:[%s2249 + $0x10] sm:$0xff]
      %v2253 = vld [vmem:[%s2249 + $0x18] sm:$0xff]
      %v2255 = vsel %vm1621, %v1615, 0
      %2257 = vmatprep.subr.mxu0 0.0
      %2258 = vmatpush1.msra.mxu0 %v2250
      %2259 = vmatprep.subr.mxu0 0.0
      %2260 = vmatpush1.msra.mxu0 %v2251
      %2261 = vmatprep.subr.mxu0 0.0
      %2262 = vmatpush1.msra.mxu0 %v2252
      %2263 = vmatprep.subr.mxu0 0.0
      %2264 = vmatpush1.msra.mxu0 %v2253
      %2265 = vmatprep.subr.mxu0 0.0
      %2266 = vmatpush1.msra.mxu0 0.0
      %2267 = vmatprep.subr.mxu0 0.0
      %2268 = vmatpush1.msra.mxu0 0.0
      %2269 = vmatprep.subr.mxu0 0.0
      %2270 = vmatpush1.msra.mxu0 0.0
      %2271 = vmatprep.subr.mxu0 0.0
      %2272 = vmatpush1.msra.mxu0 0.0
      %2273 = vmatprep.subr.mxu0 0.0
      %2274 = vmatpush1.msra.mxu0 0.0
      %2275 = vmatprep.subr.mxu0 0.0
      %2276 = vmatpush1.msra.mxu0 0.0
      %2277 = vmatprep.subr.mxu0 0.0
      %2278 = vmatpush1.msra.mxu0 0.0
      %2279 = vmatprep.subr.mxu0 0.0
      %2280 = vmatpush1.msra.mxu0 0.0
      %2281 = vmatprep.subr.mxu0 0.0
      %2282 = vmatpush1.msra.mxu0 0.0
      %2283 = vmatprep.subr.mxu0 0.0
      %2284 = vmatpush1.msra.mxu0 0.0
      %2285 = vmatprep.subr.mxu0 0.0
      %2286 = vmatpush1.msra.mxu0 0.0
      %2287 = vmatprep.subr.mxu0 0.0
      %2288 = vmatpush1.msra.mxu0 0.0
      %2289 = vmatprep.subr.mxu0 0.0
      %2290 = vmatpush1.msra.mxu0 0.0
      %2291 = vmatprep.subr.mxu0 0.0
      %2292 = vmatpush1.msra.mxu0 0.0
      %2293 = vmatprep.subr.mxu0 0.0
      %2294 = vmatpush1.msra.mxu0 0.0
      %2295 = vmatprep.subr.mxu0 0.0
      %2296 = vmatpush1.msra.mxu0 0.0
      %2297 = vmatprep.subr.mxu0 0.0
      %2298 = vmatpush1.msra.mxu0 0.0
      %2299 = vmatprep.subr.mxu0 0.0
      %2300 = vmatpush1.msra.mxu0 0.0
      %2301 = vmatprep.subr.mxu0 0.0
      %2302 = vmatpush1.msra.mxu0 0.0
      %2303 = vmatprep.subr.mxu0 0.0
      %2304 = vmatpush1.msra.mxu0 0.0
      %2305 = vmatprep.subr.mxu0 0.0
      %2306 = vmatpush1.msra.mxu0 0.0
      %2307 = vmatprep.subr.mxu0 0.0
      %2308 = vmatpush1.msra.mxu0 0.0
      %2309 = vmatprep.subr.mxu0 0.0
      %2310 = vmatpush1.msra.mxu0 0.0
      %2311 = vmatprep.subr.mxu0 0.0
      %2312 = vmatpush1.msra.mxu0 0.0
      %2313 = vmatprep.subr.mxu0 0.0
      %2314 = vmatpush1.msra.mxu0 0.0
      %2315 = vmatprep.subr.mxu0 0.0
      %2316 = vmatpush1.msra.mxu0 0.0
      %2317 = vmatprep.subr.mxu0 0.0
      %2318 = vmatpush1.msra.mxu0 0.0
      %2319 = vmatprep.subr.mxu0 0.0
      %2320 = vmatpush1.msra.mxu0 0.0
      %2321 = vmatprep.mubr.f32.mxu0 0.0
      %2322 = vmatmul.mubr.f32.gmra.mrb[0].mxu0 %v2255
      %v2323 = vpop.f32.mrb[0].mxu0
      %v2324 = vadd.f32 0.0, %v2323
      %v2325 = vpop.f32.mrb[0].mxu0
      %2326 = vdwg.mxu0
      %v2327 = vadd.f32 %v2248, %v2324
      %v2328 = vmax.f32 %v2327, 0.0
      %v2329 = vld [vmem:[%s8] sm:$0xff]
      %v2330 = vld [vmem:[%s8 + $0x8] sm:$0xff]
      %v2331 = vld [vmem:[%s8 + $0x10] sm:$0xff]
      %v2332 = vld [vmem:[%s8 + $0x18] sm:$0xff]
      %v2333 = vld [vmem:[%s8 + $0x20] sm:$0xff]
      %v2334 = vld [vmem:[%s8 + $0x28] sm:$0xff]
      %v2335 = vld [vmem:[%s8 + $0x30] sm:$0xff]
      %v2336 = vld [vmem:[%s8 + $0x38] sm:$0xff]
      %v2337 = vld [vmem:[%s8 + $0x40] sm:$0xff]
      %v2338 = vld [vmem:[%s8 + $0x48] sm:$0xff]
      %v2339 = vld [vmem:[%s8 + $0x50] sm:$0xff]
      %v2340 = vld [vmem:[%s8 + $0x58] sm:$0xff]
      %v2341 = vld [vmem:[%s8 + $0x60] sm:$0xff]
      %v2342 = vld [vmem:[%s8 + $0x68] sm:$0xff]
      %v2343 = vld [vmem:[%s8 + $0x70] sm:$0xff]
      %v2344 = vld [vmem:[%s8 + $0x78] sm:$0xff]
      %v2345 = vld [vmem:[%s8 + $0x80] sm:$0xff]
      %v2346 = vld [vmem:[%s8 + $0x88] sm:$0xff]
      %v2347 = vld [vmem:[%s8 + $0x90] sm:$0xff]
      %v2348 = vld [vmem:[%s8 + $0x98] sm:$0xff]
      %v2349 = vld [vmem:[%s8 + $0xa0] sm:$0xff]
      %v2350 = vld [vmem:[%s8 + $0xa8] sm:$0xff]
      %v2351 = vld [vmem:[%s8 + $0xb0] sm:$0xff]
      %v2352 = vld [vmem:[%s8 + $0xb8] sm:$0xff]
      %v2353 = vld [vmem:[%s8 + $0xc0] sm:$0xff]
      %v2354 = vld [vmem:[%s8 + $0xc8] sm:$0xff]
      %v2355 = vld [vmem:[%s8 + $0xd0] sm:$0xff]
      %v2356 = vld [vmem:[%s8 + $0xd8] sm:$0xff]
      %v2357 = vld [vmem:[%s8 + $0xe0] sm:$0xff]
      %v2358 = vld [vmem:[%s8 + $0xe8] sm:$0xff]
      %v2359 = vld [vmem:[%s8 + $0xf0] sm:$0xff]
      %v2360 = vld [vmem:[%s8 + $0xf8] sm:$0xff]
      %v2361 = vld [vmem:[%s9] sm:$0xf]
      %v2363 = vlaneseq
      %v2364 = vshrl.u32 %v2363, 7
      %v2365 = vsub.s32 0, %v2364
      %v2366 = vrot.slane %v2361, %v2365
      %v2367 = vlaneseq
      %v2368 = vshrl.u32 %v2367, 7
      %v2369 = vsub.s32 1, %v2368
      %v2370 = vrot.slane %v2361, %v2369
      %v2371 = vlaneseq
      %v2372 = vshrl.u32 %v2371, 7
      %v2373 = vsub.s32 2, %v2372
      %v2374 = vrot.slane %v2361, %v2373
      %v2375 = vlaneseq
      %v2376 = vshrl.u32 %v2375, 7
      %v2377 = vsub.s32 3, %v2376
      %v2378 = vrot.slane %v2361, %v2377
      %vm2383 = vcmask 523264
      %v2385 = vsel %vm2383, %v2328, 0
      %2387 = vmatprep.subr.mxu0 %v2330
      %2388 = vmatpush1.msra.mxu0 %v2329
      %2389 = vmatprep.subr.mxu0 %v2334
      %2390 = vmatpush1.msra.mxu0 %v2333
      %2391 = vmatprep.subr.mxu0 %v2338
      %2392 = vmatpush1.msra.mxu0 %v2337
      %2393 = vmatprep.subr.mxu0 %v2342
      %2394 = vmatpush1.msra.mxu0 %v2341
      %2395 = vmatprep.subr.mxu0 %v2346
      %2396 = vmatpush1.msra.mxu0 %v2345
      %2397 = vmatprep.subr.mxu0 %v2350
      %2398 = vmatpush1.msra.mxu0 %v2349
      %2399 = vmatprep.subr.mxu0 %v2354
      %2400 = vmatpush1.msra.mxu0 %v2353
      %2401 = vmatprep.subr.mxu0 %v2358
      %2402 = vmatpush1.msra.mxu0 %v2357
      %2403 = vmatprep.subr.mxu0 0.0
      %2404 = vmatpush1.msra.mxu0 0.0
      %2405 = vmatprep.subr.mxu0 0.0
      %2406 = vmatpush1.msra.mxu0 0.0
      %2407 = vmatprep.subr.mxu0 0.0
      %2408 = vmatpush1.msra.mxu0 0.0
      %2409 = vmatprep.subr.mxu0 0.0
      %2410 = vmatpush1.msra.mxu0 0.0
      %2411 = vmatprep.subr.mxu0 0.0
      %2412 = vmatpush1.msra.mxu0 0.0
      %2413 = vmatprep.subr.mxu0 0.0
      %2414 = vmatpush1.msra.mxu0 0.0
      %2415 = vmatprep.subr.mxu0 0.0
      %2416 = vmatpush1.msra.mxu0 0.0
      %2417 = vmatprep.subr.mxu0 0.0
      %2418 = vmatpush1.msra.mxu0 0.0
      %2419 = vmatprep.subr.mxu0 0.0
      %2420 = vmatpush1.msra.mxu0 0.0
      %2421 = vmatprep.subr.mxu0 0.0
      %2422 = vmatpush1.msra.mxu0 0.0
      %2423 = vmatprep.subr.mxu0 0.0
      %2424 = vmatpush1.msra.mxu0 0.0
      %2425 = vmatprep.subr.mxu0 0.0
      %2426 = vmatpush1.msra.mxu0 0.0
      %2427 = vmatprep.subr.mxu0 0.0
      %2428 = vmatpush1.msra.mxu0 0.0
      %2429 = vmatprep.subr.mxu0 0.0
      %2430 = vmatpush1.msra.mxu0 0.0
      %2431 = vmatprep.subr.mxu0 0.0
      %2432 = vmatpush1.msra.mxu0 0.0
      %2433 = vmatprep.subr.mxu0 0.0
      %2434 = vmatpush1.msra.mxu0 0.0
      %2435 = vmatprep.subr.mxu0 0.0
      %2436 = vmatpush1.msra.mxu0 0.0
      %2437 = vmatprep.subr.mxu0 0.0
      %2438 = vmatpush1.msra.mxu0 0.0
      %2439 = vmatprep.subr.mxu0 0.0
      %2440 = vmatpush1.msra.mxu0 0.0
      %2441 = vmatprep.subr.mxu0 0.0
      %2442 = vmatpush1.msra.mxu0 0.0
      %2443 = vmatprep.subr.mxu0 0.0
      %2444 = vmatpush1.msra.mxu0 0.0
      %2445 = vmatprep.subr.mxu0 0.0
      %2446 = vmatpush1.msra.mxu0 0.0
      %2447 = vmatprep.subr.mxu0 0.0
      %2448 = vmatpush1.msra.mxu0 0.0
      %2449 = vmatprep.subr.mxu0 0.0
      %2450 = vmatpush1.msra.mxu0 0.0
      %2451 = vmatprep.mubr.f32.mxu0 0.0
      %2452 = vmatmul.mubr.f32.gmra.mrb[0].mxu0 %v2385
      %v2453 = vpop.f32.mrb[0].mxu0
      %v2454 = vadd.f32 %v2366, %v2453
      %v2455 = vpop.f32.mrb[0].mxu0
      %v2456 = vadd.f32 %v2370, %v2455
      %2457 = vdwg.mxu0
      %2458 = vmatprep.subr.mxu0 %v2332
      %2459 = vmatpush1.msra.mxu0 %v2331
      %2460 = vmatprep.subr.mxu0 %v2336
      %2461 = vmatpush1.msra.mxu0 %v2335
      %2462 = vmatprep.subr.mxu0 %v2340
      %2463 = vmatpush1.msra.mxu0 %v2339
      %2464 = vmatprep.subr.mxu0 %v2344
      %2465 = vmatpush1.msra.mxu0 %v2343
      %2466 = vmatprep.subr.mxu0 %v2348
      %2467 = vmatpush1.msra.mxu0 %v2347
      %2468 = vmatprep.subr.mxu0 %v2352
      %2469 = vmatpush1.msra.mxu0 %v2351
      %2470 = vmatprep.subr.mxu0 %v2356
      %2471 = vmatpush1.msra.mxu0 %v2355
      %2472 = vmatprep.subr.mxu0 %v2360
      %2473 = vmatpush1.msra.mxu0 %v2359
      %2474 = vmatprep.subr.mxu0 0.0
      %2475 = vmatpush1.msra.mxu0 0.0
      %2476 = vmatprep.subr.mxu0 0.0
      %2477 = vmatpush1.msra.mxu0 0.0
      %2478 = vmatprep.subr.mxu0 0.0
      %2479 = vmatpush1.msra.mxu0 0.0
      %2480 = vmatprep.subr.mxu0 0.0
      %2481 = vmatpush1.msra.mxu0 0.0
      %2482 = vmatprep.subr.mxu0 0.0
      %2483 = vmatpush1.msra.mxu0 0.0
      %2484 = vmatprep.subr.mxu0 0.0
      %2485 = vmatpush1.msra.mxu0 0.0
      %2486 = vmatprep.subr.mxu0 0.0
      %2487 = vmatpush1.msra.mxu0 0.0
      %2488 = vmatprep.subr.mxu0 0.0
      %2489 = vmatpush1.msra.mxu0 0.0
      %2490 = vmatprep.subr.mxu0 0.0
      %2491 = vmatpush1.msra.mxu0 0.0
      %2492 = vmatprep.subr.mxu0 0.0
      %2493 = vmatpush1.msra.mxu0 0.0
      %2494 = vmatprep.subr.mxu0 0.0
      %2495 = vmatpush1.msra.mxu0 0.0
      %2496 = vmatprep.subr.mxu0 0.0
      %2497 = vmatpush1.msra.mxu0 0.0
      %2498 = vmatprep.subr.mxu0 0.0
      %2499 = vmatpush1.msra.mxu0 0.0
      %2500 = vmatprep.subr.mxu0 0.0
      %2501 = vmatpush1.msra.mxu0 0.0
      %2502 = vmatprep.subr.mxu0 0.0
      %2503 = vmatpush1.msra.mxu0 0.0
      %2504 = vmatprep.subr.mxu0 0.0
      %2505 = vmatpush1.msra.mxu0 0.0
      %2506 = vmatprep.subr.mxu0 0.0
      %2507 = vmatpush1.msra.mxu0 0.0
      %2508 = vmatprep.subr.mxu0 0.0
      %2509 = vmatpush1.msra.mxu0 0.0
      %2510 = vmatprep.subr.mxu0 0.0
      %2511 = vmatpush1.msra.mxu0 0.0
      %2512 = vmatprep.subr.mxu0 0.0
      %2513 = vmatpush1.msra.mxu0 0.0
      %2514 = vmatprep.subr.mxu0 0.0
      %2515 = vmatpush1.msra.mxu0 0.0
      %2516 = vmatprep.subr.mxu0 0.0
      %2517 = vmatpush1.msra.mxu0 0.0
      %2518 = vmatprep.subr.mxu0 0.0
      %2519 = vmatpush1.msra.mxu0 0.0
      %2520 = vmatprep.subr.mxu0 0.0
      %2521 = vmatpush1.msra.mxu0 0.0
      %2522 = vmatprep.mubr.f32.mxu0 0.0
      %2523 = vmatmul.mubr.f32.gmra.mrb[0].mxu0 %v2385
      %v2524 = vpop.f32.mrb[0].mxu0
      %v2525 = vadd.f32 %v2374, %v2524
      %v2526 = vpop.f32.mrb[0].mxu0
      %v2527 = vadd.f32 %v2378, %v2526
      %2528 = vdwg.mxu0
      %v2529 = vmax.f32 %v2454, 0.0
      %v2530 = vmax.f32 %v2456, 0.0
      %v2531 = vmax.f32 %v2525, 0.0
      %v2532 = vmax.f32 %v2527, 0.0
      %v2533 = vld [vmem:[%s10] sm:$0xff]
      %v2534 = vld [vmem:[%s10 + $0x8] sm:$0xff]
      %v2535 = vld [vmem:[%s10 + $0x10] sm:$0xff]
      %v2536 = vld [vmem:[%s10 + $0x18] sm:$0xff]
      %v2537 = vld [vmem:[%s10 + $0x20] sm:$0xff]
      %v2538 = vld [vmem:[%s10 + $0x28] sm:$0xff]
      %v2539 = vld [vmem:[%s10 + $0x30] sm:$0xff]
      %v2540 = vld [vmem:[%s10 + $0x38] sm:$0xff]
      %v2541 = vld [vmem:[%s10 + $0x40] sm:$0xff]
      %v2542 = vld [vmem:[%s10 + $0x48] sm:$0xff]
      %v2543 = vld [vmem:[%s10 + $0x50] sm:$0xff]
      %v2544 = vld [vmem:[%s10 + $0x58] sm:$0xff]
      %v2545 = vld [vmem:[%s10 + $0x60] sm:$0xff]
      %v2546 = vld [vmem:[%s10 + $0x68] sm:$0xff]
      %v2547 = vld [vmem:[%s10 + $0x70] sm:$0xff]
      %v2548 = vld [vmem:[%s10 + $0x78] sm:$0xff]
      %v2549 = vld [vmem:[%s10 + $0x80] sm:$0xff]
      %v2550 = vld [vmem:[%s10 + $0x88] sm:$0xff]
      %v2551 = vld [vmem:[%s10 + $0x90] sm:$0xff]
      %v2552 = vld [vmem:[%s10 + $0x98] sm:$0xff]
      %v2553 = vld [vmem:[%s10 + $0xa0] sm:$0xff]
      %v2554 = vld [vmem:[%s10 + $0xa8] sm:$0xff]
      %v2555 = vld [vmem:[%s10 + $0xb0] sm:$0xff]
      %v2556 = vld [vmem:[%s10 + $0xb8] sm:$0xff]
      %v2557 = vld [vmem:[%s10 + $0xc0] sm:$0xff]
      %v2558 = vld [vmem:[%s10 + $0xc8] sm:$0xff]
      %v2559 = vld [vmem:[%s10 + $0xd0] sm:$0xff]
      %v2560 = vld [vmem:[%s10 + $0xd8] sm:$0xff]
      %v2561 = vld [vmem:[%s10 + $0xe0] sm:$0xff]
      %v2562 = vld [vmem:[%s10 + $0xe8] sm:$0xff]
      %v2563 = vld [vmem:[%s10 + $0xf0] sm:$0xff]
      %v2564 = vld [vmem:[%s10 + $0xf8] sm:$0xff]
      %v2565 = vld [vmem:[%s10 + $0x100] sm:$0xff]
      %v2566 = vld [vmem:[%s10 + $0x108] sm:$0xff]
      %v2567 = vld [vmem:[%s10 + $0x110] sm:$0xff]
      %v2568 = vld [vmem:[%s10 + $0x118] sm:$0xff]
      %v2569 = vld [vmem:[%s10 + $0x120] sm:$0xff]
      %v2570 = vld [vmem:[%s10 + $0x128] sm:$0xff]
      %v2571 = vld [vmem:[%s10 + $0x130] sm:$0xff]
      %v2572 = vld [vmem:[%s10 + $0x138] sm:$0xff]
      %v2573 = vld [vmem:[%s10 + $0x140] sm:$0xff]
      %v2574 = vld [vmem:[%s10 + $0x148] sm:$0xff]
      %v2575 = vld [vmem:[%s10 + $0x150] sm:$0xff]
      %v2576 = vld [vmem:[%s10 + $0x158] sm:$0xff]
      %v2577 = vld [vmem:[%s10 + $0x160] sm:$0xff]
      %v2578 = vld [vmem:[%s10 + $0x168] sm:$0xff]
      %v2579 = vld [vmem:[%s10 + $0x170] sm:$0xff]
      %v2580 = vld [vmem:[%s10 + $0x178] sm:$0xff]
      %v2581 = vld [vmem:[%s10 + $0x180] sm:$0xff]
      %v2582 = vld [vmem:[%s10 + $0x188] sm:$0xff]
      %v2583 = vld [vmem:[%s10 + $0x190] sm:$0xff]
      %v2584 = vld [vmem:[%s10 + $0x198] sm:$0xff]
      %v2585 = vld [vmem:[%s10 + $0x1a0] sm:$0xff]
      %v2586 = vld [vmem:[%s10 + $0x1a8] sm:$0xff]
      %v2587 = vld [vmem:[%s10 + $0x1b0] sm:$0xff]
      %v2588 = vld [vmem:[%s10 + $0x1b8] sm:$0xff]
      %v2589 = vld [vmem:[%s10 + $0x1c0] sm:$0xff]
      %v2590 = vld [vmem:[%s10 + $0x1c8] sm:$0xff]
      %v2591 = vld [vmem:[%s10 + $0x1d0] sm:$0xff]
      %v2592 = vld [vmem:[%s10 + $0x1d8] sm:$0xff]
      %v2593 = vld [vmem:[%s10 + $0x1e0] sm:$0xff]
      %v2594 = vld [vmem:[%s10 + $0x1e8] sm:$0xff]
      %v2595 = vld [vmem:[%s10 + $0x1f0] sm:$0xf]
      %v2596 = vld [vmem:[%s11] sm:$0x1]
      %vm2597 = vcmask 949248
      %v2599 = vsel %vm2597, %v2532, 0
      %v2602 = vsel %vm1268, %v2595, 0
      %2604 = vmatprep.subr.mxu0 0.0
      %2605 = vmatpush1.msra.mxu0 %v2533
      %2606 = vmatprep.subr.mxu0 0.0
      %2607 = vmatpush1.msra.mxu0 %v2534
      %2608 = vmatprep.subr.mxu0 0.0
      %2609 = vmatpush1.msra.mxu0 %v2535
      %2610 = vmatprep.subr.mxu0 0.0
      %2611 = vmatpush1.msra.mxu0 %v2536
      %2612 = vmatprep.subr.mxu0 0.0
      %2613 = vmatpush1.msra.mxu0 %v2537
      %2614 = vmatprep.subr.mxu0 0.0
      %2615 = vmatpush1.msra.mxu0 %v2538
      %2616 = vmatprep.subr.mxu0 0.0
      %2617 = vmatpush1.msra.mxu0 %v2539
      %2618 = vmatprep.subr.mxu0 0.0
      %2619 = vmatpush1.msra.mxu0 %v2540
      %2620 = vmatprep.subr.mxu0 0.0
      %2621 = vmatpush1.msra.mxu0 %v2541
      %2622 = vmatprep.subr.mxu0 0.0
      %2623 = vmatpush1.msra.mxu0 %v2542
      %2624 = vmatprep.subr.mxu0 0.0
      %2625 = vmatpush1.msra.mxu0 %v2543
      %2626 = vmatprep.subr.mxu0 0.0
      %2627 = vmatpush1.msra.mxu0 %v2544
      %2628 = vmatprep.subr.mxu0 0.0
      %2629 = vmatpush1.msra.mxu0 %v2545
      %2630 = vmatprep.subr.mxu0 0.0
      %2631 = vmatpush1.msra.mxu0 %v2546
      %2632 = vmatprep.subr.mxu0 0.0
      %2633 = vmatpush1.msra.mxu0 %v2547
      %2634 = vmatprep.subr.mxu0 0.0
      %2635 = vmatpush1.msra.mxu0 %v2548
      %2636 = vmatprep.subr.mxu0 0.0
      %2637 = vmatpush1.msra.mxu0 %v2549
      %2638 = vmatprep.subr.mxu0 0.0
      %2639 = vmatpush1.msra.mxu0 %v2550
      %2640 = vmatprep.subr.mxu0 0.0
      %2641 = vmatpush1.msra.mxu0 %v2551
      %2642 = vmatprep.subr.mxu0 0.0
      %2643 = vmatpush1.msra.mxu0 %v2552
      %2644 = vmatprep.subr.mxu0 0.0
      %2645 = vmatpush1.msra.mxu0 %v2553
      %2646 = vmatprep.subr.mxu0 0.0
      %2647 = vmatpush1.msra.mxu0 %v2554
      %2648 = vmatprep.subr.mxu0 0.0
      %2649 = vmatpush1.msra.mxu0 %v2555
      %2650 = vmatprep.subr.mxu0 0.0
      %2651 = vmatpush1.msra.mxu0 %v2556
      %2652 = vmatprep.subr.mxu0 0.0
      %2653 = vmatpush1.msra.mxu0 %v2557
      %2654 = vmatprep.subr.mxu0 0.0
      %2655 = vmatpush1.msra.mxu0 %v2558
      %2656 = vmatprep.subr.mxu0 0.0
      %2657 = vmatpush1.msra.mxu0 %v2559
      %2658 = vmatprep.subr.mxu0 0.0
      %2659 = vmatpush1.msra.mxu0 %v2560
      %2660 = vmatprep.subr.mxu0 0.0
      %2661 = vmatpush1.msra.mxu0 %v2561
      %2662 = vmatprep.subr.mxu0 0.0
      %2663 = vmatpush1.msra.mxu0 %v2562
      %2664 = vmatprep.subr.mxu0 0.0
      %2665 = vmatpush1.msra.mxu0 %v2563
      %2666 = vmatprep.subr.mxu0 0.0
      %2667 = vmatpush1.msra.mxu0 %v2564
      %2668 = vmatprep.mubr.f32.mxu0 %v2530
      %2669 = vmatmul.mubr.f32.gmra.mrb[0].mxu0 %v2529
      %v2670 = vpop.f32.mrb[0].mxu0
      %v2671 = vadd.f32 %v2596, %v2670
      %v2672 = vpop.f32.mrb[0].mxu0
      %2673 = vdwg.mxu0
      %2674 = vmatprep.subr.mxu0 0.0
      %2675 = vmatpush1.msra.mxu0 %v2565
      %2676 = vmatprep.subr.mxu0 0.0
      %2677 = vmatpush1.msra.mxu0 %v2566
      %2678 = vmatprep.subr.mxu0 0.0
      %2679 = vmatpush1.msra.mxu0 %v2567
      %2680 = vmatprep.subr.mxu0 0.0
      %2681 = vmatpush1.msra.mxu0 %v2568
      %2682 = vmatprep.subr.mxu0 0.0
      %2683 = vmatpush1.msra.mxu0 %v2569
      %2684 = vmatprep.subr.mxu0 0.0
      %2685 = vmatpush1.msra.mxu0 %v2570
      %2686 = vmatprep.subr.mxu0 0.0
      %2687 = vmatpush1.msra.mxu0 %v2571
      %2688 = vmatprep.subr.mxu0 0.0
      %2689 = vmatpush1.msra.mxu0 %v2572
      %2690 = vmatprep.subr.mxu0 0.0
      %2691 = vmatpush1.msra.mxu0 %v2573
      %2692 = vmatprep.subr.mxu0 0.0
      %2693 = vmatpush1.msra.mxu0 %v2574
      %2694 = vmatprep.subr.mxu0 0.0
      %2695 = vmatpush1.msra.mxu0 %v2575
      %2696 = vmatprep.subr.mxu0 0.0
      %2697 = vmatpush1.msra.mxu0 %v2576
      %2698 = vmatprep.subr.mxu0 0.0
      %2699 = vmatpush1.msra.mxu0 %v2577
      %2700 = vmatprep.subr.mxu0 0.0
      %2701 = vmatpush1.msra.mxu0 %v2578
      %2702 = vmatprep.subr.mxu0 0.0
      %2703 = vmatpush1.msra.mxu0 %v2579
      %2704 = vmatprep.subr.mxu0 0.0
      %2705 = vmatpush1.msra.mxu0 %v2580
      %2706 = vmatprep.subr.mxu0 0.0
      %2707 = vmatpush1.msra.mxu0 %v2581
      %2708 = vmatprep.subr.mxu0 0.0
      %2709 = vmatpush1.msra.mxu0 %v2582
      %2710 = vmatprep.subr.mxu0 0.0
      %2711 = vmatpush1.msra.mxu0 %v2583
      %2712 = vmatprep.subr.mxu0 0.0
      %2713 = vmatpush1.msra.mxu0 %v2584
      %2714 = vmatprep.subr.mxu0 0.0
      %2715 = vmatpush1.msra.mxu0 %v2585
      %2716 = vmatprep.subr.mxu0 0.0
      %2717 = vmatpush1.msra.mxu0 %v2586
      %2718 = vmatprep.subr.mxu0 0.0
      %2719 = vmatpush1.msra.mxu0 %v2587
      %2720 = vmatprep.subr.mxu0 0.0
      %2721 = vmatpush1.msra.mxu0 %v2588
      %2722 = vmatprep.subr.mxu0 0.0
      %2723 = vmatpush1.msra.mxu0 %v2589
      %2724 = vmatprep.subr.mxu0 0.0
      %2725 = vmatpush1.msra.mxu0 %v2590
      %2726 = vmatprep.subr.mxu0 0.0
      %2727 = vmatpush1.msra.mxu0 %v2591
      %2728 = vmatprep.subr.mxu0 0.0
      %2729 = vmatpush1.msra.mxu0 %v2592
      %2730 = vmatprep.subr.mxu0 0.0
      %2731 = vmatpush1.msra.mxu0 %v2593
      %2732 = vmatprep.subr.mxu0 0.0
      %2733 = vmatpush1.msra.mxu0 %v2594
      %2734 = vmatprep.subr.mxu0 0.0
      %2735 = vmatpush1.msra.mxu0 %v2602
      %2736 = vmatprep.subr.mxu0 0.0
      %2737 = vmatpush1.msra.mxu0 0.0
      %2738 = vmatprep.mubr.f32.mxu0 %v2599
      %2739 = vmatmul.mubr.f32.gmra.mrb[0].mxu0 %v2531
      %v2740 = vpop.f32.mrb[0].mxu0
      %v2741 = vadd.f32 %v2671, %v2740
      %v2742 = vpop.f32.mrb[0].mxu0
      %2743 = vdwg.mxu0
      %v2744 = vmax.f32 %v2741, 0.0
      %v2745 = vld [vmem:[%s12] sm:$0xff]
      %v2746 = vld [vmem:[%s12 + $0x8] sm:$0xff]
      %v2747 = vld [vmem:[%s12 + $0x10] sm:$0xff]
      %v2748 = vld [vmem:[%s12 + $0x18] sm:$0xff]
      %v2749 = vld [vmem:[%s12 + $0x20] sm:$0xff]
      %v2750 = vld [vmem:[%s12 + $0x28] sm:$0xff]
      %v2751 = vld [vmem:[%s12 + $0x30] sm:$0xff]
      %v2752 = vld [vmem:[%s12 + $0x38] sm:$0xff]
      %v2753 = vld [vmem:[%s12 + $0x40] sm:$0xff]
      %v2754 = vld [vmem:[%s12 + $0x48] sm:$0xff]
      %v2755 = vld [vmem:[%s12 + $0x50] sm:$0xff]
      %v2756 = vld [vmem:[%s12 + $0x58] sm:$0xff]
      %v2757 = vld [vmem:[%s12 + $0x60] sm:$0xf]
      %v2758 = vld [vmem:[%s13] sm:$0x1]
      %vm2759 = vcmask 818176
      %v2761 = vsel %vm2759, %v2744, 0
      %v2764 = vsel %vm1268, %v2757, 0
      %2766 = vmatprep.subr.mxu0 0.0
      %2767 = vmatpush1.msra.mxu0 %v2745
      %2768 = vmatprep.subr.mxu0 0.0
      %2769 = vmatpush1.msra.mxu0 %v2746
      %2770 = vmatprep.subr.mxu0 0.0
      %2771 = vmatpush1.msra.mxu0 %v2747
      %2772 = vmatprep.subr.mxu0 0.0
      %2773 = vmatpush1.msra.mxu0 %v2748
      %2774 = vmatprep.subr.mxu0 0.0
      %2775 = vmatpush1.msra.mxu0 %v2749
      %2776 = vmatprep.subr.mxu0 0.0
      %2777 = vmatpush1.msra.mxu0 %v2750
      %2778 = vmatprep.subr.mxu0 0.0
      %2779 = vmatpush1.msra.mxu0 %v2751
      %2780 = vmatprep.subr.mxu0 0.0
      %2781 = vmatpush1.msra.mxu0 %v2752
      %2782 = vmatprep.subr.mxu0 0.0
      %2783 = vmatpush1.msra.mxu0 %v2753
      %2784 = vmatprep.subr.mxu0 0.0
      %2785 = vmatpush1.msra.mxu0 %v2754
      %2786 = vmatprep.subr.mxu0 0.0
      %2787 = vmatpush1.msra.mxu0 %v2755
      %2788 = vmatprep.subr.mxu0 0.0
      %2789 = vmatpush1.msra.mxu0 %v2756
      %2790 = vmatprep.subr.mxu0 0.0
      %2791 = vmatpush1.msra.mxu0 %v2764
      %2792 = vmatprep.subr.mxu0 0.0
      %2793 = vmatpush1.msra.mxu0 0.0
      %2794 = vmatprep.subr.mxu0 0.0
      %2795 = vmatpush1.msra.mxu0 0.0
      %2796 = vmatprep.subr.mxu0 0.0
      %2797 = vmatpush1.msra.mxu0 0.0
      %2798 = vmatprep.subr.mxu0 0.0
      %2799 = vmatpush1.msra.mxu0 0.0
      %2800 = vmatprep.subr.mxu0 0.0
      %2801 = vmatpush1.msra.mxu0 0.0
      %2802 = vmatprep.subr.mxu0 0.0
      %2803 = vmatpush1.msra.mxu0 0.0
      %2804 = vmatprep.subr.mxu0 0.0
      %2805 = vmatpush1.msra.mxu0 0.0
      %2806 = vmatprep.subr.mxu0 0.0
      %2807 = vmatpush1.msra.mxu0 0.0
      %2808 = vmatprep.subr.mxu0 0.0
      %2809 = vmatpush1.msra.mxu0 0.0
      %2810 = vmatprep.subr.mxu0 0.0
      %2811 = vmatpush1.msra.mxu0 0.0
      %2812 = vmatprep.subr.mxu0 0.0
      %2813 = vmatpush1.msra.mxu0 0.0
      %2814 = vmatprep.subr.mxu0 0.0
      %2815 = vmatpush1.msra.mxu0 0.0
      %2816 = vmatprep.subr.mxu0 0.0
      %2817 = vmatpush1.msra.mxu0 0.0
      %2818 = vmatprep.subr.mxu0 0.0
      %2819 = vmatpush1.msra.mxu0 0.0
      %2820 = vmatprep.subr.mxu0 0.0
      %2821 = vmatpush1.msra.mxu0 0.0
      %2822 = vmatprep.subr.mxu0 0.0
      %2823 = vmatpush1.msra.mxu0 0.0
      %2824 = vmatprep.subr.mxu0 0.0
      %2825 = vmatpush1.msra.mxu0 0.0
      %2826 = vmatprep.subr.mxu0 0.0
      %2827 = vmatpush1.msra.mxu0 0.0
      %2828 = vmatprep.subr.mxu0 0.0
      %2829 = vmatpush1.msra.mxu0 0.0
      %2830 = vmatprep.mubr.f32.mxu0 0.0
      %2831 = vmatmul.mubr.f32.gmra.mrb[0].mxu0 %v2761
      %v2832 = vpop.f32.mrb[0].mxu0
      %v2833 = vadd.f32 %v2758, %v2832
      %v2834 = vpop.f32.mrb[0].mxu0
      %2835 = vdwg.mxu0
      %v2836 = vmax.f32 %v2833, 0.0
      %v2837 = vld [vmem:[%s14] sm:$0x1]
      %v2838 = vmul.f32 %v2836, %v2837
      %vm2839 = vcmask 155648
      %v2840 = vsel %vm2839, %v2838, 0.0
      %2841 = vadd.xlane.f32.xlu0 %v2840
      %v2842 = vpop.xlane.xlu0 %2841
      %v2843 = vld [vmem:[#allocation2] sm:$0x1]
      %v2844 = vadd.f32 %v2842, %v2843
      %vm2845 = vcmask 0
      %2846 = vst.msk [vmem:[%s519] sm:$0x1] %vm2845, %v2844
      %p2847 = scmp.lt.s32.totalorder %s29, 1
      %s2848 = scalar_select %p2847, %s29, 1
      %s2849 = scalar_lea.vmem %s16, %s2848
      // Predicated region
      $region85: #{dave2v3norm_forward.1} parent=83 // pred_check
        %p2850 = pneg %p388
      $region86: #{dave2v3norm_forward.1} parent=83 // pred_check_branch
        %2852 = sbr.rel (%p2850) target = $region88
      $region87: #{dave2v3norm_forward.1} parent=83 // pred_region
        _
      $region88: #{dave2v3norm_forward.1} parent=83 // pred_fallthru
        _
    $region84: #{dave2v3norm_forward.1} parent=5 // pred_fallthru
      _
    %p2853 = scmp.le.s32.totalorder 2, %s24
    // Predicated region
    $region89: #{dave2v3norm_forward.1} parent=5 // pred_check
      %p2854 = pneg %p2853
    $region90: #{dave2v3norm_forward.1} parent=5 // pred_check_branch
      %2856 = sbr.rel (%p2854) target = $region92
    $region91: #{dave2v3norm_forward.1} parent=5 // pred_region
      %s2857 = ssub.s32 %s24, 2
      // Predicated region
      $region93: #{dave2v3norm_forward.1} parent=91 // pred_check
        %p2858 = pneg %p394
      $region94: #{dave2v3norm_forward.1} parent=91 // pred_check_branch
        %2860 = sbr.rel (%p2858) target = $region96
      $region95: #{dave2v3norm_forward.1} parent=91 // pred_region
        %p2861 = scmp.lt.s32.totalorder %s30, 1
        %s2862 = scalar_select %p2861, %s30, 1
        %s2863 = scalar_lea.vmem %s16, %s2862
      $region96: #{dave2v3norm_forward.1} parent=91 // pred_fallthru
        _
    $region92: #{dave2v3norm_forward.1} parent=5 // pred_fallthru
      _
  $region6: #{dave2v3norm_forward.1} parent=0 // loop_footer
    %s28 = sadd.s32 1, %s24
  $region7: #{dave2v3norm_forward.1} parent=0 // loop_footer_branch
    %23 = sbr.rel target = $region3
  $region8: #{dave2v3norm_forward.1} parent=0 // loop_exit
    _

</llo_original>
